<compile_context>
chip_gen: v5e
topology: v5e:2x2
jax: 0.10.0
libtpu: 0.0.40
codegen_flags: <defaults>
</compile_context>

<pallas_src>
import functools

import jax
import jax.numpy as jnp
from jax import lax
from jax.experimental import pallas as pl
from jax.experimental.pallas import tpu as pltpu


def _round_up(x, m):
    return ((x + m - 1) // m) * m


def _two_layer_mlp_gate_kernel(x_ref, w1_ref, b1_ref, w2_ref, b2_ref, g_ref, h_acc,
                               *, k, tau, tol, max_iter, batch):
    kk = pl.program_id(0)

    @pl.when(kk == 0)
    def _():
        h_acc[...] = jnp.zeros_like(h_acc)

    # Partial first-layer contraction for this K block:
    #   (H, TK) . (Bp, TK) contracting dim 1 of both  ->  (H, Bp), f32 accumulate.
    h_acc[...] += lax.dot_general(
        w1_ref[...], x_ref[...],
        dimension_numbers=(((1,), (1,)), ((), ())),
        preferred_element_type=jnp.float32)

    @pl.when(kk == pl.num_programs(0) - 1)
    def _():
        # ---- epilogue: bias + SiLU + layer 2, all in VMEM, batch on lanes ----
        hT = h_acc[...] + b1_ref[...]                                   # (H, Bp)
        hT = hT * jax.nn.sigmoid(hT)                                    # SiLU
        sT = jnp.dot(w2_ref[...], hT,
                     preferred_element_type=jnp.float32) + b2_ref[...]  # (S, Bp)
        S, Bp = sT.shape

        inv_tau = jnp.float32(1.0 / tau)
        s_sc = sT * inv_tau                                             # hoist 1/tau once

        # ---- theta init: (k+1)-th largest per column (== sorted_s[:, -k-1]) ----
        # k rounds of "remove one occurrence of the max", then max of the remainder.
        ridx = lax.broadcasted_iota(jnp.int32, (S, Bp), 0)
        work = s_sc
        for _ in range(k):
            m = jnp.max(work, axis=0, keepdims=True)
            pos = jnp.min(jnp.where(work == m, ridx, S), axis=0, keepdims=True)
            work = jnp.where(ridx == pos, -jnp.inf, work)
        theta0 = jnp.max(work, axis=0, keepdims=True)                   # (1, Bp), scaled

        # Convergence-mean weights: padded batch columns excluded. Computed once.
        valid = lax.broadcasted_iota(jnp.int32, (1, Bp), 1) < batch
        w_valid = jnp.where(valid, jnp.float32(1.0 / batch), jnp.float32(0.0))
        kf = jnp.float32(k)
        tolf = jnp.float32(tol)

        def eval_theta(th):
            sig = jax.nn.sigmoid(s_sc - th)                             # (S, Bp)
            f = jnp.sum(sig, axis=0, keepdims=True) - kf                # (1, Bp)
            mf = jnp.sum(f * w_valid)                                   # scalar, real cols
            return sig, f, mf

        sig0, f0, mf0 = eval_theta(theta0)

        # ---- Newton iteration with a genuine early exit (matches the PyTorch break) ----
        def cond(c):
            i, _, _, _, mf = c
            return jnp.logical_and(i < max_iter, jnp.logical_not(mf < tolf))

        def body(c):
            i, th, sig, f, _ = c
            d = jnp.sum(sig * (1.0 - sig), axis=0, keepdims=True)       # (1, Bp)
            d = jnp.maximum(d, jnp.float32(1e-12))                      # guard df ~ 0
            # theta_new = theta - f/df with df = -(1/tau)*d; scaled units: th + f/d.
            th_new = th + f / d
            sig_new, f_new, mf_new = eval_theta(th_new)
            return (i + 1, th_new, sig_new, f_new, mf_new)

        _, _, sig_fin, _, _ = lax.while_loop(
            cond, body, (jnp.int32(0), theta0, sig0, f0, mf0))

        # ---- final gate: sigmoid((s - theta)/tau) == sig at loop exit; lane-dense ----
        g_ref[...] = sig_fin                                            # (S, Bp)


@functools.partial(jax.jit, static_argnames=("k", "tau", "tol", "max_iter"))
def two_layer_mlp_gate(x, w1, b1, w2, b2, *, k=2, tau=0.01, tol=1e-3, max_iter=100):
    """x: (B, N); w1: (H, N); b1: (H,); w2: (S, H); b2: (S,)  ->  g: (B, S)."""
    B, N = x.shape
    H = w1.shape[0]
    S = w2.shape[0]

    Np = _round_up(N, 128)                  # contraction dim
    Bp = _round_up(B, 128)                  # batch on lanes
    TK = 256 if Np % 256 == 0 else 128      # K block width (grid axis)
    n_kblocks = Np // TK

    # Edge-pad: padded batch rows mirror the last real row (finite; excluded from the
    # convergence mean); padded feature columns multiply zero w1 columns -> contribute 0.
    x_p = jnp.pad(x.astype(jnp.float32), ((0, Bp - B), (0, Np - N)), mode="edge")
    w1_p = jnp.pad(w1.astype(jnp.float32), ((0, 0), (0, Np - N)))
    b1_c = b1.reshape(H, 1).astype(jnp.float32)
    w2_c = w2.astype(jnp.float32)
    b2_c = b2.reshape(S, 1).astype(jnp.float32)

    kernel = functools.partial(
        _two_layer_mlp_gate_kernel,
        k=int(k), tau=float(tau), tol=float(tol),
        max_iter=int(max_iter), batch=int(B))

    gT = pl.pallas_call(
        kernel,
        out_shape=jax.ShapeDtypeStruct((S, Bp), jnp.float32),
        grid=(n_kblocks,),
        in_specs=[
            pl.BlockSpec((Bp, TK), lambda kk: (0, kk)),   # x  (batch, K-block)
            pl.BlockSpec((H, TK), lambda kk: (0, kk)),    # w1 (H, K-block)
            pl.BlockSpec((H, 1), lambda kk: (0, 0)),      # b1
            pl.BlockSpec((S, H), lambda kk: (0, 0)),      # w2
            pl.BlockSpec((S, 1), lambda kk: (0, 0)),      # b2
        ],
        out_specs=pl.BlockSpec((S, Bp), lambda kk: (0, 0)),
        scratch_shapes=[pltpu.VMEM((H, Bp), jnp.float32)],
        compiler_params=pltpu.CompilerParams(
            dimension_semantics=("arbitrary",),
            vmem_limit_bytes=16 << 20,
        ),
    )(x_p, w1_p, b1_c, w2_c, b2_c)

    # Un-transpose and drop batch padding (fused under jit).
    return jnp.transpose(gT[:, :B])


if __name__ == "__main__":
    batch_size = 300
    N = 1000
    hidden = 256
    s_dim = 8
    k = 2

    key = jax.random.PRNGKey(0)
    k1, k2, k3, k4, k5, k6 = jax.random.split(key, 6)

    # Deterministic nn.Linear-style init: U(-1/sqrt(fan_in), 1/sqrt(fan_in)),
    # stored in PyTorch (out, in) layout.
    lim1 = 1.0 / jnp.sqrt(jnp.float32(N))
    w1 = jax.random.uniform(k1, (hidden, N), jnp.float32, -lim1, lim1)
    b1 = jax.random.uniform(k2, (hidden,), jnp.float32, -lim1, lim1)
    lim2 = 1.0 / jnp.sqrt(jnp.float32(hidden))
    w2 = jax.random.uniform(k3, (s_dim, hidden), jnp.float32, -lim2, lim2)
    b2 = jax.random.uniform(k4, (s_dim,), jnp.float32, -lim2, lim2)

    # x = stack([x_i + t * (x_f - x_i) for t in linspace(0, 1, batch)], dim=0)
    x_f = jax.random.normal(k5, (N,), jnp.float32)
    x_i = jax.random.normal(k6, (N,), jnp.float32)
    ts = jnp.linspace(0.0, 1.0, batch_size, dtype=jnp.float32)
    x = x_i[None, :] + ts[:, None] * (x_f - x_i)[None, :]               # (B, N)

    g = two_layer_mlp_gate(x, w1, b1, w2, b2, k=k, tau=0.01)
    g = jax.block_until_ready(g)

    assert g.shape == (batch_size, s_dim), g.shape
    assert bool(jnp.all(jnp.isfinite(g)))
    assert bool(jnp.all((g >= 0.0) & (g <= 1.0)))
    print("KERNEL_OK")
</pallas_src>

<mosaic_0001>
module attributes {stable_mosaic.version = 11 : i64} {
  func.func @_two_layer_mlp_gate_kernel(%arg0: i32, %arg1: memref<384x256xf32, #tpu.memory_space<vmem>>, %arg2: memref<256x256xf32, #tpu.memory_space<vmem>>, %arg3: memref<256x1xf32, #tpu.memory_space<vmem>>, %arg4: memref<8x256xf32, #tpu.memory_space<vmem>>, %arg5: memref<8x1xf32, #tpu.memory_space<vmem>>, %arg6: memref<8x384xf32, #tpu.memory_space<vmem>>, %arg7: memref<256x384xf32, #tpu.memory_space<vmem>>) attributes {dimension_semantics = [#tpu.dimension_semantics<arbitrary>], iteration_bounds = array<i64: 4>, scalar_prefetch = 0 : i64, scratch_operands = 1 : i64, tpu.core_type = #tpu.core_type<tc>, window_params = [{transform_indices = @transform_0, window_bounds = array<i64: 384, 256>}, {transform_indices = @transform_1, window_bounds = array<i64: 256, 256>}, {pipeline_mode = #tpu.pipeline_mode<synchronous>, transform_indices = @transform_2, window_bounds = array<i64: 256, 1>}, {pipeline_mode = #tpu.pipeline_mode<synchronous>, transform_indices = @transform_3, window_bounds = array<i64: 8, 256>}, {pipeline_mode = #tpu.pipeline_mode<synchronous>, transform_indices = @transform_4, window_bounds = array<i64: 8, 1>}, {pipeline_mode = #tpu.pipeline_mode<synchronous>, transform_indices = @transform_5, window_bounds = array<i64: 8, 384>}]} {
    %c0_i32 = arith.constant 0 : i32
    %0 = arith.cmpi eq, %arg0, %c0_i32 : i32
    %1 = arith.extui %0 : i1 to i32
    %c0_i32_0 = arith.constant 0 : i32
    %2 = arith.cmpi ne, %1, %c0_i32_0 : i32
    scf.if %2 {
      %cst_9 = arith.constant 0.000000e+00 : f32
      %12 = vector.broadcast %cst_9 : f32 to vector<256x384xf32>
      %c0_10 = arith.constant 0 : index
      %c0_11 = arith.constant 0 : index
      %13 = vector.load %arg7[%c0_10, %c0_11] : memref<256x384xf32, #tpu.memory_space<vmem>>, vector<256x384xf32>
      tpu.vector_store %arg7[%c0_10, %c0_11], %12 {strides = array<i32>} : memref<256x384xf32, #tpu.memory_space<vmem>>, vector<256x384xf32>,
    } else {
    }
    %c0 = arith.constant 0 : index
    %c0_1 = arith.constant 0 : index
    %3 = vector.load %arg7[%c0, %c0_1] : memref<256x384xf32, #tpu.memory_space<vmem>>, vector<256x384xf32>
    %c0_2 = arith.constant 0 : index
    %c0_3 = arith.constant 0 : index
    %4 = vector.load %arg2[%c0_2, %c0_3] : memref<256x256xf32, #tpu.memory_space<vmem>>, vector<256x256xf32>
    %c0_4 = arith.constant 0 : index
    %c0_5 = arith.constant 0 : index
    %5 = vector.load %arg1[%c0_4, %c0_5] : memref<384x256xf32, #tpu.memory_space<vmem>>, vector<384x256xf32>
    %cst = arith.constant dense<0.000000e+00> : vector<256x384xf32>
    %6 = tpu.matmul %4, %5, %cst {dimension_numbers = #tpu.dot_dimension_numbers<[1], [1], [0], [0], [0, 0, 1, 0], [], []>} : vector<256x256xf32>, vector<384x256xf32>, vector<256x384xf32> -> vector<256x384xf32>
    %7 = arith.addf %3, %6 : vector<256x384xf32>
    %c0_6 = arith.constant 0 : index
    %c0_7 = arith.constant 0 : index
    %8 = vector.load %arg7[%c0_6, %c0_7] : memref<256x384xf32, #tpu.memory_space<vmem>>, vector<256x384xf32>
    tpu.vector_store %arg7[%c0_6, %c0_7], %7 {strides = array<i32>} : memref<256x384xf32, #tpu.memory_space<vmem>>, vector<256x384xf32>,
    %c3_i32 = arith.constant 3 : i32
    %9 = arith.cmpi eq, %arg0, %c3_i32 : i32
    %10 = arith.extui %9 : i1 to i32
    %c0_i32_8 = arith.constant 0 : i32
    %11 = arith.cmpi ne, %10, %c0_i32_8 : i32
    scf.if %11 {
      %c0_9 = arith.constant 0 : index
      %c0_10 = arith.constant 0 : index
      %12 = vector.load %arg7[%c0_9, %c0_10] : memref<256x384xf32, #tpu.memory_space<vmem>>, vector<256x384xf32>
      %c0_11 = arith.constant 0 : index
      %c0_12 = arith.constant 0 : index
      %13 = vector.load %arg3[%c0_11, %c0_12] : memref<256x1xf32, #tpu.memory_space<vmem>>, vector<256x1xf32>
      %14 = vector.broadcast %13 : vector<256x1xf32> to vector<256x384xf32>
      %15 = arith.addf %12, %14 : vector<256x384xf32>
      %16 = arith.negf %15 : vector<256x384xf32>
      %17 = math.exp %16 : vector<256x384xf32>
      %cst_13 = arith.constant 1.000000e+00 : f32
      %18 = vector.broadcast %cst_13 : f32 to vector<256x384xf32>
      %19 = arith.addf %18, %17 : vector<256x384xf32>
      %20 = arith.divf %18, %19 : vector<256x384xf32>
      %21 = arith.mulf %15, %20 : vector<256x384xf32>
      %c0_14 = arith.constant 0 : index
      %c0_15 = arith.constant 0 : index
      %22 = vector.load %arg4[%c0_14, %c0_15] : memref<8x256xf32, #tpu.memory_space<vmem>>, vector<8x256xf32>
      %cst_16 = arith.constant dense<0.000000e+00> : vector<8x384xf32>
      %23 = tpu.matmul %22, %21, %cst_16 {dimension_numbers = #tpu.dot_dimension_numbers<[1], [0], [0], [1], [0, 0, 1, 1], [], []>} : vector<8x256xf32>, vector<256x384xf32>, vector<8x384xf32> -> vector<8x384xf32>
      %c0_17 = arith.constant 0 : index
      %c0_18 = arith.constant 0 : index
      %24 = vector.load %arg5[%c0_17, %c0_18] : memref<8x1xf32, #tpu.memory_space<vmem>>, vector<8x1xf32>
      %25 = vector.broadcast %24 : vector<8x1xf32> to vector<8x384xf32>
      %26 = arith.addf %23, %25 : vector<8x384xf32>
      %cst_19 = arith.constant 1.000000e+02 : f32
      %27 = vector.broadcast %cst_19 : f32 to vector<8x384xf32>
      %28 = arith.mulf %26, %27 : vector<8x384xf32>
      %29 = tpu.iota {dimensions = array<i32: 0>} : vector<8x384xi32>
      %cst_20 = arith.constant dense<0xFF800000> : vector<384xf32>
      %30 = vector.multi_reduction <maximumf>, %28, %cst_20 [0] : vector<8x384xf32> to vector<384xf32>
      %31 = vector.shape_cast %30 : vector<384xf32> to vector<1x384xf32>
      %32 = vector.broadcast %31 : vector<1x384xf32> to vector<8x384xf32>
      %33 = arith.cmpf oeq, %28, %32 : vector<8x384xf32>
      %c8_i32 = arith.constant 8 : i32
      %34 = vector.broadcast %c8_i32 : i32 to vector<8x384xi32>
      %35 = arith.select %33, %29, %34 : vector<8x384xi1>, vector<8x384xi32>
      %cst_21 = arith.constant dense<2147483647> : vector<384xi32>
      %36 = vector.multi_reduction <minsi>, %35, %cst_21 [0] : vector<8x384xi32> to vector<384xi32>
      %37 = vector.shape_cast %36 : vector<384xi32> to vector<1x384xi32>
      %38 = vector.broadcast %37 : vector<1x384xi32> to vector<8x384xi32>
      %39 = arith.cmpi eq, %29, %38 : vector<8x384xi32>
      %cst_22 = arith.constant 0xFF800000 : f32
      %40 = vector.broadcast %cst_22 : f32 to vector<8x384xf32>
      %41 = arith.select %39, %40, %28 : vector<8x384xi1>, vector<8x384xf32>
      %cst_23 = arith.constant dense<0xFF800000> : vector<384xf32>
      %42 = vector.multi_reduction <maximumf>, %41, %cst_23 [0] : vector<8x384xf32> to vector<384xf32>
      %43 = vector.shape_cast %42 : vector<384xf32> to vector<1x384xf32>
      %44 = vector.broadcast %43 : vector<1x384xf32> to vector<8x384xf32>
      %45 = arith.cmpf oeq, %41, %44 : vector<8x384xf32>
      %c8_i32_24 = arith.constant 8 : i32
      %46 = vector.broadcast %c8_i32_24 : i32 to vector<8x384xi32>
      %47 = arith.select %45, %29, %46 : vector<8x384xi1>, vector<8x384xi32>
      %cst_25 = arith.constant dense<2147483647> : vector<384xi32>
      %48 = vector.multi_reduction <minsi>, %47, %cst_25 [0] : vector<8x384xi32> to vector<384xi32>
      %49 = vector.shape_cast %48 : vector<384xi32> to vector<1x384xi32>
      %50 = vector.broadcast %49 : vector<1x384xi32> to vector<8x384xi32>
      %51 = arith.cmpi eq, %29, %50 : vector<8x384xi32>
      %cst_26 = arith.constant 0xFF800000 : f32
      %52 = vector.broadcast %cst_26 : f32 to vector<8x384xf32>
      %53 = arith.select %51, %52, %41 : vector<8x384xi1>, vector<8x384xf32>
      %cst_27 = arith.constant dense<0xFF800000> : vector<384xf32>
      %54 = vector.multi_reduction <maximumf>, %53, %cst_27 [0] : vector<8x384xf32> to vector<384xf32>
      %55 = vector.shape_cast %54 : vector<384xf32> to vector<1x384xf32>
      %56 = tpu.iota {dimensions = array<i32: 1>} : vector<1x384xi32>
      %c300_i32 = arith.constant 300 : i32
      %57 = vector.broadcast %c300_i32 : i32 to vector<1x384xi32>
      %58 = arith.cmpi slt, %56, %57 : vector<1x384xi32>
      %cst_28 = arith.constant 0.00333333341 : f32
      %cst_29 = arith.constant 0.000000e+00 : f32
      %59 = vector.broadcast %cst_28 : f32 to vector<1x384xf32>
      %60 = vector.broadcast %cst_29 : f32 to vector<1x384xf32>
      %61 = arith.select %58, %59, %60 : vector<1x384xi1>, vector<1x384xf32>
      %62 = vector.broadcast %55 : vector<1x384xf32> to vector<8x384xf32>
      %63 = arith.subf %28, %62 : vector<8x384xf32>
      %64 = arith.negf %63 : vector<8x384xf32>
      %65 = math.exp %64 : vector<8x384xf32>
      %cst_30 = arith.constant 1.000000e+00 : f32
      %66 = vector.broadcast %cst_30 : f32 to vector<8x384xf32>
      %67 = arith.addf %66, %65 : vector<8x384xf32>
      %68 = arith.divf %66, %67 : vector<8x384xf32>
      %cst_31 = arith.constant dense<0.000000e+00> : vector<384xf32>
      %69 = vector.multi_reduction <add>, %68, %cst_31 [0] : vector<8x384xf32> to vector<384xf32>
      %70 = vector.shape_cast %69 : vector<384xf32> to vector<1x384xf32>
      %cst_32 = arith.constant 2.000000e+00 : f32
      %71 = vector.broadcast %cst_32 : f32 to vector<1x384xf32>
      %72 = arith.subf %70, %71 : vector<1x384xf32>
      %73 = arith.mulf %72, %61 : vector<1x384xf32>
      %74 = vector.shape_cast %73 : vector<1x384xf32> to vector<1x1x384xf32>
      %cst_33 = arith.constant dense<0.000000e+00> : vector<1xf32>
      %75 = vector.multi_reduction <add>, %74, %cst_33 [1, 2] : vector<1x1x384xf32> to vector<1xf32>
      %76 = vector.shape_cast %75 : vector<1xf32> to vector<1x1x1xf32>
      %77 = vector.extract %76[0, 0, 0] : f32 from vector<1x1x1xf32>
      %cst_34 = arith.constant 1.000000e-03 : f32
      %cst_35 = arith.constant 2.000000e+00 : f32
      %c0_i32_36 = arith.constant 0 : i32
      %78:5 = scf.while (%arg8 = %c0_i32_36, %arg9 = %55, %arg10 = %68, %arg11 = %72, %arg12 = %77) : (i32, vector<1x384xf32>, vector<8x384xf32>, vector<1x384xf32>, f32) -> (i32, vector<1x384xf32>, vector<8x384xf32>, vector<1x384xf32>, f32) {
        %c100_i32 = arith.constant 100 : i32
        %80 = arith.cmpi slt, %arg8, %c100_i32 : i32
        %81 = arith.cmpf olt, %arg12, %cst_34 : f32
        %true = arith.constant true
        %82 = arith.xori %81, %true : i1
        %83 = arith.andi %80, %82 : i1
        scf.condition(%83) %arg8, %arg9, %arg10, %arg11, %arg12 : i32, vector<1x384xf32>, vector<8x384xf32>, vector<1x384xf32>, f32
      } do {
      ^bb0(%arg8: i32, %arg9: vector<1x384xf32>, %arg10: vector<8x384xf32>, %arg11: vector<1x384xf32>, %arg12: f32):
        %cst_39 = arith.constant 1.000000e+00 : f32
        %80 = vector.broadcast %cst_39 : f32 to vector<8x384xf32>
        %81 = arith.subf %80, %arg10 : vector<8x384xf32>
        %82 = arith.mulf %arg10, %81 : vector<8x384xf32>
        %cst_40 = arith.constant dense<0.000000e+00> : vector<384xf32>
        %83 = vector.multi_reduction <add>, %82, %cst_40 [0] : vector<8x384xf32> to vector<384xf32>
        %84 = vector.shape_cast %83 : vector<384xf32> to vector<1x384xf32>
        %cst_41 = arith.constant 9.99999996E-13 : f32
        %85 = vector.broadcast %cst_41 : f32 to vector<1x384xf32>
        %86 = arith.maximumf %84, %85 : vector<1x384xf32>
        %87 = arith.divf %arg11, %86 : vector<1x384xf32>
        %88 = arith.addf %arg9, %87 : vector<1x384xf32>
        %89 = vector.broadcast %88 : vector<1x384xf32> to vector<8x384xf32>
        %90 = arith.subf %28, %89 : vector<8x384xf32>
        %91 = arith.negf %90 : vector<8x384xf32>
        %92 = math.exp %91 : vector<8x384xf32>
        %cst_42 = arith.constant 1.000000e+00 : f32
        %93 = vector.broadcast %cst_42 : f32 to vector<8x384xf32>
        %94 = arith.addf %93, %92 : vector<8x384xf32>
        %95 = arith.divf %93, %94 : vector<8x384xf32>
        %cst_43 = arith.constant dense<0.000000e+00> : vector<384xf32>
        %96 = vector.multi_reduction <add>, %95, %cst_43 [0] : vector<8x384xf32> to vector<384xf32>
        %97 = vector.shape_cast %96 : vector<384xf32> to vector<1x384xf32>
        %98 = vector.broadcast %cst_35 : f32 to vector<1x384xf32>
        %99 = arith.subf %97, %98 : vector<1x384xf32>
        %100 = arith.mulf %99, %61 : vector<1x384xf32>
        %101 = vector.shape_cast %100 : vector<1x384xf32> to vector<1x1x384xf32>
        %cst_44 = arith.constant dense<0.000000e+00> : vector<1xf32>
        %102 = vector.multi_reduction <add>, %101, %cst_44 [1, 2] : vector<1x1x384xf32> to vector<1xf32>
        %103 = vector.shape_cast %102 : vector<1xf32> to vector<1x1x1xf32>
        %104 = vector.extract %103[0, 0, 0] : f32 from vector<1x1x1xf32>
        %c1_i32 = arith.constant 1 : i32
        %105 = arith.addi %arg8, %c1_i32 : i32
        scf.yield %105, %88, %95, %99, %104 : i32, vector<1x384xf32>, vector<8x384xf32>, vector<1x384xf32>, f32
      }
      %c0_37 = arith.constant 0 : index
      %c0_38 = arith.constant 0 : index
      %79 = vector.load %arg6[%c0_37, %c0_38] : memref<8x384xf32, #tpu.memory_space<vmem>>, vector<8x384xf32>
      tpu.vector_store %arg6[%c0_37, %c0_38], %78#2 {strides = array<i32>} : memref<8x384xf32, #tpu.memory_space<vmem>>, vector<8x384xf32>,
    } else {
    }
    return
  }
  func.func @transform_0(%arg0: i32) -> (i32, i32) {
    %c0_i32 = arith.constant 0 : i32
    %c0_i32_0 = arith.constant 0 : i32
    return %c0_i32, %arg0 : i32, i32
  }
  func.func @transform_1(%arg0: i32) -> (i32, i32) {
    %c0_i32 = arith.constant 0 : i32
    %c0_i32_0 = arith.constant 0 : i32
    return %c0_i32, %arg0 : i32, i32
  }
  func.func @transform_2(%arg0: i32) -> (i32, i32) {
    %c0_i32 = arith.constant 0 : i32
    %c0_i32_0 = arith.constant 0 : i32
    %c0_i32_1 = arith.constant 0 : i32
    return %c0_i32, %c0_i32_0 : i32, i32
  }
  func.func @transform_3(%arg0: i32) -> (i32, i32) {
    %c0_i32 = arith.constant 0 : i32
    %c0_i32_0 = arith.constant 0 : i32
    %c0_i32_1 = arith.constant 0 : i32
    return %c0_i32, %c0_i32_0 : i32, i32
  }
  func.func @transform_4(%arg0: i32) -> (i32, i32) {
    %c0_i32 = arith.constant 0 : i32
    %c0_i32_0 = arith.constant 0 : i32
    %c0_i32_1 = arith.constant 0 : i32
    return %c0_i32, %c0_i32_0 : i32, i32
  }
  func.func @transform_5(%arg0: i32) -> (i32, i32) {
    %c0_i32 = arith.constant 0 : i32
    %c0_i32_0 = arith.constant 0 : i32
    %c0_i32_1 = arith.constant 0 : i32
    return %c0_i32, %c0_i32_0 : i32, i32
  }
}

</mosaic_0001>

<llo_original>
// kernel: two_layer_mlp_gate.1
$region0: #{two_layer_mlp_gate.1}
  #allocation0 [shape = 'u32[]', space=smem, size = 0x4, offset = 0x4, fixed_abs, tag = 'smem constant byte address 0x4 - core index']
  #allocation1 [shape = 'u32[72,128]{1,0:T(1,128)}', space=vmem, size = 0x9000, scoped, tag = 'internal scratch']
  #allocation2 [shape = 'f32[256,384]{1,0:T(8,128)}', space=vmem, size = 0x60000, scoped, tag = 'scratch operand']
  %s0 = inlined_call_operand.vmem [shape: f32[384,1024], index: 0, kind: input, shape index: {}]
  %s1 = inlined_call_operand.vmem [shape: f32[256,1024], index: 1, kind: input, shape index: {}]
  %s2 = inlined_call_operand.vmem [shape: f32[256,1], index: 2, kind: input, shape index: {}]
  %s3 = inlined_call_operand.vmem [shape: f32[8,256], index: 3, kind: input, shape index: {}]
  %s4 = inlined_call_operand.vmem [shape: f32[8,1], index: 4, kind: input, shape index: {}]
  %s5 = inlined_call_operand.vmem [shape: f32[8,384], index: 5, kind: output, shape index: {}]
  %s6 = sld [smem:[#allocation0]]
  $region114: #{two_layer_mlp_gate.1} parent=0
    _
  %s8 = ssub.s32 1, %s6
  %s9 = scalar_select 0, %s8, %s6
  $region1: #{two_layer_mlp_gate.1} parent=0
    #allocation3 [shape = 'u8[786432]{0}', space=vmem, size = 0xc0000, scoped, tag = 'input window, operand 0']
    #allocation4 [shape = 'u8[524288]{0}', space=vmem, size = 0x80000, scoped, tag = 'input window, operand 1']
    loop: start=0, step=1, limit=6
    $region2: #{two_layer_mlp_gate.1} parent=1 // loop_pre_header
      _
    $region3: #{two_layer_mlp_gate.1} parent=1 // loop_header
      %s11 = sphi 0, %s15
      %p12 = scmp.ge.s32.totalorder %s11, 6
      %s21 = sphi 0, %s23
      %s24 = sphi 0, %s21
      %s25 = sphi 0, %s24
      %s41 = sphi 0, %s25
      %s47 = sphi 0, %s49
      %s50 = sphi 0, %s47
      %s51 = sphi 0, %s50
      %s67 = sphi 0, %s51
      %s71 = sphi 0, %s71
      %s73 = sphi 0, %s71
      %s74 = sphi 0, %s73
      %s88 = sphi 0, %s74
      %s92 = sphi 0, %s92
      %s94 = sphi 0, %s92
      %s95 = sphi 0, %s94
      %s109 = sphi 0, %s95
      %s113 = sphi 0, %s113
      %s115 = sphi 0, %s113
      %s116 = sphi 0, %s115
      %s130 = sphi 0, %s116
      %s134 = sphi 0, %s134
      %s136 = sphi 0, %s134
      %s137 = sphi 0, %s136
      %s151 = sphi 0, %s137
    $region4: #{two_layer_mlp_gate.1} parent=1 // loop_header_branch
      %14 = sbr.rel (%p12) target = $region8
    $region5: #{two_layer_mlp_gate.1} parent=1 // loop_body
      %s16 = ssub.s32 %s11, 1
      %s17 = ssub.s32 %s11, 2
      %s18 = sadd.s32 %s11, 1
      %s19 = ssub.s32 %s11, %s18
      %p20 = scmp.eq.s32.totalorder %s19, 0
      %s22 = sadd.s32 %s21, 1
      %s23 = scalar_select %p20, %s21, %s22
      %p26 = pneg %p20
      %p27 = scmp.eq.s32.totalorder %s11, 3
      %p28 = por %p26, %p27
      %p29 = scmp.ne.s32.totalorder %s21, %s24
      %p30 = scmp.eq.s32.totalorder %s11, 0
      %p31 = por %p29, %p30
      %p32 = scmp.ne.s32.totalorder %s21, %s24
      %p33 = scmp.eq.s32.totalorder %s16, 3
      %p34 = por %p32, %p33
      %p35 = scmp.ne.s32.totalorder %s24, %s25
      %p36 = scmp.eq.s32.totalorder %s16, 0
      %p37 = por %p35, %p36
      %p38 = scmp.ne.s32.totalorder %s24, %s25
      %p39 = scmp.eq.s32.totalorder %s17, 3
      %p40 = por %p38, %p39
      %p42 = scmp.ne.s32.totalorder %s25, %s41
      %p43 = scmp.eq.s32.totalorder %s17, 0
      %p44 = por %p42, %p43
      %s45 = ssub.s32 %s11, %s18
      %p46 = scmp.eq.s32.totalorder %s45, 0
      %s48 = sadd.s32 %s47, 1
      %s49 = scalar_select %p46, %s47, %s48
      %p52 = pneg %p46
      %p53 = scmp.eq.s32.totalorder %s11, 3
      %p54 = por %p52, %p53
      %p55 = scmp.ne.s32.totalorder %s47, %s50
      %p56 = scmp.eq.s32.totalorder %s11, 0
      %p57 = por %p55, %p56
      %p58 = scmp.ne.s32.totalorder %s47, %s50
      %p59 = scmp.eq.s32.totalorder %s16, 3
      %p60 = por %p58, %p59
      %p61 = scmp.ne.s32.totalorder %s50, %s51
      %p62 = scmp.eq.s32.totalorder %s16, 0
      %p63 = por %p61, %p62
      %p64 = scmp.ne.s32.totalorder %s50, %s51
      %p65 = scmp.eq.s32.totalorder %s17, 3
      %p66 = por %p64, %p65
      %p68 = scmp.ne.s32.totalorder %s51, %s67
      %p69 = scmp.eq.s32.totalorder %s17, 0
      %p70 = por %p68, %p69
      %s72 = sadd.s32 %s71, 1
      %p75 = scmp.eq.s32.totalorder %s11, 3
      %p76 = scmp.ne.s32.totalorder %s71, %s73
      %p77 = scmp.eq.s32.totalorder %s11, 0
      %p78 = por %p76, %p77
      %p79 = scmp.ne.s32.totalorder %s71, %s73
      %p80 = scmp.eq.s32.totalorder %s16, 3
      %p81 = por %p79, %p80
      %p82 = scmp.ne.s32.totalorder %s73, %s74
      %p83 = scmp.eq.s32.totalorder %s16, 0
      %p84 = por %p82, %p83
      %p85 = scmp.ne.s32.totalorder %s73, %s74
      %p86 = scmp.eq.s32.totalorder %s17, 3
      %p87 = por %p85, %p86
      %p89 = scmp.ne.s32.totalorder %s74, %s88
      %p90 = scmp.eq.s32.totalorder %s17, 0
      %p91 = por %p89, %p90
      %s93 = sadd.s32 %s92, 1
      %p96 = scmp.eq.s32.totalorder %s11, 3
      %p97 = scmp.ne.s32.totalorder %s92, %s94
      %p98 = scmp.eq.s32.totalorder %s11, 0
      %p99 = por %p97, %p98
      %p100 = scmp.ne.s32.totalorder %s92, %s94
      %p101 = scmp.eq.s32.totalorder %s16, 3
      %p102 = por %p100, %p101
      %p103 = scmp.ne.s32.totalorder %s94, %s95
      %p104 = scmp.eq.s32.totalorder %s16, 0
      %p105 = por %p103, %p104
      %p106 = scmp.ne.s32.totalorder %s94, %s95
      %p107 = scmp.eq.s32.totalorder %s17, 3
      %p108 = por %p106, %p107
      %p110 = scmp.ne.s32.totalorder %s95, %s109
      %p111 = scmp.eq.s32.totalorder %s17, 0
      %p112 = por %p110, %p111
      %s114 = sadd.s32 %s113, 1
      %p117 = scmp.eq.s32.totalorder %s11, 3
      %p118 = scmp.ne.s32.totalorder %s113, %s115
      %p119 = scmp.eq.s32.totalorder %s11, 0
      %p120 = por %p118, %p119
      %p121 = scmp.ne.s32.totalorder %s113, %s115
      %p122 = scmp.eq.s32.totalorder %s16, 3
      %p123 = por %p121, %p122
      %p124 = scmp.ne.s32.totalorder %s115, %s116
      %p125 = scmp.eq.s32.totalorder %s16, 0
      %p126 = por %p124, %p125
      %p127 = scmp.ne.s32.totalorder %s115, %s116
      %p128 = scmp.eq.s32.totalorder %s17, 3
      %p129 = por %p127, %p128
      %p131 = scmp.ne.s32.totalorder %s116, %s130
      %p132 = scmp.eq.s32.totalorder %s17, 0
      %p133 = por %p131, %p132
      %s135 = sadd.s32 %s134, 1
      %p138 = scmp.eq.s32.totalorder %s11, 3
      %p139 = scmp.ne.s32.totalorder %s134, %s136
      %p140 = scmp.eq.s32.totalorder %s11, 0
      %p141 = por %p139, %p140
      %p142 = scmp.ne.s32.totalorder %s134, %s136
      %p143 = scmp.eq.s32.totalorder %s16, 3
      %p144 = por %p142, %p143
      %p145 = scmp.ne.s32.totalorder %s136, %s137
      %p146 = scmp.eq.s32.totalorder %s16, 0
      %p147 = por %p145, %p146
      %p148 = scmp.ne.s32.totalorder %s136, %s137
      %p149 = scmp.eq.s32.totalorder %s17, 3
      %p150 = por %p148, %p149
      %p152 = scmp.ne.s32.totalorder %s137, %s151
      %p153 = scmp.eq.s32.totalorder %s17, 0
      %p154 = por %p152, %p153
      %p155 = scmp.le.s32.totalorder 1, %s11
      %p156 = scmp.lt.s32.totalorder %s11, 5
      %p157 = pnand %p155, %p156
      %p158 = pneg %p157
      // Predicated region
      $region9: #{two_layer_mlp_gate.1} parent=5 // pred_check
        _
      $region10: #{two_layer_mlp_gate.1} parent=5 // pred_check_branch
        %160 = sbr.rel (%p157) target = $region12
      $region11: #{two_layer_mlp_gate.1} parent=5 // pred_region
        %s161 = ssub.s32 %s11, 1
        // Predicated region
        $region13: #{two_layer_mlp_gate.1} parent=11 // pred_check
          %p162 = pneg %p84
        $region14: #{two_layer_mlp_gate.1} parent=11 // pred_check_branch
          %164 = sbr.rel (%p162) target = $region16
        $region15: #{two_layer_mlp_gate.1} parent=11 // pred_region
          _
        $region16: #{two_layer_mlp_gate.1} parent=11 // pred_fallthru
          _
        // Predicated region
        $region17: #{two_layer_mlp_gate.1} parent=11 // pred_check
          %p165 = pneg %p105
        $region18: #{two_layer_mlp_gate.1} parent=11 // pred_check_branch
          %167 = sbr.rel (%p165) target = $region20
        $region19: #{two_layer_mlp_gate.1} parent=11 // pred_region
          _
        $region20: #{two_layer_mlp_gate.1} parent=11 // pred_fallthru
          _
        // Predicated region
        $region21: #{two_layer_mlp_gate.1} parent=11 // pred_check
          %p168 = pneg %p126
        $region22: #{two_layer_mlp_gate.1} parent=11 // pred_check_branch
          %170 = sbr.rel (%p168) target = $region24
        $region23: #{two_layer_mlp_gate.1} parent=11 // pred_region
          _
        $region24: #{two_layer_mlp_gate.1} parent=11 // pred_fallthru
          _
      $region12: #{two_layer_mlp_gate.1} parent=5 // pred_fallthru
        _
      %p171 = scmp.lt.s32.totalorder %s11, 4
      // Predicated region
      $region25: #{two_layer_mlp_gate.1} parent=5 // pred_check
        %p172 = pneg %p171
      $region26: #{two_layer_mlp_gate.1} parent=5 // pred_check_branch
        %174 = sbr.rel (%p172) target = $region28
      $region27: #{two_layer_mlp_gate.1} parent=5 // pred_region
        // Predicated region
        $region29: #{two_layer_mlp_gate.1} parent=27 // pred_check
          %p175 = pneg %p31
        $region30: #{two_layer_mlp_gate.1} parent=27 // pred_check_branch
          %177 = sbr.rel (%p175) target = $region32
        $region31: #{two_layer_mlp_gate.1} parent=27 // pred_region
          %s178 = sand.u32 %s21, 1
          %s179 = sand.u32 %s21, 1
          %s180 = smul.addr %s179, 768
          %s181 = scalar_lea.vmem [#allocation3], %s180
          %s182 = smul.u32 2, %s11
          %s183 = smul.addr %s182, 8
          %s184 = scalar_lea.vmem %s0, %s183
          // Predicated region
          $region33: #{two_layer_mlp_gate.1} parent=31 // pred_check
            _
          $region34: #{two_layer_mlp_gate.1} parent=31 // pred_check_branch
            %186 = sbr.rel (0) target = $region36
          $region35: #{two_layer_mlp_gate.1} parent=31 // pred_region
            // Predicated region
            $region37: #{two_layer_mlp_gate.1} parent=35 // pred_check
              _
            $region38: #{two_layer_mlp_gate.1} parent=35 // pred_check_branch
              %188 = sbr.rel (0) target = $region40
            $region39: #{two_layer_mlp_gate.1} parent=35 // pred_region
              loop: start=0, step=1, limit=1
              $region41: #{two_layer_mlp_gate.1} parent=39 // loop_pre_header
                _
              $region42: #{two_layer_mlp_gate.1} parent=39 // loop_header
                %s190 = sphi 0, %s194
                %p191 = scmp.ge.s32.totalorder %s190, 1
                %s195 = sphi %s184, %s184
                %s196 = sphi %s181, %s181
              $region43: #{two_layer_mlp_gate.1} parent=39 // loop_header_branch
                %193 = sbr.rel (%p191) target = $region47
              $region44: #{two_layer_mlp_gate.1} parent=39 // loop_body
                %v197 = vld [vmem:[%s195] sm:$0xff]
                %198 = vst [vmem:[%s196] sm:$0xff] %v197
                %v199 = vld [vmem:[%s195 + $0x8] sm:$0xff]
                %200 = vst [vmem:[%s196 + $0x8] sm:$0xff] %v199
                %v201 = vld [vmem:[%s195 + $0x40] sm:$0xff]
                %202 = vst [vmem:[%s196 + $0x10] sm:$0xff] %v201
                %v203 = vld [vmem:[%s195 + $0x48] sm:$0xff]
                %204 = vst [vmem:[%s196 + $0x18] sm:$0xff] %v203
                %v205 = vld [vmem:[%s195 + $0x80] sm:$0xff]
                %206 = vst [vmem:[%s196 + $0x20] sm:$0xff] %v205
                %v207 = vld [vmem:[%s195 + $0x88] sm:$0xff]
                %208 = vst [vmem:[%s196 + $0x28] sm:$0xff] %v207
                %v209 = vld [vmem:[%s195 + $0xc0] sm:$0xff]
                %210 = vst [vmem:[%s196 + $0x30] sm:$0xff] %v209
                %v211 = vld [vmem:[%s195 + $0xc8] sm:$0xff]
                %212 = vst [vmem:[%s196 + $0x38] sm:$0xff] %v211
                %v213 = vld [vmem:[%s195 + $0x100] sm:$0xff]
                %214 = vst [vmem:[%s196 + $0x40] sm:$0xff] %v213
                %v215 = vld [vmem:[%s195 + $0x108] sm:$0xff]
                %216 = vst [vmem:[%s196 + $0x48] sm:$0xff] %v215
                %v217 = vld [vmem:[%s195 + $0x140] sm:$0xff]
                %218 = vst [vmem:[%s196 + $0x50] sm:$0xff] %v217
                %v219 = vld [vmem:[%s195 + $0x148] sm:$0xff]
                %220 = vst [vmem:[%s196 + $0x58] sm:$0xff] %v219
                %v221 = vld [vmem:[%s195 + $0x180] sm:$0xff]
                %222 = vst [vmem:[%s196 + $0x60] sm:$0xff] %v221
                %v223 = vld [vmem:[%s195 + $0x188] sm:$0xff]
                %224 = vst [vmem:[%s196 + $0x68] sm:$0xff] %v223
                %v225 = vld [vmem:[%s195 + $0x1c0] sm:$0xff]
                %226 = vst [vmem:[%s196 + $0x70] sm:$0xff] %v225
                %v227 = vld [vmem:[%s195 + $0x1c8] sm:$0xff]
                %228 = vst [vmem:[%s196 + $0x78] sm:$0xff] %v227
                %v229 = vld [vmem:[%s195 + $0x200] sm:$0xff]
                %230 = vst [vmem:[%s196 + $0x80] sm:$0xff] %v229
                %v231 = vld [vmem:[%s195 + $0x208] sm:$0xff]
                %232 = vst [vmem:[%s196 + $0x88] sm:$0xff] %v231
                %v233 = vld [vmem:[%s195 + $0x240] sm:$0xff]
                %234 = vst [vmem:[%s196 + $0x90] sm:$0xff] %v233
                %v235 = vld [vmem:[%s195 + $0x248] sm:$0xff]
                %236 = vst [vmem:[%s196 + $0x98] sm:$0xff] %v235
                %v237 = vld [vmem:[%s195 + $0x280] sm:$0xff]
                %238 = vst [vmem:[%s196 + $0xa0] sm:$0xff] %v237
                %v239 = vld [vmem:[%s195 + $0x288] sm:$0xff]
                %240 = vst [vmem:[%s196 + $0xa8] sm:$0xff] %v239
                %v241 = vld [vmem:[%s195 + $0x2c0] sm:$0xff]
                %242 = vst [vmem:[%s196 + $0xb0] sm:$0xff] %v241
                %v243 = vld [vmem:[%s195 + $0x2c8] sm:$0xff]
                %244 = vst [vmem:[%s196 + $0xb8] sm:$0xff] %v243
                %v245 = vld [vmem:[%s195 + $0x300] sm:$0xff]
                %246 = vst [vmem:[%s196 + $0xc0] sm:$0xff] %v245
                %v247 = vld [vmem:[%s195 + $0x308] sm:$0xff]
                %248 = vst [vmem:[%s196 + $0xc8] sm:$0xff] %v247
                %v249 = vld [vmem:[%s195 + $0x340] sm:$0xff]
                %250 = vst [vmem:[%s196 + $0xd0] sm:$0xff] %v249
                %v251 = vld [vmem:[%s195 + $0x348] sm:$0xff]
                %252 = vst [vmem:[%s196 + $0xd8] sm:$0xff] %v251
                %v253 = vld [vmem:[%s195 + $0x380] sm:$0xff]
                %254 = vst [vmem:[%s196 + $0xe0] sm:$0xff] %v253
                %v255 = vld [vmem:[%s195 + $0x388] sm:$0xff]
                %256 = vst [vmem:[%s196 + $0xe8] sm:$0xff] %v255
                %v257 = vld [vmem:[%s195 + $0x3c0] sm:$0xff]
                %258 = vst [vmem:[%s196 + $0xf0] sm:$0xff] %v257
                %v259 = vld [vmem:[%s195 + $0x3c8] sm:$0xff]
                %260 = vst [vmem:[%s196 + $0xf8] sm:$0xff] %v259
                %v261 = vld [vmem:[%s195 + $0x400] sm:$0xff]
                %262 = vst [vmem:[%s196 + $0x100] sm:$0xff] %v261
                %v263 = vld [vmem:[%s195 + $0x408] sm:$0xff]
                %264 = vst [vmem:[%s196 + $0x108] sm:$0xff] %v263
                %v265 = vld [vmem:[%s195 + $0x440] sm:$0xff]
                %266 = vst [vmem:[%s196 + $0x110] sm:$0xff] %v265
                %v267 = vld [vmem:[%s195 + $0x448] sm:$0xff]
                %268 = vst [vmem:[%s196 + $0x118] sm:$0xff] %v267
                %v269 = vld [vmem:[%s195 + $0x480] sm:$0xff]
                %270 = vst [vmem:[%s196 + $0x120] sm:$0xff] %v269
                %v271 = vld [vmem:[%s195 + $0x488] sm:$0xff]
                %272 = vst [vmem:[%s196 + $0x128] sm:$0xff] %v271
                %v273 = vld [vmem:[%s195 + $0x4c0] sm:$0xff]
                %274 = vst [vmem:[%s196 + $0x130] sm:$0xff] %v273
                %v275 = vld [vmem:[%s195 + $0x4c8] sm:$0xff]
                %276 = vst [vmem:[%s196 + $0x138] sm:$0xff] %v275
                %v277 = vld [vmem:[%s195 + $0x500] sm:$0xff]
                %278 = vst [vmem:[%s196 + $0x140] sm:$0xff] %v277
                %v279 = vld [vmem:[%s195 + $0x508] sm:$0xff]
                %280 = vst [vmem:[%s196 + $0x148] sm:$0xff] %v279
                %v281 = vld [vmem:[%s195 + $0x540] sm:$0xff]
                %282 = vst [vmem:[%s196 + $0x150] sm:$0xff] %v281
                %v283 = vld [vmem:[%s195 + $0x548] sm:$0xff]
                %284 = vst [vmem:[%s196 + $0x158] sm:$0xff] %v283
                %v285 = vld [vmem:[%s195 + $0x580] sm:$0xff]
                %286 = vst [vmem:[%s196 + $0x160] sm:$0xff] %v285
                %v287 = vld [vmem:[%s195 + $0x588] sm:$0xff]
                %288 = vst [vmem:[%s196 + $0x168] sm:$0xff] %v287
                %v289 = vld [vmem:[%s195 + $0x5c0] sm:$0xff]
                %290 = vst [vmem:[%s196 + $0x170] sm:$0xff] %v289
                %v291 = vld [vmem:[%s195 + $0x5c8] sm:$0xff]
                %292 = vst [vmem:[%s196 + $0x178] sm:$0xff] %v291
                %v293 = vld [vmem:[%s195 + $0x600] sm:$0xff]
                %294 = vst [vmem:[%s196 + $0x180] sm:$0xff] %v293
                %v295 = vld [vmem:[%s195 + $0x608] sm:$0xff]
                %296 = vst [vmem:[%s196 + $0x188] sm:$0xff] %v295
                %v297 = vld [vmem:[%s195 + $0x640] sm:$0xff]
                %298 = vst [vmem:[%s196 + $0x190] sm:$0xff] %v297
                %v299 = vld [vmem:[%s195 + $0x648] sm:$0xff]
                %300 = vst [vmem:[%s196 + $0x198] sm:$0xff] %v299
                %v301 = vld [vmem:[%s195 + $0x680] sm:$0xff]
                %302 = vst [vmem:[%s196 + $0x1a0] sm:$0xff] %v301
                %v303 = vld [vmem:[%s195 + $0x688] sm:$0xff]
                %304 = vst [vmem:[%s196 + $0x1a8] sm:$0xff] %v303
                %v305 = vld [vmem:[%s195 + $0x6c0] sm:$0xff]
                %306 = vst [vmem:[%s196 + $0x1b0] sm:$0xff] %v305
                %v307 = vld [vmem:[%s195 + $0x6c8] sm:$0xff]
                %308 = vst [vmem:[%s196 + $0x1b8] sm:$0xff] %v307
                %v309 = vld [vmem:[%s195 + $0x700] sm:$0xff]
                %310 = vst [vmem:[%s196 + $0x1c0] sm:$0xff] %v309
                %v311 = vld [vmem:[%s195 + $0x708] sm:$0xff]
                %312 = vst [vmem:[%s196 + $0x1c8] sm:$0xff] %v311
                %v313 = vld [vmem:[%s195 + $0x740] sm:$0xff]
                %314 = vst [vmem:[%s196 + $0x1d0] sm:$0xff] %v313
                %v315 = vld [vmem:[%s195 + $0x748] sm:$0xff]
                %316 = vst [vmem:[%s196 + $0x1d8] sm:$0xff] %v315
                %v317 = vld [vmem:[%s195 + $0x780] sm:$0xff]
                %318 = vst [vmem:[%s196 + $0x1e0] sm:$0xff] %v317
                %v319 = vld [vmem:[%s195 + $0x788] sm:$0xff]
                %320 = vst [vmem:[%s196 + $0x1e8] sm:$0xff] %v319
                %v321 = vld [vmem:[%s195 + $0x7c0] sm:$0xff]
                %322 = vst [vmem:[%s196 + $0x1f0] sm:$0xff] %v321
                %v323 = vld [vmem:[%s195 + $0x7c8] sm:$0xff]
                %324 = vst [vmem:[%s196 + $0x1f8] sm:$0xff] %v323
                %v325 = vld [vmem:[%s195 + $0x800] sm:$0xff]
                %326 = vst [vmem:[%s196 + $0x200] sm:$0xff] %v325
                %v327 = vld [vmem:[%s195 + $0x808] sm:$0xff]
                %328 = vst [vmem:[%s196 + $0x208] sm:$0xff] %v327
                %v329 = vld [vmem:[%s195 + $0x840] sm:$0xff]
                %330 = vst [vmem:[%s196 + $0x210] sm:$0xff] %v329
                %v331 = vld [vmem:[%s195 + $0x848] sm:$0xff]
                %332 = vst [vmem:[%s196 + $0x218] sm:$0xff] %v331
                %v333 = vld [vmem:[%s195 + $0x880] sm:$0xff]
                %334 = vst [vmem:[%s196 + $0x220] sm:$0xff] %v333
                %v335 = vld [vmem:[%s195 + $0x888] sm:$0xff]
                %336 = vst [vmem:[%s196 + $0x228] sm:$0xff] %v335
                %v337 = vld [vmem:[%s195 + $0x8c0] sm:$0xff]
                %338 = vst [vmem:[%s196 + $0x230] sm:$0xff] %v337
                %v339 = vld [vmem:[%s195 + $0x8c8] sm:$0xff]
                %340 = vst [vmem:[%s196 + $0x238] sm:$0xff] %v339
                %v341 = vld [vmem:[%s195 + $0x900] sm:$0xff]
                %342 = vst [vmem:[%s196 + $0x240] sm:$0xff] %v341
                %v343 = vld [vmem:[%s195 + $0x908] sm:$0xff]
                %344 = vst [vmem:[%s196 + $0x248] sm:$0xff] %v343
                %v345 = vld [vmem:[%s195 + $0x940] sm:$0xff]
                %346 = vst [vmem:[%s196 + $0x250] sm:$0xff] %v345
                %v347 = vld [vmem:[%s195 + $0x948] sm:$0xff]
                %348 = vst [vmem:[%s196 + $0x258] sm:$0xff] %v347
                %v349 = vld [vmem:[%s195 + $0x980] sm:$0xff]
                %350 = vst [vmem:[%s196 + $0x260] sm:$0xff] %v349
                %v351 = vld [vmem:[%s195 + $0x988] sm:$0xff]
                %352 = vst [vmem:[%s196 + $0x268] sm:$0xff] %v351
                %v353 = vld [vmem:[%s195 + $0x9c0] sm:$0xff]
                %354 = vst [vmem:[%s196 + $0x270] sm:$0xff] %v353
                %v355 = vld [vmem:[%s195 + $0x9c8] sm:$0xff]
                %356 = vst [vmem:[%s196 + $0x278] sm:$0xff] %v355
                %v357 = vld [vmem:[%s195 + $0xa00] sm:$0xff]
                %358 = vst [vmem:[%s196 + $0x280] sm:$0xff] %v357
                %v359 = vld [vmem:[%s195 + $0xa08] sm:$0xff]
                %360 = vst [vmem:[%s196 + $0x288] sm:$0xff] %v359
                %v361 = vld [vmem:[%s195 + $0xa40] sm:$0xff]
                %362 = vst [vmem:[%s196 + $0x290] sm:$0xff] %v361
                %v363 = vld [vmem:[%s195 + $0xa48] sm:$0xff]
                %364 = vst [vmem:[%s196 + $0x298] sm:$0xff] %v363
                %v365 = vld [vmem:[%s195 + $0xa80] sm:$0xff]
                %366 = vst [vmem:[%s196 + $0x2a0] sm:$0xff] %v365
                %v367 = vld [vmem:[%s195 + $0xa88] sm:$0xff]
                %368 = vst [vmem:[%s196 + $0x2a8] sm:$0xff] %v367
                %v369 = vld [vmem:[%s195 + $0xac0] sm:$0xff]
                %370 = vst [vmem:[%s196 + $0x2b0] sm:$0xff] %v369
                %v371 = vld [vmem:[%s195 + $0xac8] sm:$0xff]
                %372 = vst [vmem:[%s196 + $0x2b8] sm:$0xff] %v371
                %v373 = vld [vmem:[%s195 + $0xb00] sm:$0xff]
                %374 = vst [vmem:[%s196 + $0x2c0] sm:$0xff] %v373
                %v375 = vld [vmem:[%s195 + $0xb08] sm:$0xff]
                %376 = vst [vmem:[%s196 + $0x2c8] sm:$0xff] %v375
                %v377 = vld [vmem:[%s195 + $0xb40] sm:$0xff]
                %378 = vst [vmem:[%s196 + $0x2d0] sm:$0xff] %v377
                %v379 = vld [vmem:[%s195 + $0xb48] sm:$0xff]
                %380 = vst [vmem:[%s196 + $0x2d8] sm:$0xff] %v379
                %v381 = vld [vmem:[%s195 + $0xb80] sm:$0xff]
                %382 = vst [vmem:[%s196 + $0x2e0] sm:$0xff] %v381
                %v383 = vld [vmem:[%s195 + $0xb88] sm:$0xff]
                %384 = vst [vmem:[%s196 + $0x2e8] sm:$0xff] %v383
                %v385 = vld [vmem:[%s195 + $0xbc0] sm:$0xff]
                %386 = vst [vmem:[%s196 + $0x2f0] sm:$0xff] %v385
                %v387 = vld [vmem:[%s195 + $0xbc8] sm:$0xff]
                %388 = vst [vmem:[%s196 + $0x2f8] sm:$0xff] %v387
              $region45: #{two_layer_mlp_gate.1} parent=39 // loop_footer
                %s194 = sadd.s32 1, %s190
              $region46: #{two_layer_mlp_gate.1} parent=39 // loop_footer_branch
                %189 = sbr.rel target = $region42
              $region47: #{two_layer_mlp_gate.1} parent=39 // loop_exit
                _
            $region40: #{two_layer_mlp_gate.1} parent=35 // pred_fallthru
              _
            // Predicated region
            $region48: #{two_layer_mlp_gate.1} parent=35 // pred_check
              _
            $region49: #{two_layer_mlp_gate.1} parent=35 // pred_check_branch
              %390 = sbr.rel target = $region51
            $region50: #{two_layer_mlp_gate.1} parent=35 // pred_region
              _
            $region51: #{two_layer_mlp_gate.1} parent=35 // pred_fallthru
              _
          $region36: #{two_layer_mlp_gate.1} parent=31 // pred_fallthru
            _
          %391 = vnop
        $region32: #{two_layer_mlp_gate.1} parent=27 // pred_fallthru
          _
        // Predicated region
        $region52: #{two_layer_mlp_gate.1} parent=27 // pred_check
          %p392 = pneg %p57
        $region53: #{two_layer_mlp_gate.1} parent=27 // pred_check_branch
          %394 = sbr.rel (%p392) target = $region55
        $region54: #{two_layer_mlp_gate.1} parent=27 // pred_region
          %s395 = sand.u32 %s47, 1
          %s396 = sand.u32 %s47, 1
          %s397 = smul.addr %s396, 512
          %s398 = scalar_lea.vmem [#allocation4], %s397
          %s399 = smul.u32 2, %s11
          %s400 = smul.addr %s399, 8
          %s401 = scalar_lea.vmem %s1, %s400
          // Predicated region
          $region56: #{two_layer_mlp_gate.1} parent=54 // pred_check
            _
          $region57: #{two_layer_mlp_gate.1} parent=54 // pred_check_branch
            %403 = sbr.rel (0) target = $region59
          $region58: #{two_layer_mlp_gate.1} parent=54 // pred_region
            // Predicated region
            $region60: #{two_layer_mlp_gate.1} parent=58 // pred_check
              _
            $region61: #{two_layer_mlp_gate.1} parent=58 // pred_check_branch
              %405 = sbr.rel (0) target = $region63
            $region62: #{two_layer_mlp_gate.1} parent=58 // pred_region
              loop: start=0, step=1, limit=1
              $region64: #{two_layer_mlp_gate.1} parent=62 // loop_pre_header
                _
              $region65: #{two_layer_mlp_gate.1} parent=62 // loop_header
                %s407 = sphi 0, %s411
                %p408 = scmp.ge.s32.totalorder %s407, 1
                %s412 = sphi %s401, %s401
                %s413 = sphi %s398, %s398
              $region66: #{two_layer_mlp_gate.1} parent=62 // loop_header_branch
                %410 = sbr.rel (%p408) target = $region70
              $region67: #{two_layer_mlp_gate.1} parent=62 // loop_body
                %v414 = vld [vmem:[%s412] sm:$0xff]
                %415 = vst [vmem:[%s413] sm:$0xff] %v414
                %v416 = vld [vmem:[%s412 + $0x8] sm:$0xff]
                %417 = vst [vmem:[%s413 + $0x8] sm:$0xff] %v416
                %v418 = vld [vmem:[%s412 + $0x40] sm:$0xff]
                %419 = vst [vmem:[%s413 + $0x10] sm:$0xff] %v418
                %v420 = vld [vmem:[%s412 + $0x48] sm:$0xff]
                %421 = vst [vmem:[%s413 + $0x18] sm:$0xff] %v420
                %v422 = vld [vmem:[%s412 + $0x80] sm:$0xff]
                %423 = vst [vmem:[%s413 + $0x20] sm:$0xff] %v422
                %v424 = vld [vmem:[%s412 + $0x88] sm:$0xff]
                %425 = vst [vmem:[%s413 + $0x28] sm:$0xff] %v424
                %v426 = vld [vmem:[%s412 + $0xc0] sm:$0xff]
                %427 = vst [vmem:[%s413 + $0x30] sm:$0xff] %v426
                %v428 = vld [vmem:[%s412 + $0xc8] sm:$0xff]
                %429 = vst [vmem:[%s413 + $0x38] sm:$0xff] %v428
                %v430 = vld [vmem:[%s412 + $0x100] sm:$0xff]
                %431 = vst [vmem:[%s413 + $0x40] sm:$0xff] %v430
                %v432 = vld [vmem:[%s412 + $0x108] sm:$0xff]
                %433 = vst [vmem:[%s413 + $0x48] sm:$0xff] %v432
                %v434 = vld [vmem:[%s412 + $0x140] sm:$0xff]
                %435 = vst [vmem:[%s413 + $0x50] sm:$0xff] %v434
                %v436 = vld [vmem:[%s412 + $0x148] sm:$0xff]
                %437 = vst [vmem:[%s413 + $0x58] sm:$0xff] %v436
                %v438 = vld [vmem:[%s412 + $0x180] sm:$0xff]
                %439 = vst [vmem:[%s413 + $0x60] sm:$0xff] %v438
                %v440 = vld [vmem:[%s412 + $0x188] sm:$0xff]
                %441 = vst [vmem:[%s413 + $0x68] sm:$0xff] %v440
                %v442 = vld [vmem:[%s412 + $0x1c0] sm:$0xff]
                %443 = vst [vmem:[%s413 + $0x70] sm:$0xff] %v442
                %v444 = vld [vmem:[%s412 + $0x1c8] sm:$0xff]
                %445 = vst [vmem:[%s413 + $0x78] sm:$0xff] %v444
                %v446 = vld [vmem:[%s412 + $0x200] sm:$0xff]
                %447 = vst [vmem:[%s413 + $0x80] sm:$0xff] %v446
                %v448 = vld [vmem:[%s412 + $0x208] sm:$0xff]
                %449 = vst [vmem:[%s413 + $0x88] sm:$0xff] %v448
                %v450 = vld [vmem:[%s412 + $0x240] sm:$0xff]
                %451 = vst [vmem:[%s413 + $0x90] sm:$0xff] %v450
                %v452 = vld [vmem:[%s412 + $0x248] sm:$0xff]
                %453 = vst [vmem:[%s413 + $0x98] sm:$0xff] %v452
                %v454 = vld [vmem:[%s412 + $0x280] sm:$0xff]
                %455 = vst [vmem:[%s413 + $0xa0] sm:$0xff] %v454
                %v456 = vld [vmem:[%s412 + $0x288] sm:$0xff]
                %457 = vst [vmem:[%s413 + $0xa8] sm:$0xff] %v456
                %v458 = vld [vmem:[%s412 + $0x2c0] sm:$0xff]
                %459 = vst [vmem:[%s413 + $0xb0] sm:$0xff] %v458
                %v460 = vld [vmem:[%s412 + $0x2c8] sm:$0xff]
                %461 = vst [vmem:[%s413 + $0xb8] sm:$0xff] %v460
                %v462 = vld [vmem:[%s412 + $0x300] sm:$0xff]
                %463 = vst [vmem:[%s413 + $0xc0] sm:$0xff] %v462
                %v464 = vld [vmem:[%s412 + $0x308] sm:$0xff]
                %465 = vst [vmem:[%s413 + $0xc8] sm:$0xff] %v464
                %v466 = vld [vmem:[%s412 + $0x340] sm:$0xff]
                %467 = vst [vmem:[%s413 + $0xd0] sm:$0xff] %v466
                %v468 = vld [vmem:[%s412 + $0x348] sm:$0xff]
                %469 = vst [vmem:[%s413 + $0xd8] sm:$0xff] %v468
                %v470 = vld [vmem:[%s412 + $0x380] sm:$0xff]
                %471 = vst [vmem:[%s413 + $0xe0] sm:$0xff] %v470
                %v472 = vld [vmem:[%s412 + $0x388] sm:$0xff]
                %473 = vst [vmem:[%s413 + $0xe8] sm:$0xff] %v472
                %v474 = vld [vmem:[%s412 + $0x3c0] sm:$0xff]
                %475 = vst [vmem:[%s413 + $0xf0] sm:$0xff] %v474
                %v476 = vld [vmem:[%s412 + $0x3c8] sm:$0xff]
                %477 = vst [vmem:[%s413 + $0xf8] sm:$0xff] %v476
                %v478 = vld [vmem:[%s412 + $0x400] sm:$0xff]
                %479 = vst [vmem:[%s413 + $0x100] sm:$0xff] %v478
                %v480 = vld [vmem:[%s412 + $0x408] sm:$0xff]
                %481 = vst [vmem:[%s413 + $0x108] sm:$0xff] %v480
                %v482 = vld [vmem:[%s412 + $0x440] sm:$0xff]
                %483 = vst [vmem:[%s413 + $0x110] sm:$0xff] %v482
                %v484 = vld [vmem:[%s412 + $0x448] sm:$0xff]
                %485 = vst [vmem:[%s413 + $0x118] sm:$0xff] %v484
                %v486 = vld [vmem:[%s412 + $0x480] sm:$0xff]
                %487 = vst [vmem:[%s413 + $0x120] sm:$0xff] %v486
                %v488 = vld [vmem:[%s412 + $0x488] sm:$0xff]
                %489 = vst [vmem:[%s413 + $0x128] sm:$0xff] %v488
                %v490 = vld [vmem:[%s412 + $0x4c0] sm:$0xff]
                %491 = vst [vmem:[%s413 + $0x130] sm:$0xff] %v490
                %v492 = vld [vmem:[%s412 + $0x4c8] sm:$0xff]
                %493 = vst [vmem:[%s413 + $0x138] sm:$0xff] %v492
                %v494 = vld [vmem:[%s412 + $0x500] sm:$0xff]
                %495 = vst [vmem:[%s413 + $0x140] sm:$0xff] %v494
                %v496 = vld [vmem:[%s412 + $0x508] sm:$0xff]
                %497 = vst [vmem:[%s413 + $0x148] sm:$0xff] %v496
                %v498 = vld [vmem:[%s412 + $0x540] sm:$0xff]
                %499 = vst [vmem:[%s413 + $0x150] sm:$0xff] %v498
                %v500 = vld [vmem:[%s412 + $0x548] sm:$0xff]
                %501 = vst [vmem:[%s413 + $0x158] sm:$0xff] %v500
                %v502 = vld [vmem:[%s412 + $0x580] sm:$0xff]
                %503 = vst [vmem:[%s413 + $0x160] sm:$0xff] %v502
                %v504 = vld [vmem:[%s412 + $0x588] sm:$0xff]
                %505 = vst [vmem:[%s413 + $0x168] sm:$0xff] %v504
                %v506 = vld [vmem:[%s412 + $0x5c0] sm:$0xff]
                %507 = vst [vmem:[%s413 + $0x170] sm:$0xff] %v506
                %v508 = vld [vmem:[%s412 + $0x5c8] sm:$0xff]
                %509 = vst [vmem:[%s413 + $0x178] sm:$0xff] %v508
                %v510 = vld [vmem:[%s412 + $0x600] sm:$0xff]
                %511 = vst [vmem:[%s413 + $0x180] sm:$0xff] %v510
                %v512 = vld [vmem:[%s412 + $0x608] sm:$0xff]
                %513 = vst [vmem:[%s413 + $0x188] sm:$0xff] %v512
                %v514 = vld [vmem:[%s412 + $0x640] sm:$0xff]
                %515 = vst [vmem:[%s413 + $0x190] sm:$0xff] %v514
                %v516 = vld [vmem:[%s412 + $0x648] sm:$0xff]
                %517 = vst [vmem:[%s413 + $0x198] sm:$0xff] %v516
                %v518 = vld [vmem:[%s412 + $0x680] sm:$0xff]
                %519 = vst [vmem:[%s413 + $0x1a0] sm:$0xff] %v518
                %v520 = vld [vmem:[%s412 + $0x688] sm:$0xff]
                %521 = vst [vmem:[%s413 + $0x1a8] sm:$0xff] %v520
                %v522 = vld [vmem:[%s412 + $0x6c0] sm:$0xff]
                %523 = vst [vmem:[%s413 + $0x1b0] sm:$0xff] %v522
                %v524 = vld [vmem:[%s412 + $0x6c8] sm:$0xff]
                %525 = vst [vmem:[%s413 + $0x1b8] sm:$0xff] %v524
                %v526 = vld [vmem:[%s412 + $0x700] sm:$0xff]
                %527 = vst [vmem:[%s413 + $0x1c0] sm:$0xff] %v526
                %v528 = vld [vmem:[%s412 + $0x708] sm:$0xff]
                %529 = vst [vmem:[%s413 + $0x1c8] sm:$0xff] %v528
                %v530 = vld [vmem:[%s412 + $0x740] sm:$0xff]
                %531 = vst [vmem:[%s413 + $0x1d0] sm:$0xff] %v530
                %v532 = vld [vmem:[%s412 + $0x748] sm:$0xff]
                %533 = vst [vmem:[%s413 + $0x1d8] sm:$0xff] %v532
                %v534 = vld [vmem:[%s412 + $0x780] sm:$0xff]
                %535 = vst [vmem:[%s413 + $0x1e0] sm:$0xff] %v534
                %v536 = vld [vmem:[%s412 + $0x788] sm:$0xff]
                %537 = vst [vmem:[%s413 + $0x1e8] sm:$0xff] %v536
                %v538 = vld [vmem:[%s412 + $0x7c0] sm:$0xff]
                %539 = vst [vmem:[%s413 + $0x1f0] sm:$0xff] %v538
                %v540 = vld [vmem:[%s412 + $0x7c8] sm:$0xff]
                %541 = vst [vmem:[%s413 + $0x1f8] sm:$0xff] %v540
              $region68: #{two_layer_mlp_gate.1} parent=62 // loop_footer
                %s411 = sadd.s32 1, %s407
              $region69: #{two_layer_mlp_gate.1} parent=62 // loop_footer_branch
                %406 = sbr.rel target = $region65
              $region70: #{two_layer_mlp_gate.1} parent=62 // loop_exit
                _
            $region63: #{two_layer_mlp_gate.1} parent=58 // pred_fallthru
              _
            // Predicated region
            $region71: #{two_layer_mlp_gate.1} parent=58 // pred_check
              _
            $region72: #{two_layer_mlp_gate.1} parent=58 // pred_check_branch
              %543 = sbr.rel target = $region74
            $region73: #{two_layer_mlp_gate.1} parent=58 // pred_region
              _
            $region74: #{two_layer_mlp_gate.1} parent=58 // pred_fallthru
              _
          $region59: #{two_layer_mlp_gate.1} parent=54 // pred_fallthru
            _
          %544 = vnop
        $region55: #{two_layer_mlp_gate.1} parent=27 // pred_fallthru
          _
      $region28: #{two_layer_mlp_gate.1} parent=5 // pred_fallthru
        _
      %p545 = scmp.le.s32.totalorder 1, %s11
      %p546 = scmp.lt.s32.totalorder %s11, 5
      %p547 = pnand %p545, %p546
      %p548 = pneg %p547
      // Predicated region
      $region75: #{two_layer_mlp_gate.1} parent=5 // pred_check
        _
      $region76: #{two_layer_mlp_gate.1} parent=5 // pred_check_branch
        %550 = sbr.rel (%p547) target = $region78
      $region77: #{two_layer_mlp_gate.1} parent=5 // pred_region
        %s551 = ssub.s32 %s11, 1
        %s552 = sand.u32 %s24, 1
        %s553 = sand.u32 %s24, 1
        %s554 = smul.addr %s553, 768
        %s555 = scalar_lea.vmem [#allocation3], %s554
        // Predicated region
        $region79: #{two_layer_mlp_gate.1} parent=77 // pred_check
          %p556 = pneg %p37
        $region80: #{two_layer_mlp_gate.1} parent=77 // pred_check_branch
          %558 = sbr.rel (%p556) target = $region82
        $region81: #{two_layer_mlp_gate.1} parent=77 // pred_region
          _
        $region82: #{two_layer_mlp_gate.1} parent=77 // pred_fallthru
          _
        %s559 = sand.u32 %s50, 1
        %s560 = sand.u32 %s50, 1
        %s561 = smul.addr %s560, 512
        %s562 = scalar_lea.vmem [#allocation4], %s561
        // Predicated region
        $region83: #{two_layer_mlp_gate.1} parent=77 // pred_check
          %p563 = pneg %p63
        $region84: #{two_layer_mlp_gate.1} parent=77 // pred_check_branch
          %565 = sbr.rel (%p563) target = $region86
        $region85: #{two_layer_mlp_gate.1} parent=77 // pred_region
          _
        $region86: #{two_layer_mlp_gate.1} parent=77 // pred_fallthru
          _
        %s566 = sand.u32 %s24, 1
        %s567 = sand.u32 %s24, 1
        %s568 = smul.addr %s567, 768
        %s569 = scalar_lea.vmem [#allocation3], %s568
        %p570 = pneg %p37
        %p571 = pneg %p34
        %s572 = sand.u32 %s50, 1
        %s573 = sand.u32 %s50, 1
        %s574 = smul.addr %s573, 512
        %s575 = scalar_lea.vmem [#allocation4], %s574
        %p576 = pneg %p63
        %p577 = pneg %p60
        %p578 = pneg %p84
        %p579 = pneg %p81
        %p580 = pneg %p105
        %p581 = pneg %p102
        %p582 = pneg %p126
        %p583 = pneg %p123
        %p584 = pneg %p147
        %p585 = pneg %p144
        %s586 = smul.u32 2, %s16
        %s587 = smul.u32 2, %s16
        %p588 = scmp.eq.s32.totalorder %s16, 0
        // Predicated region
        $region87: #{two_layer_mlp_gate.1} parent=77 // pred_check
          %p589 = pneg %p588
        $region88: #{two_layer_mlp_gate.1} parent=77 // pred_check_branch
          %591 = sbr.rel (%p589) target = $region90
        $region89: #{two_layer_mlp_gate.1} parent=77 // pred_region
          %592 = vst [vmem:[#allocation2] sm:$0xff] 0.0
          %593 = vst [vmem:[#allocation2 + $0x8] sm:$0xff] 0.0
          %594 = vst [vmem:[#allocation2 + $0x10] sm:$0xff] 0.0
          %595 = vst [vmem:[#allocation2 + $0x18] sm:$0xff] 0.0
          %596 = vst [vmem:[#allocation2 + $0x20] sm:$0xff] 0.0
          %597 = vst [vmem:[#allocation2 + $0x28] sm:$0xff] 0.0
          %598 = vst [vmem:[#allocation2 + $0x30] sm:$0xff] 0.0
          %599 = vst [vmem:[#allocation2 + $0x38] sm:$0xff] 0.0
          %600 = vst [vmem:[#allocation2 + $0x40] sm:$0xff] 0.0
          %601 = vst [vmem:[#allocation2 + $0x48] sm:$0xff] 0.0
          %602 = vst [vmem:[#allocation2 + $0x50] sm:$0xff] 0.0
          %603 = vst [vmem:[#allocation2 + $0x58] sm:$0xff] 0.0
          %604 = vst [vmem:[#allocation2 + $0x60] sm:$0xff] 0.0
          %605 = vst [vmem:[#allocation2 + $0x68] sm:$0xff] 0.0
          %606 = vst [vmem:[#allocation2 + $0x70] sm:$0xff] 0.0
          %607 = vst [vmem:[#allocation2 + $0x78] sm:$0xff] 0.0
          %608 = vst [vmem:[#allocation2 + $0x80] sm:$0xff] 0.0
          %609 = vst [vmem:[#allocation2 + $0x88] sm:$0xff] 0.0
          %610 = vst [vmem:[#allocation2 + $0x90] sm:$0xff] 0.0
          %611 = vst [vmem:[#allocation2 + $0x98] sm:$0xff] 0.0
          %612 = vst [vmem:[#allocation2 + $0xa0] sm:$0xff] 0.0
          %613 = vst [vmem:[#allocation2 + $0xa8] sm:$0xff] 0.0
          %614 = vst [vmem:[#allocation2 + $0xb0] sm:$0xff] 0.0
          %615 = vst [vmem:[#allocation2 + $0xb8] sm:$0xff] 0.0
          %616 = vst [vmem:[#allocation2 + $0xc0] sm:$0xff] 0.0
          %617 = vst [vmem:[#allocation2 + $0xc8] sm:$0xff] 0.0
          %618 = vst [vmem:[#allocation2 + $0xd0] sm:$0xff] 0.0
          %619 = vst [vmem:[#allocation2 + $0xd8] sm:$0xff] 0.0
          %620 = vst [vmem:[#allocation2 + $0xe0] sm:$0xff] 0.0
          %621 = vst [vmem:[#allocation2 + $0xe8] sm:$0xff] 0.0
          %622 = vst [vmem:[#allocation2 + $0xf0] sm:$0xff] 0.0
          %623 = vst [vmem:[#allocation2 + $0xf8] sm:$0xff] 0.0
          %624 = vst [vmem:[#allocation2 + $0x100] sm:$0xff] 0.0
          %625 = vst [vmem:[#allocation2 + $0x108] sm:$0xff] 0.0
          %626 = vst [vmem:[#allocation2 + $0x110] sm:$0xff] 0.0
          %627 = vst [vmem:[#allocation2 + $0x118] sm:$0xff] 0.0
          %628 = vst [vmem:[#allocation2 + $0x120] sm:$0xff] 0.0
          %629 = vst [vmem:[#allocation2 + $0x128] sm:$0xff] 0.0
          %630 = vst [vmem:[#allocation2 + $0x130] sm:$0xff] 0.0
          %631 = vst [vmem:[#allocation2 + $0x138] sm:$0xff] 0.0
          %632 = vst [vmem:[#allocation2 + $0x140] sm:$0xff] 0.0
          %633 = vst [vmem:[#allocation2 + $0x148] sm:$0xff] 0.0
          %634 = vst [vmem:[#allocation2 + $0x150] sm:$0xff] 0.0
          %635 = vst [vmem:[#allocation2 + $0x158] sm:$0xff] 0.0
          %636 = vst [vmem:[#allocation2 + $0x160] sm:$0xff] 0.0
          %637 = vst [vmem:[#allocation2 + $0x168] sm:$0xff] 0.0
          %638 = vst [vmem:[#allocation2 + $0x170] sm:$0xff] 0.0
          %639 = vst [vmem:[#allocation2 + $0x178] sm:$0xff] 0.0
          %640 = vst [vmem:[#allocation2 + $0x180] sm:$0xff] 0.0
          %641 = vst [vmem:[#allocation2 + $0x188] sm:$0xff] 0.0
          %642 = vst [vmem:[#allocation2 + $0x190] sm:$0xff] 0.0
          %643 = vst [vmem:[#allocation2 + $0x198] sm:$0xff] 0.0
          %644 = vst [vmem:[#allocation2 + $0x1a0] sm:$0xff] 0.0
          %645 = vst [vmem:[#allocation2 + $0x1a8] sm:$0xff] 0.0
          %646 = vst [vmem:[#allocation2 + $0x1b0] sm:$0xff] 0.0
          %647 = vst [vmem:[#allocation2 + $0x1b8] sm:$0xff] 0.0
          %648 = vst [vmem:[#allocation2 + $0x1c0] sm:$0xff] 0.0
          %649 = vst [vmem:[#allocation2 + $0x1c8] sm:$0xff] 0.0
          %650 = vst [vmem:[#allocation2 + $0x1d0] sm:$0xff] 0.0
          %651 = vst [vmem:[#allocation2 + $0x1d8] sm:$0xff] 0.0
          %652 = vst [vmem:[#allocation2 + $0x1e0] sm:$0xff] 0.0
          %653 = vst [vmem:[#allocation2 + $0x1e8] sm:$0xff] 0.0
          %654 = vst [vmem:[#allocation2 + $0x1f0] sm:$0xff] 0.0
          %655 = vst [vmem:[#allocation2 + $0x1f8] sm:$0xff] 0.0
          %656 = vst [vmem:[#allocation2 + $0x200] sm:$0xff] 0.0
          %657 = vst [vmem:[#allocation2 + $0x208] sm:$0xff] 0.0
          %658 = vst [vmem:[#allocation2 + $0x210] sm:$0xff] 0.0
          %659 = vst [vmem:[#allocation2 + $0x218] sm:$0xff] 0.0
          %660 = vst [vmem:[#allocation2 + $0x220] sm:$0xff] 0.0
          %661 = vst [vmem:[#allocation2 + $0x228] sm:$0xff] 0.0
          %662 = vst [vmem:[#allocation2 + $0x230] sm:$0xff] 0.0
          %663 = vst [vmem:[#allocation2 + $0x238] sm:$0xff] 0.0
          %664 = vst [vmem:[#allocation2 + $0x240] sm:$0xff] 0.0
          %665 = vst [vmem:[#allocation2 + $0x248] sm:$0xff] 0.0
          %666 = vst [vmem:[#allocation2 + $0x250] sm:$0xff] 0.0
          %667 = vst [vmem:[#allocation2 + $0x258] sm:$0xff] 0.0
          %668 = vst [vmem:[#allocation2 + $0x260] sm:$0xff] 0.0
          %669 = vst [vmem:[#allocation2 + $0x268] sm:$0xff] 0.0
          %670 = vst [vmem:[#allocation2 + $0x270] sm:$0xff] 0.0
          %671 = vst [vmem:[#allocation2 + $0x278] sm:$0xff] 0.0
          %672 = vst [vmem:[#allocation2 + $0x280] sm:$0xff] 0.0
          %673 = vst [vmem:[#allocation2 + $0x288] sm:$0xff] 0.0
          %674 = vst [vmem:[#allocation2 + $0x290] sm:$0xff] 0.0
          %675 = vst [vmem:[#allocation2 + $0x298] sm:$0xff] 0.0
          %676 = vst [vmem:[#allocation2 + $0x2a0] sm:$0xff] 0.0
          %677 = vst [vmem:[#allocation2 + $0x2a8] sm:$0xff] 0.0
          %678 = vst [vmem:[#allocation2 + $0x2b0] sm:$0xff] 0.0
          %679 = vst [vmem:[#allocation2 + $0x2b8] sm:$0xff] 0.0
          %680 = vst [vmem:[#allocation2 + $0x2c0] sm:$0xff] 0.0
          %681 = vst [vmem:[#allocation2 + $0x2c8] sm:$0xff] 0.0
          %682 = vst [vmem:[#allocation2 + $0x2d0] sm:$0xff] 0.0
          %683 = vst [vmem:[#allocation2 + $0x2d8] sm:$0xff] 0.0
          %684 = vst [vmem:[#allocation2 + $0x2e0] sm:$0xff] 0.0
          %685 = vst [vmem:[#allocation2 + $0x2e8] sm:$0xff] 0.0
          %686 = vst [vmem:[#allocation2 + $0x2f0] sm:$0xff] 0.0
          %687 = vst [vmem:[#allocation2 + $0x2f8] sm:$0xff] 0.0
        $region90: #{two_layer_mlp_gate.1} parent=77 // pred_fallthru
          _
        %v688 = vld [vmem:[#allocation2] sm:$0xff]
        %v689 = vld [vmem:[#allocation2 + $0x8] sm:$0xff]
        %v690 = vld [vmem:[#allocation2 + $0x10] sm:$0xff]
        %v691 = vld [vmem:[#allocation2 + $0x18] sm:$0xff]
        %v692 = vld [vmem:[#allocation2 + $0x20] sm:$0xff]
        %v693 = vld [vmem:[#allocation2 + $0x28] sm:$0xff]
        %v694 = vld [vmem:[#allocation2 + $0x30] sm:$0xff]
        %v695 = vld [vmem:[#allocation2 + $0x38] sm:$0xff]
        %v696 = vld [vmem:[#allocation2 + $0x40] sm:$0xff]
        %v697 = vld [vmem:[#allocation2 + $0x48] sm:$0xff]
        %v698 = vld [vmem:[#allocation2 + $0x50] sm:$0xff]
        %v699 = vld [vmem:[#allocation2 + $0x58] sm:$0xff]
        %v700 = vld [vmem:[#allocation2 + $0x60] sm:$0xff]
        %v701 = vld [vmem:[#allocation2 + $0x68] sm:$0xff]
        %v702 = vld [vmem:[#allocation2 + $0x70] sm:$0xff]
        %v703 = vld [vmem:[#allocation2 + $0x78] sm:$0xff]
        %v704 = vld [vmem:[#allocation2 + $0x80] sm:$0xff]
        %v705 = vld [vmem:[#allocation2 + $0x88] sm:$0xff]
        %v706 = vld [vmem:[#allocation2 + $0x90] sm:$0xff]
        %v707 = vld [vmem:[#allocation2 + $0x98] sm:$0xff]
        %v708 = vld [vmem:[#allocation2 + $0xa0] sm:$0xff]
        %v709 = vld [vmem:[#allocation2 + $0xa8] sm:$0xff]
        %v710 = vld [vmem:[#allocation2 + $0xb0] sm:$0xff]
        %v711 = vld [vmem:[#allocation2 + $0xb8] sm:$0xff]
        %v712 = vld [vmem:[#allocation2 + $0xc0] sm:$0xff]
        %v713 = vld [vmem:[#allocation2 + $0xc8] sm:$0xff]
        %v714 = vld [vmem:[#allocation2 + $0xd0] sm:$0xff]
        %v715 = vld [vmem:[#allocation2 + $0xd8] sm:$0xff]
        %v716 = vld [vmem:[#allocation2 + $0xe0] sm:$0xff]
        %v717 = vld [vmem:[#allocation2 + $0xe8] sm:$0xff]
        %v718 = vld [vmem:[#allocation2 + $0xf0] sm:$0xff]
        %v719 = vld [vmem:[#allocation2 + $0xf8] sm:$0xff]
        %v720 = vld [vmem:[#allocation2 + $0x100] sm:$0xff]
        %v721 = vld [vmem:[#allocation2 + $0x108] sm:$0xff]
        %v722 = vld [vmem:[#allocation2 + $0x110] sm:$0xff]
        %v723 = vld [vmem:[#allocation2 + $0x118] sm:$0xff]
        %v724 = vld [vmem:[#allocation2 + $0x120] sm:$0xff]
        %v725 = vld [vmem:[#allocation2 + $0x128] sm:$0xff]
        %v726 = vld [vmem:[#allocation2 + $0x130] sm:$0xff]
        %v727 = vld [vmem:[#allocation2 + $0x138] sm:$0xff]
        %v728 = vld [vmem:[#allocation2 + $0x140] sm:$0xff]
        %v729 = vld [vmem:[#allocation2 + $0x148] sm:$0xff]
        %v730 = vld [vmem:[#allocation2 + $0x150] sm:$0xff]
        %v731 = vld [vmem:[#allocation2 + $0x158] sm:$0xff]
        %v732 = vld [vmem:[#allocation2 + $0x160] sm:$0xff]
        %v733 = vld [vmem:[#allocation2 + $0x168] sm:$0xff]
        %v734 = vld [vmem:[#allocation2 + $0x170] sm:$0xff]
        %v735 = vld [vmem:[#allocation2 + $0x178] sm:$0xff]
        %v736 = vld [vmem:[#allocation2 + $0x180] sm:$0xff]
        %v737 = vld [vmem:[#allocation2 + $0x188] sm:$0xff]
        %v738 = vld [vmem:[#allocation2 + $0x190] sm:$0xff]
        %v739 = vld [vmem:[#allocation2 + $0x198] sm:$0xff]
        %v740 = vld [vmem:[#allocation2 + $0x1a0] sm:$0xff]
        %v741 = vld [vmem:[#allocation2 + $0x1a8] sm:$0xff]
        %v742 = vld [vmem:[#allocation2 + $0x1b0] sm:$0xff]
        %v743 = vld [vmem:[#allocation2 + $0x1b8] sm:$0xff]
        %v744 = vld [vmem:[#allocation2 + $0x1c0] sm:$0xff]
        %v745 = vld [vmem:[#allocation2 + $0x1c8] sm:$0xff]
        %v746 = vld [vmem:[#allocation2 + $0x1d0] sm:$0xff]
        %v747 = vld [vmem:[#allocation2 + $0x1d8] sm:$0xff]
        %v748 = vld [vmem:[#allocation2 + $0x1e0] sm:$0xff]
        %v749 = vld [vmem:[#allocation2 + $0x1e8] sm:$0xff]
        %v750 = vld [vmem:[#allocation2 + $0x1f0] sm:$0xff]
        %v751 = vld [vmem:[#allocation2 + $0x1f8] sm:$0xff]
        %v752 = vld [vmem:[#allocation2 + $0x200] sm:$0xff]
        %v753 = vld [vmem:[#allocation2 + $0x208] sm:$0xff]
        %v754 = vld [vmem:[#allocation2 + $0x210] sm:$0xff]
        %v755 = vld [vmem:[#allocation2 + $0x218] sm:$0xff]
        %v756 = vld [vmem:[#allocation2 + $0x220] sm:$0xff]
        %v757 = vld [vmem:[#allocation2 + $0x228] sm:$0xff]
        %v758 = vld [vmem:[#allocation2 + $0x230] sm:$0xff]
        %v759 = vld [vmem:[#allocation2 + $0x238] sm:$0xff]
        %v760 = vld [vmem:[#allocation2 + $0x240] sm:$0xff]
        %v761 = vld [vmem:[#allocation2 + $0x248] sm:$0xff]
        %v762 = vld [vmem:[#allocation2 + $0x250] sm:$0xff]
        %v763 = vld [vmem:[#allocation2 + $0x258] sm:$0xff]
        %v764 = vld [vmem:[#allocation2 + $0x260] sm:$0xff]
        %v765 = vld [vmem:[#allocation2 + $0x268] sm:$0xff]
        %v766 = vld [vmem:[#allocation2 + $0x270] sm:$0xff]
        %v767 = vld [vmem:[#allocation2 + $0x278] sm:$0xff]
        %v768 = vld [vmem:[#allocation2 + $0x280] sm:$0xff]
        %v769 = vld [vmem:[#allocation2 + $0x288] sm:$0xff]
        %v770 = vld [vmem:[#allocation2 + $0x290] sm:$0xff]
        %v771 = vld [vmem:[#allocation2 + $0x298] sm:$0xff]
        %v772 = vld [vmem:[#allocation2 + $0x2a0] sm:$0xff]
        %v773 = vld [vmem:[#allocation2 + $0x2a8] sm:$0xff]
        %v774 = vld [vmem:[#allocation2 + $0x2b0] sm:$0xff]
        %v775 = vld [vmem:[#allocation2 + $0x2b8] sm:$0xff]
        %v776 = vld [vmem:[#allocation2 + $0x2c0] sm:$0xff]
        %v777 = vld [vmem:[#allocation2 + $0x2c8] sm:$0xff]
        %v778 = vld [vmem:[#allocation2 + $0x2d0] sm:$0xff]
        %v779 = vld [vmem:[#allocation2 + $0x2d8] sm:$0xff]
        %v780 = vld [vmem:[#allocation2 + $0x2e0] sm:$0xff]
        %v781 = vld [vmem:[#allocation2 + $0x2e8] sm:$0xff]
        %v782 = vld [vmem:[#allocation2 + $0x2f0] sm:$0xff]
        %v783 = vld [vmem:[#allocation2 + $0x2f8] sm:$0xff]
        %v784 = vld [vmem:[%s562] sm:$0xff]
        %v785 = vld [vmem:[%s562 + $0x8] sm:$0xff]
        %v786 = vld [vmem:[%s562 + $0x10] sm:$0xff]
        %v787 = vld [vmem:[%s562 + $0x18] sm:$0xff]
        %v788 = vld [vmem:[%s562 + $0x20] sm:$0xff]
        %v789 = vld [vmem:[%s562 + $0x28] sm:$0xff]
        %v790 = vld [vmem:[%s562 + $0x30] sm:$0xff]
        %v791 = vld [vmem:[%s562 + $0x38] sm:$0xff]
        %v792 = vld [vmem:[%s562 + $0x40] sm:$0xff]
        %v793 = vld [vmem:[%s562 + $0x48] sm:$0xff]
        %v794 = vld [vmem:[%s562 + $0x50] sm:$0xff]
        %v795 = vld [vmem:[%s562 + $0x58] sm:$0xff]
        %v796 = vld [vmem:[%s562 + $0x60] sm:$0xff]
        %v797 = vld [vmem:[%s562 + $0x68] sm:$0xff]
        %v798 = vld [vmem:[%s562 + $0x70] sm:$0xff]
        %v799 = vld [vmem:[%s562 + $0x78] sm:$0xff]
        %v800 = vld [vmem:[%s562 + $0x80] sm:$0xff]
        %v801 = vld [vmem:[%s562 + $0x88] sm:$0xff]
        %v802 = vld [vmem:[%s562 + $0x90] sm:$0xff]
        %v803 = vld [vmem:[%s562 + $0x98] sm:$0xff]
        %v804 = vld [vmem:[%s562 + $0xa0] sm:$0xff]
        %v805 = vld [vmem:[%s562 + $0xa8] sm:$0xff]
        %v806 = vld [vmem:[%s562 + $0xb0] sm:$0xff]
        %v807 = vld [vmem:[%s562 + $0xb8] sm:$0xff]
        %v808 = vld [vmem:[%s562 + $0xc0] sm:$0xff]
        %v809 = vld [vmem:[%s562 + $0xc8] sm:$0xff]
        %v810 = vld [vmem:[%s562 + $0xd0] sm:$0xff]
        %v811 = vld [vmem:[%s562 + $0xd8] sm:$0xff]
        %v812 = vld [vmem:[%s562 + $0xe0] sm:$0xff]
        %v813 = vld [vmem:[%s562 + $0xe8] sm:$0xff]
        %v814 = vld [vmem:[%s562 + $0xf0] sm:$0xff]
        %v815 = vld [vmem:[%s562 + $0xf8] sm:$0xff]
        %v816 = vld [vmem:[%s562 + $0x100] sm:$0xff]
        %v817 = vld [vmem:[%s562 + $0x108] sm:$0xff]
        %v818 = vld [vmem:[%s562 + $0x110] sm:$0xff]
        %v819 = vld [vmem:[%s562 + $0x118] sm:$0xff]
        %v820 = vld [vmem:[%s562 + $0x120] sm:$0xff]
        %v821 = vld [vmem:[%s562 + $0x128] sm:$0xff]
        %v822 = vld [vmem:[%s562 + $0x130] sm:$0xff]
        %v823 = vld [vmem:[%s562 + $0x138] sm:$0xff]
        %v824 = vld [vmem:[%s562 + $0x140] sm:$0xff]
        %v825 = vld [vmem:[%s562 + $0x148] sm:$0xff]
        %v826 = vld [vmem:[%s562 + $0x150] sm:$0xff]
        %v827 = vld [vmem:[%s562 + $0x158] sm:$0xff]
        %v828 = vld [vmem:[%s562 + $0x160] sm:$0xff]
        %v829 = vld [vmem:[%s562 + $0x168] sm:$0xff]
        %v830 = vld [vmem:[%s562 + $0x170] sm:$0xff]
        %v831 = vld [vmem:[%s562 + $0x178] sm:$0xff]
        %v832 = vld [vmem:[%s562 + $0x180] sm:$0xff]
        %v833 = vld [vmem:[%s562 + $0x188] sm:$0xff]
        %v834 = vld [vmem:[%s562 + $0x190] sm:$0xff]
        %v835 = vld [vmem:[%s562 + $0x198] sm:$0xff]
        %v836 = vld [vmem:[%s562 + $0x1a0] sm:$0xff]
        %v837 = vld [vmem:[%s562 + $0x1a8] sm:$0xff]
        %v838 = vld [vmem:[%s562 + $0x1b0] sm:$0xff]
        %v839 = vld [vmem:[%s562 + $0x1b8] sm:$0xff]
        %v840 = vld [vmem:[%s562 + $0x1c0] sm:$0xff]
        %v841 = vld [vmem:[%s562 + $0x1c8] sm:$0xff]
        %v842 = vld [vmem:[%s562 + $0x1d0] sm:$0xff]
        %v843 = vld [vmem:[%s562 + $0x1d8] sm:$0xff]
        %v844 = vld [vmem:[%s562 + $0x1e0] sm:$0xff]
        %v845 = vld [vmem:[%s562 + $0x1e8] sm:$0xff]
        %v846 = vld [vmem:[%s562 + $0x1f0] sm:$0xff]
        %v847 = vld [vmem:[%s562 + $0x1f8] sm:$0xff]
        %v848 = vld [vmem:[%s555] sm:$0xff]
        %v849 = vld [vmem:[%s555 + $0x8] sm:$0xff]
        %v850 = vld [vmem:[%s555 + $0x10] sm:$0xff]
        %v851 = vld [vmem:[%s555 + $0x18] sm:$0xff]
        %v852 = vld [vmem:[%s555 + $0x20] sm:$0xff]
        %v853 = vld [vmem:[%s555 + $0x28] sm:$0xff]
        %v854 = vld [vmem:[%s555 + $0x30] sm:$0xff]
        %v855 = vld [vmem:[%s555 + $0x38] sm:$0xff]
        %v856 = vld [vmem:[%s555 + $0x40] sm:$0xff]
        %v857 = vld [vmem:[%s555 + $0x48] sm:$0xff]
        %v858 = vld [vmem:[%s555 + $0x50] sm:$0xff]
        %v859 = vld [vmem:[%s555 + $0x58] sm:$0xff]
        %v860 = vld [vmem:[%s555 + $0x60] sm:$0xff]
        %v861 = vld [vmem:[%s555 + $0x68] sm:$0xff]
        %v862 = vld [vmem:[%s555 + $0x70] sm:$0xff]
        %v863 = vld [vmem:[%s555 + $0x78] sm:$0xff]
        %v864 = vld [vmem:[%s555 + $0x80] sm:$0xff]
        %v865 = vld [vmem:[%s555 + $0x88] sm:$0xff]
        %v866 = vld [vmem:[%s555 + $0x90] sm:$0xff]
        %v867 = vld [vmem:[%s555 + $0x98] sm:$0xff]
        %v868 = vld [vmem:[%s555 + $0xa0] sm:$0xff]
        %v869 = vld [vmem:[%s555 + $0xa8] sm:$0xff]
        %v870 = vld [vmem:[%s555 + $0xb0] sm:$0xff]
        %v871 = vld [vmem:[%s555 + $0xb8] sm:$0xff]
        %v872 = vld [vmem:[%s555 + $0xc0] sm:$0xff]
        %v873 = vld [vmem:[%s555 + $0xc8] sm:$0xff]
        %v874 = vld [vmem:[%s555 + $0xd0] sm:$0xff]
        %v875 = vld [vmem:[%s555 + $0xd8] sm:$0xff]
        %v876 = vld [vmem:[%s555 + $0xe0] sm:$0xff]
        %v877 = vld [vmem:[%s555 + $0xe8] sm:$0xff]
        %v878 = vld [vmem:[%s555 + $0xf0] sm:$0xff]
        %v879 = vld [vmem:[%s555 + $0xf8] sm:$0xff]
        %v880 = vld [vmem:[%s555 + $0x100] sm:$0xff]
        %v881 = vld [vmem:[%s555 + $0x108] sm:$0xff]
        %v882 = vld [vmem:[%s555 + $0x110] sm:$0xff]
        %v883 = vld [vmem:[%s555 + $0x118] sm:$0xff]
        %v884 = vld [vmem:[%s555 + $0x120] sm:$0xff]
        %v885 = vld [vmem:[%s555 + $0x128] sm:$0xff]
        %v886 = vld [vmem:[%s555 + $0x130] sm:$0xff]
        %v887 = vld [vmem:[%s555 + $0x138] sm:$0xff]
        %v888 = vld [vmem:[%s555 + $0x140] sm:$0xff]
        %v889 = vld [vmem:[%s555 + $0x148] sm:$0xff]
        %v890 = vld [vmem:[%s555 + $0x150] sm:$0xff]
        %v891 = vld [vmem:[%s555 + $0x158] sm:$0xff]
        %v892 = vld [vmem:[%s555 + $0x160] sm:$0xff]
        %v893 = vld [vmem:[%s555 + $0x168] sm:$0xff]
        %v894 = vld [vmem:[%s555 + $0x170] sm:$0xff]
        %v895 = vld [vmem:[%s555 + $0x178] sm:$0xff]
        %v896 = vld [vmem:[%s555 + $0x180] sm:$0xff]
        %v897 = vld [vmem:[%s555 + $0x188] sm:$0xff]
        %v898 = vld [vmem:[%s555 + $0x190] sm:$0xff]
        %v899 = vld [vmem:[%s555 + $0x198] sm:$0xff]
        %v900 = vld [vmem:[%s555 + $0x1a0] sm:$0xff]
        %v901 = vld [vmem:[%s555 + $0x1a8] sm:$0xff]
        %v902 = vld [vmem:[%s555 + $0x1b0] sm:$0xff]
        %v903 = vld [vmem:[%s555 + $0x1b8] sm:$0xff]
        %v904 = vld [vmem:[%s555 + $0x1c0] sm:$0xff]
        %v905 = vld [vmem:[%s555 + $0x1c8] sm:$0xff]
        %v906 = vld [vmem:[%s555 + $0x1d0] sm:$0xff]
        %v907 = vld [vmem:[%s555 + $0x1d8] sm:$0xff]
        %v908 = vld [vmem:[%s555 + $0x1e0] sm:$0xff]
        %v909 = vld [vmem:[%s555 + $0x1e8] sm:$0xff]
        %v910 = vld [vmem:[%s555 + $0x1f0] sm:$0xff]
        %v911 = vld [vmem:[%s555 + $0x1f8] sm:$0xff]
        %v912 = vld [vmem:[%s555 + $0x200] sm:$0xff]
        %v913 = vld [vmem:[%s555 + $0x208] sm:$0xff]
        %v914 = vld [vmem:[%s555 + $0x210] sm:$0xff]
        %v915 = vld [vmem:[%s555 + $0x218] sm:$0xff]
        %v916 = vld [vmem:[%s555 + $0x220] sm:$0xff]
        %v917 = vld [vmem:[%s555 + $0x228] sm:$0xff]
        %v918 = vld [vmem:[%s555 + $0x230] sm:$0xff]
        %v919 = vld [vmem:[%s555 + $0x238] sm:$0xff]
        %v920 = vld [vmem:[%s555 + $0x240] sm:$0xff]
        %v921 = vld [vmem:[%s555 + $0x248] sm:$0xff]
        %v922 = vld [vmem:[%s555 + $0x250] sm:$0xff]
        %v923 = vld [vmem:[%s555 + $0x258] sm:$0xff]
        %v924 = vld [vmem:[%s555 + $0x260] sm:$0xff]
        %v925 = vld [vmem:[%s555 + $0x268] sm:$0xff]
        %v926 = vld [vmem:[%s555 + $0x270] sm:$0xff]
        %v927 = vld [vmem:[%s555 + $0x278] sm:$0xff]
        %v928 = vld [vmem:[%s555 + $0x280] sm:$0xff]
        %v929 = vld [vmem:[%s555 + $0x288] sm:$0xff]
        %v930 = vld [vmem:[%s555 + $0x290] sm:$0xff]
        %v931 = vld [vmem:[%s555 + $0x298] sm:$0xff]
        %v932 = vld [vmem:[%s555 + $0x2a0] sm:$0xff]
        %v933 = vld [vmem:[%s555 + $0x2a8] sm:$0xff]
        %v934 = vld [vmem:[%s555 + $0x2b0] sm:$0xff]
        %v935 = vld [vmem:[%s555 + $0x2b8] sm:$0xff]
        %v936 = vld [vmem:[%s555 + $0x2c0] sm:$0xff]
        %v937 = vld [vmem:[%s555 + $0x2c8] sm:$0xff]
        %v938 = vld [vmem:[%s555 + $0x2d0] sm:$0xff]
        %v939 = vld [vmem:[%s555 + $0x2d8] sm:$0xff]
        %v940 = vld [vmem:[%s555 + $0x2e0] sm:$0xff]
        %v941 = vld [vmem:[%s555 + $0x2e8] sm:$0xff]
        %v942 = vld [vmem:[%s555 + $0x2f0] sm:$0xff]
        %v943 = vld [vmem:[%s555 + $0x2f8] sm:$0xff]
        %944 = vmatpush.xpose.msra.mxu0 %v878
        %945 = vmatpush.xpose.msra.mxu0 %v876
        %946 = vmatpush.xpose.msra.mxu0 %v874
        %947 = vmatpush.xpose.msra.mxu0 %v872
        %948 = vmatpush.xpose.msra.mxu0 %v870
        %949 = vmatpush.xpose.msra.mxu0 %v868
        %950 = vmatpush.xpose.msra.mxu0 %v866
        %951 = vmatpush.xpose.msra.mxu0 %v864
        %952 = vmatpush.xpose.msra.mxu0 %v862
        %953 = vmatpush.xpose.msra.mxu0 %v860
        %954 = vmatpush.xpose.msra.mxu0 %v858
        %955 = vmatpush.xpose.msra.mxu0 %v856
        %956 = vmatpush.xpose.msra.mxu0 %v854
        %957 = vmatpush.xpose.msra.mxu0 %v852
        %958 = vmatpush.xpose.msra.mxu0 %v850
        %959 = vmatpush.xpose.msra.mxu0 %v848
        %960 = vmatmul.f32.gmra.mxu0 %v784
        %v961 = vpop.f32.mrf.mxu0
        %v962 = vadd.f32 0.0, %v961
        %963 = vmatmul.f32.gmra.mxu0 %v786
        %v964 = vpop.f32.mrf.mxu0
        %v965 = vadd.f32 0.0, %v964
        %966 = vmatmul.f32.gmra.mxu0 %v788
        %v967 = vpop.f32.mrf.mxu0
        %v968 = vadd.f32 0.0, %v967
        %969 = vmatmul.f32.gmra.mxu0 %v790
        %v970 = vpop.f32.mrf.mxu0
        %v971 = vadd.f32 0.0, %v970
        %972 = vmatmul.f32.gmra.mxu0 %v792
        %v973 = vpop.f32.mrf.mxu0
        %v974 = vadd.f32 0.0, %v973
        %975 = vmatmul.f32.gmra.mxu0 %v794
        %v976 = vpop.f32.mrf.mxu0
        %v977 = vadd.f32 0.0, %v976
        %978 = vmatmul.f32.gmra.mxu0 %v796
        %v979 = vpop.f32.mrf.mxu0
        %v980 = vadd.f32 0.0, %v979
        %981 = vmatmul.f32.gmra.mxu0 %v798
        %v982 = vpop.f32.mrf.mxu0
        %v983 = vadd.f32 0.0, %v982
        %984 = vmatmul.f32.gmra.mxu0 %v800
        %v985 = vpop.f32.mrf.mxu0
        %v986 = vadd.f32 0.0, %v985
        %987 = vmatmul.f32.gmra.mxu0 %v802
        %v988 = vpop.f32.mrf.mxu0
        %v989 = vadd.f32 0.0, %v988
        %990 = vmatmul.f32.gmra.mxu0 %v804
        %v991 = vpop.f32.mrf.mxu0
        %v992 = vadd.f32 0.0, %v991
        %993 = vmatmul.f32.gmra.mxu0 %v806
        %v994 = vpop.f32.mrf.mxu0
        %v995 = vadd.f32 0.0, %v994
        %996 = vmatmul.f32.gmra.mxu0 %v808
        %v997 = vpop.f32.mrf.mxu0
        %v998 = vadd.f32 0.0, %v997
        %999 = vmatmul.f32.gmra.mxu0 %v810
        %v1000 = vpop.f32.mrf.mxu0
        %v1001 = vadd.f32 0.0, %v1000
        %1002 = vmatmul.f32.gmra.mxu0 %v812
        %v1003 = vpop.f32.mrf.mxu0
        %v1004 = vadd.f32 0.0, %v1003
        %1005 = vmatmul.f32.gmra.mxu0 %v814
        %v1006 = vpop.f32.mrf.mxu0
        %v1007 = vadd.f32 0.0, %v1006
        %1008 = vmatmul.f32.gmra.mxu0 %v816
        %v1009 = vpop.f32.mrf.mxu0
        %v1010 = vadd.f32 0.0, %v1009
        %1011 = vmatmul.f32.gmra.mxu0 %v818
        %v1012 = vpop.f32.mrf.mxu0
        %v1013 = vadd.f32 0.0, %v1012
        %1014 = vmatmul.f32.gmra.mxu0 %v820
        %v1015 = vpop.f32.mrf.mxu0
        %v1016 = vadd.f32 0.0, %v1015
        %1017 = vmatmul.f32.gmra.mxu0 %v822
        %v1018 = vpop.f32.mrf.mxu0
        %v1019 = vadd.f32 0.0, %v1018
        %1020 = vmatmul.f32.gmra.mxu0 %v824
        %v1021 = vpop.f32.mrf.mxu0
        %v1022 = vadd.f32 0.0, %v1021
        %1023 = vmatmul.f32.gmra.mxu0 %v826
        %v1024 = vpop.f32.mrf.mxu0
        %v1025 = vadd.f32 0.0, %v1024
        %1026 = vmatmul.f32.gmra.mxu0 %v828
        %v1027 = vpop.f32.mrf.mxu0
        %v1028 = vadd.f32 0.0, %v1027
        %1029 = vmatmul.f32.gmra.mxu0 %v830
        %v1030 = vpop.f32.mrf.mxu0
        %v1031 = vadd.f32 0.0, %v1030
        %1032 = vmatmul.f32.gmra.mxu0 %v832
        %v1033 = vpop.f32.mrf.mxu0
        %v1034 = vadd.f32 0.0, %v1033
        %1035 = vmatmul.f32.gmra.mxu0 %v834
        %v1036 = vpop.f32.mrf.mxu0
        %v1037 = vadd.f32 0.0, %v1036
        %1038 = vmatmul.f32.gmra.mxu0 %v836
        %v1039 = vpop.f32.mrf.mxu0
        %v1040 = vadd.f32 0.0, %v1039
        %1041 = vmatmul.f32.gmra.mxu0 %v838
        %v1042 = vpop.f32.mrf.mxu0
        %v1043 = vadd.f32 0.0, %v1042
        %1044 = vmatmul.f32.gmra.mxu0 %v840
        %v1045 = vpop.f32.mrf.mxu0
        %v1046 = vadd.f32 0.0, %v1045
        %1047 = vmatmul.f32.gmra.mxu0 %v842
        %v1048 = vpop.f32.mrf.mxu0
        %v1049 = vadd.f32 0.0, %v1048
        %1050 = vmatmul.f32.gmra.mxu0 %v844
        %v1051 = vpop.f32.mrf.mxu0
        %v1052 = vadd.f32 0.0, %v1051
        %1053 = vmatmul.f32.gmra.mxu0 %v846
        %v1054 = vpop.f32.mrf.mxu0
        %v1055 = vadd.f32 0.0, %v1054
        %1056 = vdwg.mxu0
        %1057 = vmatpush.xpose.msra.mxu0 %v879
        %1058 = vmatpush.xpose.msra.mxu0 %v877
        %1059 = vmatpush.xpose.msra.mxu0 %v875
        %1060 = vmatpush.xpose.msra.mxu0 %v873
        %1061 = vmatpush.xpose.msra.mxu0 %v871
        %1062 = vmatpush.xpose.msra.mxu0 %v869
        %1063 = vmatpush.xpose.msra.mxu0 %v867
        %1064 = vmatpush.xpose.msra.mxu0 %v865
        %1065 = vmatpush.xpose.msra.mxu0 %v863
        %1066 = vmatpush.xpose.msra.mxu0 %v861
        %1067 = vmatpush.xpose.msra.mxu0 %v859
        %1068 = vmatpush.xpose.msra.mxu0 %v857
        %1069 = vmatpush.xpose.msra.mxu0 %v855
        %1070 = vmatpush.xpose.msra.mxu0 %v853
        %1071 = vmatpush.xpose.msra.mxu0 %v851
        %1072 = vmatpush.xpose.msra.mxu0 %v849
        %1073 = vmatmul.f32.gmra.mxu0 %v785
        %v1074 = vpop.f32.mrf.mxu0
        %v1075 = vadd.f32 %v962, %v1074
        %1076 = vmatmul.f32.gmra.mxu0 %v787
        %v1077 = vpop.f32.mrf.mxu0
        %v1078 = vadd.f32 %v965, %v1077
        %1079 = vmatmul.f32.gmra.mxu0 %v789
        %v1080 = vpop.f32.mrf.mxu0
        %v1081 = vadd.f32 %v968, %v1080
        %1082 = vmatmul.f32.gmra.mxu0 %v791
        %v1083 = vpop.f32.mrf.mxu0
        %v1084 = vadd.f32 %v971, %v1083
        %1085 = vmatmul.f32.gmra.mxu0 %v793
        %v1086 = vpop.f32.mrf.mxu0
        %v1087 = vadd.f32 %v974, %v1086
        %1088 = vmatmul.f32.gmra.mxu0 %v795
        %v1089 = vpop.f32.mrf.mxu0
        %v1090 = vadd.f32 %v977, %v1089
        %1091 = vmatmul.f32.gmra.mxu0 %v797
        %v1092 = vpop.f32.mrf.mxu0
        %v1093 = vadd.f32 %v980, %v1092
        %1094 = vmatmul.f32.gmra.mxu0 %v799
        %v1095 = vpop.f32.mrf.mxu0
        %v1096 = vadd.f32 %v983, %v1095
        %1097 = vmatmul.f32.gmra.mxu0 %v801
        %v1098 = vpop.f32.mrf.mxu0
        %v1099 = vadd.f32 %v986, %v1098
        %1100 = vmatmul.f32.gmra.mxu0 %v803
        %v1101 = vpop.f32.mrf.mxu0
        %v1102 = vadd.f32 %v989, %v1101
        %1103 = vmatmul.f32.gmra.mxu0 %v805
        %v1104 = vpop.f32.mrf.mxu0
        %v1105 = vadd.f32 %v992, %v1104
        %1106 = vmatmul.f32.gmra.mxu0 %v807
        %v1107 = vpop.f32.mrf.mxu0
        %v1108 = vadd.f32 %v995, %v1107
        %1109 = vmatmul.f32.gmra.mxu0 %v809
        %v1110 = vpop.f32.mrf.mxu0
        %v1111 = vadd.f32 %v998, %v1110
        %1112 = vmatmul.f32.gmra.mxu0 %v811
        %v1113 = vpop.f32.mrf.mxu0
        %v1114 = vadd.f32 %v1001, %v1113
        %1115 = vmatmul.f32.gmra.mxu0 %v813
        %v1116 = vpop.f32.mrf.mxu0
        %v1117 = vadd.f32 %v1004, %v1116
        %1118 = vmatmul.f32.gmra.mxu0 %v815
        %v1119 = vpop.f32.mrf.mxu0
        %v1120 = vadd.f32 %v1007, %v1119
        %1121 = vmatmul.f32.gmra.mxu0 %v817
        %v1122 = vpop.f32.mrf.mxu0
        %v1123 = vadd.f32 %v1010, %v1122
        %1124 = vmatmul.f32.gmra.mxu0 %v819
        %v1125 = vpop.f32.mrf.mxu0
        %v1126 = vadd.f32 %v1013, %v1125
        %1127 = vmatmul.f32.gmra.mxu0 %v821
        %v1128 = vpop.f32.mrf.mxu0
        %v1129 = vadd.f32 %v1016, %v1128
        %1130 = vmatmul.f32.gmra.mxu0 %v823
        %v1131 = vpop.f32.mrf.mxu0
        %v1132 = vadd.f32 %v1019, %v1131
        %1133 = vmatmul.f32.gmra.mxu0 %v825
        %v1134 = vpop.f32.mrf.mxu0
        %v1135 = vadd.f32 %v1022, %v1134
        %1136 = vmatmul.f32.gmra.mxu0 %v827
        %v1137 = vpop.f32.mrf.mxu0
        %v1138 = vadd.f32 %v1025, %v1137
        %1139 = vmatmul.f32.gmra.mxu0 %v829
        %v1140 = vpop.f32.mrf.mxu0
        %v1141 = vadd.f32 %v1028, %v1140
        %1142 = vmatmul.f32.gmra.mxu0 %v831
        %v1143 = vpop.f32.mrf.mxu0
        %v1144 = vadd.f32 %v1031, %v1143
        %1145 = vmatmul.f32.gmra.mxu0 %v833
        %v1146 = vpop.f32.mrf.mxu0
        %v1147 = vadd.f32 %v1034, %v1146
        %1148 = vmatmul.f32.gmra.mxu0 %v835
        %v1149 = vpop.f32.mrf.mxu0
        %v1150 = vadd.f32 %v1037, %v1149
        %1151 = vmatmul.f32.gmra.mxu0 %v837
        %v1152 = vpop.f32.mrf.mxu0
        %v1153 = vadd.f32 %v1040, %v1152
        %1154 = vmatmul.f32.gmra.mxu0 %v839
        %v1155 = vpop.f32.mrf.mxu0
        %v1156 = vadd.f32 %v1043, %v1155
        %1157 = vmatmul.f32.gmra.mxu0 %v841
        %v1158 = vpop.f32.mrf.mxu0
        %v1159 = vadd.f32 %v1046, %v1158
        %1160 = vmatmul.f32.gmra.mxu0 %v843
        %v1161 = vpop.f32.mrf.mxu0
        %v1162 = vadd.f32 %v1049, %v1161
        %1163 = vmatmul.f32.gmra.mxu0 %v845
        %v1164 = vpop.f32.mrf.mxu0
        %v1165 = vadd.f32 %v1052, %v1164
        %1166 = vmatmul.f32.gmra.mxu0 %v847
        %v1167 = vpop.f32.mrf.mxu0
        %v1168 = vadd.f32 %v1055, %v1167
        %1169 = vdwg.mxu0
        %1170 = vmatpush.xpose.msra.mxu0 %v910
        %1171 = vmatpush.xpose.msra.mxu0 %v908
        %1172 = vmatpush.xpose.msra.mxu0 %v906
        %1173 = vmatpush.xpose.msra.mxu0 %v904
        %1174 = vmatpush.xpose.msra.mxu0 %v902
        %1175 = vmatpush.xpose.msra.mxu0 %v900
        %1176 = vmatpush.xpose.msra.mxu0 %v898
        %1177 = vmatpush.xpose.msra.mxu0 %v896
        %1178 = vmatpush.xpose.msra.mxu0 %v894
        %1179 = vmatpush.xpose.msra.mxu0 %v892
        %1180 = vmatpush.xpose.msra.mxu0 %v890
        %1181 = vmatpush.xpose.msra.mxu0 %v888
        %1182 = vmatpush.xpose.msra.mxu0 %v886
        %1183 = vmatpush.xpose.msra.mxu0 %v884
        %1184 = vmatpush.xpose.msra.mxu0 %v882
        %1185 = vmatpush.xpose.msra.mxu0 %v880
        %1186 = vmatmul.f32.gmra.mxu0 %v784
        %v1187 = vpop.f32.mrf.mxu0
        %v1188 = vadd.f32 0.0, %v1187
        %1189 = vmatmul.f32.gmra.mxu0 %v786
        %v1190 = vpop.f32.mrf.mxu0
        %v1191 = vadd.f32 0.0, %v1190
        %1192 = vmatmul.f32.gmra.mxu0 %v788
        %v1193 = vpop.f32.mrf.mxu0
        %v1194 = vadd.f32 0.0, %v1193
        %1195 = vmatmul.f32.gmra.mxu0 %v790
        %v1196 = vpop.f32.mrf.mxu0
        %v1197 = vadd.f32 0.0, %v1196
        %1198 = vmatmul.f32.gmra.mxu0 %v792
        %v1199 = vpop.f32.mrf.mxu0
        %v1200 = vadd.f32 0.0, %v1199
        %1201 = vmatmul.f32.gmra.mxu0 %v794
        %v1202 = vpop.f32.mrf.mxu0
        %v1203 = vadd.f32 0.0, %v1202
        %1204 = vmatmul.f32.gmra.mxu0 %v796
        %v1205 = vpop.f32.mrf.mxu0
        %v1206 = vadd.f32 0.0, %v1205
        %1207 = vmatmul.f32.gmra.mxu0 %v798
        %v1208 = vpop.f32.mrf.mxu0
        %v1209 = vadd.f32 0.0, %v1208
        %1210 = vmatmul.f32.gmra.mxu0 %v800
        %v1211 = vpop.f32.mrf.mxu0
        %v1212 = vadd.f32 0.0, %v1211
        %1213 = vmatmul.f32.gmra.mxu0 %v802
        %v1214 = vpop.f32.mrf.mxu0
        %v1215 = vadd.f32 0.0, %v1214
        %1216 = vmatmul.f32.gmra.mxu0 %v804
        %v1217 = vpop.f32.mrf.mxu0
        %v1218 = vadd.f32 0.0, %v1217
        %1219 = vmatmul.f32.gmra.mxu0 %v806
        %v1220 = vpop.f32.mrf.mxu0
        %v1221 = vadd.f32 0.0, %v1220
        %1222 = vmatmul.f32.gmra.mxu0 %v808
        %v1223 = vpop.f32.mrf.mxu0
        %v1224 = vadd.f32 0.0, %v1223
        %1225 = vmatmul.f32.gmra.mxu0 %v810
        %v1226 = vpop.f32.mrf.mxu0
        %v1227 = vadd.f32 0.0, %v1226
        %1228 = vmatmul.f32.gmra.mxu0 %v812
        %v1229 = vpop.f32.mrf.mxu0
        %v1230 = vadd.f32 0.0, %v1229
        %1231 = vmatmul.f32.gmra.mxu0 %v814
        %v1232 = vpop.f32.mrf.mxu0
        %v1233 = vadd.f32 0.0, %v1232
        %1234 = vmatmul.f32.gmra.mxu0 %v816
        %v1235 = vpop.f32.mrf.mxu0
        %v1236 = vadd.f32 0.0, %v1235
        %1237 = vmatmul.f32.gmra.mxu0 %v818
        %v1238 = vpop.f32.mrf.mxu0
        %v1239 = vadd.f32 0.0, %v1238
        %1240 = vmatmul.f32.gmra.mxu0 %v820
        %v1241 = vpop.f32.mrf.mxu0
        %v1242 = vadd.f32 0.0, %v1241
        %1243 = vmatmul.f32.gmra.mxu0 %v822
        %v1244 = vpop.f32.mrf.mxu0
        %v1245 = vadd.f32 0.0, %v1244
        %1246 = vmatmul.f32.gmra.mxu0 %v824
        %v1247 = vpop.f32.mrf.mxu0
        %v1248 = vadd.f32 0.0, %v1247
        %1249 = vmatmul.f32.gmra.mxu0 %v826
        %v1250 = vpop.f32.mrf.mxu0
        %v1251 = vadd.f32 0.0, %v1250
        %1252 = vmatmul.f32.gmra.mxu0 %v828
        %v1253 = vpop.f32.mrf.mxu0
        %v1254 = vadd.f32 0.0, %v1253
        %1255 = vmatmul.f32.gmra.mxu0 %v830
        %v1256 = vpop.f32.mrf.mxu0
        %v1257 = vadd.f32 0.0, %v1256
        %1258 = vmatmul.f32.gmra.mxu0 %v832
        %v1259 = vpop.f32.mrf.mxu0
        %v1260 = vadd.f32 0.0, %v1259
        %1261 = vmatmul.f32.gmra.mxu0 %v834
        %v1262 = vpop.f32.mrf.mxu0
        %v1263 = vadd.f32 0.0, %v1262
        %1264 = vmatmul.f32.gmra.mxu0 %v836
        %v1265 = vpop.f32.mrf.mxu0
        %v1266 = vadd.f32 0.0, %v1265
        %1267 = vmatmul.f32.gmra.mxu0 %v838
        %v1268 = vpop.f32.mrf.mxu0
        %v1269 = vadd.f32 0.0, %v1268
        %1270 = vmatmul.f32.gmra.mxu0 %v840
        %v1271 = vpop.f32.mrf.mxu0
        %v1272 = vadd.f32 0.0, %v1271
        %1273 = vmatmul.f32.gmra.mxu0 %v842
        %v1274 = vpop.f32.mrf.mxu0
        %v1275 = vadd.f32 0.0, %v1274
        %1276 = vmatmul.f32.gmra.mxu0 %v844
        %v1277 = vpop.f32.mrf.mxu0
        %v1278 = vadd.f32 0.0, %v1277
        %1279 = vmatmul.f32.gmra.mxu0 %v846
        %v1280 = vpop.f32.mrf.mxu0
        %v1281 = vadd.f32 0.0, %v1280
        %1282 = vdwg.mxu0
        %1283 = vmatpush.xpose.msra.mxu0 %v911
        %1284 = vmatpush.xpose.msra.mxu0 %v909
        %1285 = vmatpush.xpose.msra.mxu0 %v907
        %1286 = vmatpush.xpose.msra.mxu0 %v905
        %1287 = vmatpush.xpose.msra.mxu0 %v903
        %1288 = vmatpush.xpose.msra.mxu0 %v901
        %1289 = vmatpush.xpose.msra.mxu0 %v899
        %1290 = vmatpush.xpose.msra.mxu0 %v897
        %1291 = vmatpush.xpose.msra.mxu0 %v895
        %1292 = vmatpush.xpose.msra.mxu0 %v893
        %1293 = vmatpush.xpose.msra.mxu0 %v891
        %1294 = vmatpush.xpose.msra.mxu0 %v889
        %1295 = vmatpush.xpose.msra.mxu0 %v887
        %1296 = vmatpush.xpose.msra.mxu0 %v885
        %1297 = vmatpush.xpose.msra.mxu0 %v883
        %1298 = vmatpush.xpose.msra.mxu0 %v881
        %1299 = vmatmul.f32.gmra.mxu0 %v785
        %v1300 = vpop.f32.mrf.mxu0
        %v1301 = vadd.f32 %v1188, %v1300
        %1302 = vmatmul.f32.gmra.mxu0 %v787
        %v1303 = vpop.f32.mrf.mxu0
        %v1304 = vadd.f32 %v1191, %v1303
        %1305 = vmatmul.f32.gmra.mxu0 %v789
        %v1306 = vpop.f32.mrf.mxu0
        %v1307 = vadd.f32 %v1194, %v1306
        %1308 = vmatmul.f32.gmra.mxu0 %v791
        %v1309 = vpop.f32.mrf.mxu0
        %v1310 = vadd.f32 %v1197, %v1309
        %1311 = vmatmul.f32.gmra.mxu0 %v793
        %v1312 = vpop.f32.mrf.mxu0
        %v1313 = vadd.f32 %v1200, %v1312
        %1314 = vmatmul.f32.gmra.mxu0 %v795
        %v1315 = vpop.f32.mrf.mxu0
        %v1316 = vadd.f32 %v1203, %v1315
        %1317 = vmatmul.f32.gmra.mxu0 %v797
        %v1318 = vpop.f32.mrf.mxu0
        %v1319 = vadd.f32 %v1206, %v1318
        %1320 = vmatmul.f32.gmra.mxu0 %v799
        %v1321 = vpop.f32.mrf.mxu0
        %v1322 = vadd.f32 %v1209, %v1321
        %1323 = vmatmul.f32.gmra.mxu0 %v801
        %v1324 = vpop.f32.mrf.mxu0
        %v1325 = vadd.f32 %v1212, %v1324
        %1326 = vmatmul.f32.gmra.mxu0 %v803
        %v1327 = vpop.f32.mrf.mxu0
        %v1328 = vadd.f32 %v1215, %v1327
        %1329 = vmatmul.f32.gmra.mxu0 %v805
        %v1330 = vpop.f32.mrf.mxu0
        %v1331 = vadd.f32 %v1218, %v1330
        %1332 = vmatmul.f32.gmra.mxu0 %v807
        %v1333 = vpop.f32.mrf.mxu0
        %v1334 = vadd.f32 %v1221, %v1333
        %1335 = vmatmul.f32.gmra.mxu0 %v809
        %v1336 = vpop.f32.mrf.mxu0
        %v1337 = vadd.f32 %v1224, %v1336
        %1338 = vmatmul.f32.gmra.mxu0 %v811
        %v1339 = vpop.f32.mrf.mxu0
        %v1340 = vadd.f32 %v1227, %v1339
        %1341 = vmatmul.f32.gmra.mxu0 %v813
        %v1342 = vpop.f32.mrf.mxu0
        %v1343 = vadd.f32 %v1230, %v1342
        %1344 = vmatmul.f32.gmra.mxu0 %v815
        %v1345 = vpop.f32.mrf.mxu0
        %v1346 = vadd.f32 %v1233, %v1345
        %1347 = vmatmul.f32.gmra.mxu0 %v817
        %v1348 = vpop.f32.mrf.mxu0
        %v1349 = vadd.f32 %v1236, %v1348
        %1350 = vmatmul.f32.gmra.mxu0 %v819
        %v1351 = vpop.f32.mrf.mxu0
        %v1352 = vadd.f32 %v1239, %v1351
        %1353 = vmatmul.f32.gmra.mxu0 %v821
        %v1354 = vpop.f32.mrf.mxu0
        %v1355 = vadd.f32 %v1242, %v1354
        %1356 = vmatmul.f32.gmra.mxu0 %v823
        %v1357 = vpop.f32.mrf.mxu0
        %v1358 = vadd.f32 %v1245, %v1357
        %1359 = vmatmul.f32.gmra.mxu0 %v825
        %v1360 = vpop.f32.mrf.mxu0
        %v1361 = vadd.f32 %v1248, %v1360
        %1362 = vmatmul.f32.gmra.mxu0 %v827
        %v1363 = vpop.f32.mrf.mxu0
        %v1364 = vadd.f32 %v1251, %v1363
        %1365 = vmatmul.f32.gmra.mxu0 %v829
        %v1366 = vpop.f32.mrf.mxu0
        %v1367 = vadd.f32 %v1254, %v1366
        %1368 = vmatmul.f32.gmra.mxu0 %v831
        %v1369 = vpop.f32.mrf.mxu0
        %v1370 = vadd.f32 %v1257, %v1369
        %1371 = vmatmul.f32.gmra.mxu0 %v833
        %v1372 = vpop.f32.mrf.mxu0
        %v1373 = vadd.f32 %v1260, %v1372
        %1374 = vmatmul.f32.gmra.mxu0 %v835
        %v1375 = vpop.f32.mrf.mxu0
        %v1376 = vadd.f32 %v1263, %v1375
        %1377 = vmatmul.f32.gmra.mxu0 %v837
        %v1378 = vpop.f32.mrf.mxu0
        %v1379 = vadd.f32 %v1266, %v1378
        %1380 = vmatmul.f32.gmra.mxu0 %v839
        %v1381 = vpop.f32.mrf.mxu0
        %v1382 = vadd.f32 %v1269, %v1381
        %1383 = vmatmul.f32.gmra.mxu0 %v841
        %v1384 = vpop.f32.mrf.mxu0
        %v1385 = vadd.f32 %v1272, %v1384
        %1386 = vmatmul.f32.gmra.mxu0 %v843
        %v1387 = vpop.f32.mrf.mxu0
        %v1388 = vadd.f32 %v1275, %v1387
        %1389 = vmatmul.f32.gmra.mxu0 %v845
        %v1390 = vpop.f32.mrf.mxu0
        %v1391 = vadd.f32 %v1278, %v1390
        %1392 = vmatmul.f32.gmra.mxu0 %v847
        %v1393 = vpop.f32.mrf.mxu0
        %v1394 = vadd.f32 %v1281, %v1393
        %1395 = vdwg.mxu0
        %1396 = vmatpush.xpose.msra.mxu0 %v942
        %1397 = vmatpush.xpose.msra.mxu0 %v940
        %1398 = vmatpush.xpose.msra.mxu0 %v938
        %1399 = vmatpush.xpose.msra.mxu0 %v936
        %1400 = vmatpush.xpose.msra.mxu0 %v934
        %1401 = vmatpush.xpose.msra.mxu0 %v932
        %1402 = vmatpush.xpose.msra.mxu0 %v930
        %1403 = vmatpush.xpose.msra.mxu0 %v928
        %1404 = vmatpush.xpose.msra.mxu0 %v926
        %1405 = vmatpush.xpose.msra.mxu0 %v924
        %1406 = vmatpush.xpose.msra.mxu0 %v922
        %1407 = vmatpush.xpose.msra.mxu0 %v920
        %1408 = vmatpush.xpose.msra.mxu0 %v918
        %1409 = vmatpush.xpose.msra.mxu0 %v916
        %1410 = vmatpush.xpose.msra.mxu0 %v914
        %1411 = vmatpush.xpose.msra.mxu0 %v912
        %1412 = vmatmul.f32.gmra.mxu0 %v784
        %v1413 = vpop.f32.mrf.mxu0
        %v1414 = vadd.f32 0.0, %v1413
        %1415 = vmatmul.f32.gmra.mxu0 %v786
        %v1416 = vpop.f32.mrf.mxu0
        %v1417 = vadd.f32 0.0, %v1416
        %1418 = vmatmul.f32.gmra.mxu0 %v788
        %v1419 = vpop.f32.mrf.mxu0
        %v1420 = vadd.f32 0.0, %v1419
        %1421 = vmatmul.f32.gmra.mxu0 %v790
        %v1422 = vpop.f32.mrf.mxu0
        %v1423 = vadd.f32 0.0, %v1422
        %1424 = vmatmul.f32.gmra.mxu0 %v792
        %v1425 = vpop.f32.mrf.mxu0
        %v1426 = vadd.f32 0.0, %v1425
        %1427 = vmatmul.f32.gmra.mxu0 %v794
        %v1428 = vpop.f32.mrf.mxu0
        %v1429 = vadd.f32 0.0, %v1428
        %1430 = vmatmul.f32.gmra.mxu0 %v796
        %v1431 = vpop.f32.mrf.mxu0
        %v1432 = vadd.f32 0.0, %v1431
        %1433 = vmatmul.f32.gmra.mxu0 %v798
        %v1434 = vpop.f32.mrf.mxu0
        %v1435 = vadd.f32 0.0, %v1434
        %1436 = vmatmul.f32.gmra.mxu0 %v800
        %v1437 = vpop.f32.mrf.mxu0
        %v1438 = vadd.f32 0.0, %v1437
        %1439 = vmatmul.f32.gmra.mxu0 %v802
        %v1440 = vpop.f32.mrf.mxu0
        %v1441 = vadd.f32 0.0, %v1440
        %1442 = vmatmul.f32.gmra.mxu0 %v804
        %v1443 = vpop.f32.mrf.mxu0
        %v1444 = vadd.f32 0.0, %v1443
        %1445 = vmatmul.f32.gmra.mxu0 %v806
        %v1446 = vpop.f32.mrf.mxu0
        %v1447 = vadd.f32 0.0, %v1446
        %1448 = vmatmul.f32.gmra.mxu0 %v808
        %v1449 = vpop.f32.mrf.mxu0
        %v1450 = vadd.f32 0.0, %v1449
        %1451 = vmatmul.f32.gmra.mxu0 %v810
        %v1452 = vpop.f32.mrf.mxu0
        %v1453 = vadd.f32 0.0, %v1452
        %1454 = vmatmul.f32.gmra.mxu0 %v812
        %v1455 = vpop.f32.mrf.mxu0
        %v1456 = vadd.f32 0.0, %v1455
        %1457 = vmatmul.f32.gmra.mxu0 %v814
        %v1458 = vpop.f32.mrf.mxu0
        %v1459 = vadd.f32 0.0, %v1458
        %1460 = vmatmul.f32.gmra.mxu0 %v816
        %v1461 = vpop.f32.mrf.mxu0
        %v1462 = vadd.f32 0.0, %v1461
        %1463 = vmatmul.f32.gmra.mxu0 %v818
        %v1464 = vpop.f32.mrf.mxu0
        %v1465 = vadd.f32 0.0, %v1464
        %1466 = vmatmul.f32.gmra.mxu0 %v820
        %v1467 = vpop.f32.mrf.mxu0
        %v1468 = vadd.f32 0.0, %v1467
        %1469 = vmatmul.f32.gmra.mxu0 %v822
        %v1470 = vpop.f32.mrf.mxu0
        %v1471 = vadd.f32 0.0, %v1470
        %1472 = vmatmul.f32.gmra.mxu0 %v824
        %v1473 = vpop.f32.mrf.mxu0
        %v1474 = vadd.f32 0.0, %v1473
        %1475 = vmatmul.f32.gmra.mxu0 %v826
        %v1476 = vpop.f32.mrf.mxu0
        %v1477 = vadd.f32 0.0, %v1476
        %1478 = vmatmul.f32.gmra.mxu0 %v828
        %v1479 = vpop.f32.mrf.mxu0
        %v1480 = vadd.f32 0.0, %v1479
        %1481 = vmatmul.f32.gmra.mxu0 %v830
        %v1482 = vpop.f32.mrf.mxu0
        %v1483 = vadd.f32 0.0, %v1482
        %1484 = vmatmul.f32.gmra.mxu0 %v832
        %v1485 = vpop.f32.mrf.mxu0
        %v1486 = vadd.f32 0.0, %v1485
        %1487 = vmatmul.f32.gmra.mxu0 %v834
        %v1488 = vpop.f32.mrf.mxu0
        %v1489 = vadd.f32 0.0, %v1488
        %1490 = vmatmul.f32.gmra.mxu0 %v836
        %v1491 = vpop.f32.mrf.mxu0
        %v1492 = vadd.f32 0.0, %v1491
        %1493 = vmatmul.f32.gmra.mxu0 %v838
        %v1494 = vpop.f32.mrf.mxu0
        %v1495 = vadd.f32 0.0, %v1494
        %1496 = vmatmul.f32.gmra.mxu0 %v840
        %v1497 = vpop.f32.mrf.mxu0
        %v1498 = vadd.f32 0.0, %v1497
        %1499 = vmatmul.f32.gmra.mxu0 %v842
        %v1500 = vpop.f32.mrf.mxu0
        %v1501 = vadd.f32 0.0, %v1500
        %1502 = vmatmul.f32.gmra.mxu0 %v844
        %v1503 = vpop.f32.mrf.mxu0
        %v1504 = vadd.f32 0.0, %v1503
        %1505 = vmatmul.f32.gmra.mxu0 %v846
        %v1506 = vpop.f32.mrf.mxu0
        %v1507 = vadd.f32 0.0, %v1506
        %1508 = vdwg.mxu0
        %1509 = vmatpush.xpose.msra.mxu0 %v943
        %1510 = vmatpush.xpose.msra.mxu0 %v941
        %1511 = vmatpush.xpose.msra.mxu0 %v939
        %1512 = vmatpush.xpose.msra.mxu0 %v937
        %1513 = vmatpush.xpose.msra.mxu0 %v935
        %1514 = vmatpush.xpose.msra.mxu0 %v933
        %1515 = vmatpush.xpose.msra.mxu0 %v931
        %1516 = vmatpush.xpose.msra.mxu0 %v929
        %1517 = vmatpush.xpose.msra.mxu0 %v927
        %1518 = vmatpush.xpose.msra.mxu0 %v925
        %1519 = vmatpush.xpose.msra.mxu0 %v923
        %1520 = vmatpush.xpose.msra.mxu0 %v921
        %1521 = vmatpush.xpose.msra.mxu0 %v919
        %1522 = vmatpush.xpose.msra.mxu0 %v917
        %1523 = vmatpush.xpose.msra.mxu0 %v915
        %1524 = vmatpush.xpose.msra.mxu0 %v913
        %1525 = vmatmul.f32.gmra.mxu0 %v785
        %v1526 = vpop.f32.mrf.mxu0
        %v1527 = vadd.f32 %v1414, %v1526
        %1528 = vmatmul.f32.gmra.mxu0 %v787
        %v1529 = vpop.f32.mrf.mxu0
        %v1530 = vadd.f32 %v1417, %v1529
        %1531 = vmatmul.f32.gmra.mxu0 %v789
        %v1532 = vpop.f32.mrf.mxu0
        %v1533 = vadd.f32 %v1420, %v1532
        %1534 = vmatmul.f32.gmra.mxu0 %v791
        %v1535 = vpop.f32.mrf.mxu0
        %v1536 = vadd.f32 %v1423, %v1535
        %1537 = vmatmul.f32.gmra.mxu0 %v793
        %v1538 = vpop.f32.mrf.mxu0
        %v1539 = vadd.f32 %v1426, %v1538
        %1540 = vmatmul.f32.gmra.mxu0 %v795
        %v1541 = vpop.f32.mrf.mxu0
        %v1542 = vadd.f32 %v1429, %v1541
        %1543 = vmatmul.f32.gmra.mxu0 %v797
        %v1544 = vpop.f32.mrf.mxu0
        %v1545 = vadd.f32 %v1432, %v1544
        %1546 = vmatmul.f32.gmra.mxu0 %v799
        %v1547 = vpop.f32.mrf.mxu0
        %v1548 = vadd.f32 %v1435, %v1547
        %1549 = vmatmul.f32.gmra.mxu0 %v801
        %v1550 = vpop.f32.mrf.mxu0
        %v1551 = vadd.f32 %v1438, %v1550
        %1552 = vmatmul.f32.gmra.mxu0 %v803
        %v1553 = vpop.f32.mrf.mxu0
        %v1554 = vadd.f32 %v1441, %v1553
        %1555 = vmatmul.f32.gmra.mxu0 %v805
        %v1556 = vpop.f32.mrf.mxu0
        %v1557 = vadd.f32 %v1444, %v1556
        %1558 = vmatmul.f32.gmra.mxu0 %v807
        %v1559 = vpop.f32.mrf.mxu0
        %v1560 = vadd.f32 %v1447, %v1559
        %1561 = vmatmul.f32.gmra.mxu0 %v809
        %v1562 = vpop.f32.mrf.mxu0
        %v1563 = vadd.f32 %v1450, %v1562
        %1564 = vmatmul.f32.gmra.mxu0 %v811
        %v1565 = vpop.f32.mrf.mxu0
        %v1566 = vadd.f32 %v1453, %v1565
        %1567 = vmatmul.f32.gmra.mxu0 %v813
        %v1568 = vpop.f32.mrf.mxu0
        %v1569 = vadd.f32 %v1456, %v1568
        %1570 = vmatmul.f32.gmra.mxu0 %v815
        %v1571 = vpop.f32.mrf.mxu0
        %v1572 = vadd.f32 %v1459, %v1571
        %1573 = vmatmul.f32.gmra.mxu0 %v817
        %v1574 = vpop.f32.mrf.mxu0
        %v1575 = vadd.f32 %v1462, %v1574
        %1576 = vmatmul.f32.gmra.mxu0 %v819
        %v1577 = vpop.f32.mrf.mxu0
        %v1578 = vadd.f32 %v1465, %v1577
        %1579 = vmatmul.f32.gmra.mxu0 %v821
        %v1580 = vpop.f32.mrf.mxu0
        %v1581 = vadd.f32 %v1468, %v1580
        %1582 = vmatmul.f32.gmra.mxu0 %v823
        %v1583 = vpop.f32.mrf.mxu0
        %v1584 = vadd.f32 %v1471, %v1583
        %1585 = vmatmul.f32.gmra.mxu0 %v825
        %v1586 = vpop.f32.mrf.mxu0
        %v1587 = vadd.f32 %v1474, %v1586
        %1588 = vmatmul.f32.gmra.mxu0 %v827
        %v1589 = vpop.f32.mrf.mxu0
        %v1590 = vadd.f32 %v1477, %v1589
        %1591 = vmatmul.f32.gmra.mxu0 %v829
        %v1592 = vpop.f32.mrf.mxu0
        %v1593 = vadd.f32 %v1480, %v1592
        %1594 = vmatmul.f32.gmra.mxu0 %v831
        %v1595 = vpop.f32.mrf.mxu0
        %v1596 = vadd.f32 %v1483, %v1595
        %1597 = vmatmul.f32.gmra.mxu0 %v833
        %v1598 = vpop.f32.mrf.mxu0
        %v1599 = vadd.f32 %v1486, %v1598
        %1600 = vmatmul.f32.gmra.mxu0 %v835
        %v1601 = vpop.f32.mrf.mxu0
        %v1602 = vadd.f32 %v1489, %v1601
        %1603 = vmatmul.f32.gmra.mxu0 %v837
        %v1604 = vpop.f32.mrf.mxu0
        %v1605 = vadd.f32 %v1492, %v1604
        %1606 = vmatmul.f32.gmra.mxu0 %v839
        %v1607 = vpop.f32.mrf.mxu0
        %v1608 = vadd.f32 %v1495, %v1607
        %1609 = vmatmul.f32.gmra.mxu0 %v841
        %v1610 = vpop.f32.mrf.mxu0
        %v1611 = vadd.f32 %v1498, %v1610
        %1612 = vmatmul.f32.gmra.mxu0 %v843
        %v1613 = vpop.f32.mrf.mxu0
        %v1614 = vadd.f32 %v1501, %v1613
        %1615 = vmatmul.f32.gmra.mxu0 %v845
        %v1616 = vpop.f32.mrf.mxu0
        %v1617 = vadd.f32 %v1504, %v1616
        %1618 = vmatmul.f32.gmra.mxu0 %v847
        %v1619 = vpop.f32.mrf.mxu0
        %v1620 = vadd.f32 %v1507, %v1619
        %1621 = vdwg.mxu0
        %v1622 = vadd.f32 %v688, %v1075
        %v1623 = vadd.f32 %v689, %v1301
        %v1624 = vadd.f32 %v690, %v1527
        %v1625 = vadd.f32 %v691, %v1078
        %v1626 = vadd.f32 %v692, %v1304
        %v1627 = vadd.f32 %v693, %v1530
        %v1628 = vadd.f32 %v694, %v1081
        %v1629 = vadd.f32 %v695, %v1307
        %v1630 = vadd.f32 %v696, %v1533
        %v1631 = vadd.f32 %v697, %v1084
        %v1632 = vadd.f32 %v698, %v1310
        %v1633 = vadd.f32 %v699, %v1536
        %v1634 = vadd.f32 %v700, %v1087
        %v1635 = vadd.f32 %v701, %v1313
        %v1636 = vadd.f32 %v702, %v1539
        %v1637 = vadd.f32 %v703, %v1090
        %v1638 = vadd.f32 %v704, %v1316
        %v1639 = vadd.f32 %v705, %v1542
        %v1640 = vadd.f32 %v706, %v1093
        %v1641 = vadd.f32 %v707, %v1319
        %v1642 = vadd.f32 %v708, %v1545
        %v1643 = vadd.f32 %v709, %v1096
        %v1644 = vadd.f32 %v710, %v1322
        %v1645 = vadd.f32 %v711, %v1548
        %v1646 = vadd.f32 %v712, %v1099
        %v1647 = vadd.f32 %v713, %v1325
        %v1648 = vadd.f32 %v714, %v1551
        %v1649 = vadd.f32 %v715, %v1102
        %v1650 = vadd.f32 %v716, %v1328
        %v1651 = vadd.f32 %v717, %v1554
        %v1652 = vadd.f32 %v718, %v1105
        %v1653 = vadd.f32 %v719, %v1331
        %v1654 = vadd.f32 %v720, %v1557
        %v1655 = vadd.f32 %v721, %v1108
        %v1656 = vadd.f32 %v722, %v1334
        %v1657 = vadd.f32 %v723, %v1560
        %v1658 = vadd.f32 %v724, %v1111
        %v1659 = vadd.f32 %v725, %v1337
        %v1660 = vadd.f32 %v726, %v1563
        %v1661 = vadd.f32 %v727, %v1114
        %v1662 = vadd.f32 %v728, %v1340
        %v1663 = vadd.f32 %v729, %v1566
        %v1664 = vadd.f32 %v730, %v1117
        %v1665 = vadd.f32 %v731, %v1343
        %v1666 = vadd.f32 %v732, %v1569
        %v1667 = vadd.f32 %v733, %v1120
        %v1668 = vadd.f32 %v734, %v1346
        %v1669 = vadd.f32 %v735, %v1572
        %v1670 = vadd.f32 %v736, %v1123
        %v1671 = vadd.f32 %v737, %v1349
        %v1672 = vadd.f32 %v738, %v1575
        %v1673 = vadd.f32 %v739, %v1126
        %v1674 = vadd.f32 %v740, %v1352
        %v1675 = vadd.f32 %v741, %v1578
        %v1676 = vadd.f32 %v742, %v1129
        %v1677 = vadd.f32 %v743, %v1355
        %v1678 = vadd.f32 %v744, %v1581
        %v1679 = vadd.f32 %v745, %v1132
        %v1680 = vadd.f32 %v746, %v1358
        %v1681 = vadd.f32 %v747, %v1584
        %v1682 = vadd.f32 %v748, %v1135
        %v1683 = vadd.f32 %v749, %v1361
        %v1684 = vadd.f32 %v750, %v1587
        %v1685 = vadd.f32 %v751, %v1138
        %v1686 = vadd.f32 %v752, %v1364
        %v1687 = vadd.f32 %v753, %v1590
        %v1688 = vadd.f32 %v754, %v1141
        %v1689 = vadd.f32 %v755, %v1367
        %v1690 = vadd.f32 %v756, %v1593
        %v1691 = vadd.f32 %v757, %v1144
        %v1692 = vadd.f32 %v758, %v1370
        %v1693 = vadd.f32 %v759, %v1596
        %v1694 = vadd.f32 %v760, %v1147
        %v1695 = vadd.f32 %v761, %v1373
        %v1696 = vadd.f32 %v762, %v1599
        %v1697 = vadd.f32 %v763, %v1150
        %v1698 = vadd.f32 %v764, %v1376
        %v1699 = vadd.f32 %v765, %v1602
        %v1700 = vadd.f32 %v766, %v1153
        %v1701 = vadd.f32 %v767, %v1379
        %v1702 = vadd.f32 %v768, %v1605
        %v1703 = vadd.f32 %v769, %v1156
        %v1704 = vadd.f32 %v770, %v1382
        %v1705 = vadd.f32 %v771, %v1608
        %v1706 = vadd.f32 %v772, %v1159
        %v1707 = vadd.f32 %v773, %v1385
        %v1708 = vadd.f32 %v774, %v1611
        %v1709 = vadd.f32 %v775, %v1162
        %v1710 = vadd.f32 %v776, %v1388
        %v1711 = vadd.f32 %v777, %v1614
        %v1712 = vadd.f32 %v778, %v1165
        %v1713 = vadd.f32 %v779, %v1391
        %v1714 = vadd.f32 %v780, %v1617
        %v1715 = vadd.f32 %v781, %v1168
        %v1716 = vadd.f32 %v782, %v1394
        %v1717 = vadd.f32 %v783, %v1620
        %1718 = vst [vmem:[#allocation2] sm:$0xff] %v1622
        %1719 = vst [vmem:[#allocation2 + $0x8] sm:$0xff] %v1623
        %1720 = vst [vmem:[#allocation2 + $0x10] sm:$0xff] %v1624
        %1721 = vst [vmem:[#allocation2 + $0x18] sm:$0xff] %v1625
        %1722 = vst [vmem:[#allocation2 + $0x20] sm:$0xff] %v1626
        %1723 = vst [vmem:[#allocation2 + $0x28] sm:$0xff] %v1627
        %1724 = vst [vmem:[#allocation2 + $0x30] sm:$0xff] %v1628
        %1725 = vst [vmem:[#allocation2 + $0x38] sm:$0xff] %v1629
        %1726 = vst [vmem:[#allocation2 + $0x40] sm:$0xff] %v1630
        %1727 = vst [vmem:[#allocation2 + $0x48] sm:$0xff] %v1631
        %1728 = vst [vmem:[#allocation2 + $0x50] sm:$0xff] %v1632
        %1729 = vst [vmem:[#allocation2 + $0x58] sm:$0xff] %v1633
        %1730 = vst [vmem:[#allocation2 + $0x60] sm:$0xff] %v1634
        %1731 = vst [vmem:[#allocation2 + $0x68] sm:$0xff] %v1635
        %1732 = vst [vmem:[#allocation2 + $0x70] sm:$0xff] %v1636
        %1733 = vst [vmem:[#allocation2 + $0x78] sm:$0xff] %v1637
        %1734 = vst [vmem:[#allocation2 + $0x80] sm:$0xff] %v1638
        %1735 = vst [vmem:[#allocation2 + $0x88] sm:$0xff] %v1639
        %1736 = vst [vmem:[#allocation2 + $0x90] sm:$0xff] %v1640
        %1737 = vst [vmem:[#allocation2 + $0x98] sm:$0xff] %v1641
        %1738 = vst [vmem:[#allocation2 + $0xa0] sm:$0xff] %v1642
        %1739 = vst [vmem:[#allocation2 + $0xa8] sm:$0xff] %v1643
        %1740 = vst [vmem:[#allocation2 + $0xb0] sm:$0xff] %v1644
        %1741 = vst [vmem:[#allocation2 + $0xb8] sm:$0xff] %v1645
        %1742 = vst [vmem:[#allocation2 + $0xc0] sm:$0xff] %v1646
        %1743 = vst [vmem:[#allocation2 + $0xc8] sm:$0xff] %v1647
        %1744 = vst [vmem:[#allocation2 + $0xd0] sm:$0xff] %v1648
        %1745 = vst [vmem:[#allocation2 + $0xd8] sm:$0xff] %v1649
        %1746 = vst [vmem:[#allocation2 + $0xe0] sm:$0xff] %v1650
        %1747 = vst [vmem:[#allocation2 + $0xe8] sm:$0xff] %v1651
        %1748 = vst [vmem:[#allocation2 + $0xf0] sm:$0xff] %v1652
        %1749 = vst [vmem:[#allocation2 + $0xf8] sm:$0xff] %v1653
        %1750 = vst [vmem:[#allocation2 + $0x100] sm:$0xff] %v1654
        %1751 = vst [vmem:[#allocation2 + $0x108] sm:$0xff] %v1655
        %1752 = vst [vmem:[#allocation2 + $0x110] sm:$0xff] %v1656
        %1753 = vst [vmem:[#allocation2 + $0x118] sm:$0xff] %v1657
        %1754 = vst [vmem:[#allocation2 + $0x120] sm:$0xff] %v1658
        %1755 = vst [vmem:[#allocation2 + $0x128] sm:$0xff] %v1659
        %1756 = vst [vmem:[#allocation2 + $0x130] sm:$0xff] %v1660
        %1757 = vst [vmem:[#allocation2 + $0x138] sm:$0xff] %v1661
        %1758 = vst [vmem:[#allocation2 + $0x140] sm:$0xff] %v1662
        %1759 = vst [vmem:[#allocation2 + $0x148] sm:$0xff] %v1663
        %1760 = vst [vmem:[#allocation2 + $0x150] sm:$0xff] %v1664
        %1761 = vst [vmem:[#allocation2 + $0x158] sm:$0xff] %v1665
        %1762 = vst [vmem:[#allocation2 + $0x160] sm:$0xff] %v1666
        %1763 = vst [vmem:[#allocation2 + $0x168] sm:$0xff] %v1667
        %1764 = vst [vmem:[#allocation2 + $0x170] sm:$0xff] %v1668
        %1765 = vst [vmem:[#allocation2 + $0x178] sm:$0xff] %v1669
        %1766 = vst [vmem:[#allocation2 + $0x180] sm:$0xff] %v1670
        %1767 = vst [vmem:[#allocation2 + $0x188] sm:$0xff] %v1671
        %1768 = vst [vmem:[#allocation2 + $0x190] sm:$0xff] %v1672
        %1769 = vst [vmem:[#allocation2 + $0x198] sm:$0xff] %v1673
        %1770 = vst [vmem:[#allocation2 + $0x1a0] sm:$0xff] %v1674
        %1771 = vst [vmem:[#allocation2 + $0x1a8] sm:$0xff] %v1675
        %1772 = vst [vmem:[#allocation2 + $0x1b0] sm:$0xff] %v1676
        %1773 = vst [vmem:[#allocation2 + $0x1b8] sm:$0xff] %v1677
        %1774 = vst [vmem:[#allocation2 + $0x1c0] sm:$0xff] %v1678
        %1775 = vst [vmem:[#allocation2 + $0x1c8] sm:$0xff] %v1679
        %1776 = vst [vmem:[#allocation2 + $0x1d0] sm:$0xff] %v1680
        %1777 = vst [vmem:[#allocation2 + $0x1d8] sm:$0xff] %v1681
        %1778 = vst [vmem:[#allocation2 + $0x1e0] sm:$0xff] %v1682
        %1779 = vst [vmem:[#allocation2 + $0x1e8] sm:$0xff] %v1683
        %1780 = vst [vmem:[#allocation2 + $0x1f0] sm:$0xff] %v1684
        %1781 = vst [vmem:[#allocation2 + $0x1f8] sm:$0xff] %v1685
        %1782 = vst [vmem:[#allocation2 + $0x200] sm:$0xff] %v1686
        %1783 = vst [vmem:[#allocation2 + $0x208] sm:$0xff] %v1687
        %1784 = vst [vmem:[#allocation2 + $0x210] sm:$0xff] %v1688
        %1785 = vst [vmem:[#allocation2 + $0x218] sm:$0xff] %v1689
        %1786 = vst [vmem:[#allocation2 + $0x220] sm:$0xff] %v1690
        %1787 = vst [vmem:[#allocation2 + $0x228] sm:$0xff] %v1691
        %1788 = vst [vmem:[#allocation2 + $0x230] sm:$0xff] %v1692
        %1789 = vst [vmem:[#allocation2 + $0x238] sm:$0xff] %v1693
        %1790 = vst [vmem:[#allocation2 + $0x240] sm:$0xff] %v1694
        %1791 = vst [vmem:[#allocation2 + $0x248] sm:$0xff] %v1695
        %1792 = vst [vmem:[#allocation2 + $0x250] sm:$0xff] %v1696
        %1793 = vst [vmem:[#allocation2 + $0x258] sm:$0xff] %v1697
        %1794 = vst [vmem:[#allocation2 + $0x260] sm:$0xff] %v1698
        %1795 = vst [vmem:[#allocation2 + $0x268] sm:$0xff] %v1699
        %1796 = vst [vmem:[#allocation2 + $0x270] sm:$0xff] %v1700
        %1797 = vst [vmem:[#allocation2 + $0x278] sm:$0xff] %v1701
        %1798 = vst [vmem:[#allocation2 + $0x280] sm:$0xff] %v1702
        %1799 = vst [vmem:[#allocation2 + $0x288] sm:$0xff] %v1703
        %1800 = vst [vmem:[#allocation2 + $0x290] sm:$0xff] %v1704
        %1801 = vst [vmem:[#allocation2 + $0x298] sm:$0xff] %v1705
        %1802 = vst [vmem:[#allocation2 + $0x2a0] sm:$0xff] %v1706
        %1803 = vst [vmem:[#allocation2 + $0x2a8] sm:$0xff] %v1707
        %1804 = vst [vmem:[#allocation2 + $0x2b0] sm:$0xff] %v1708
        %1805 = vst [vmem:[#allocation2 + $0x2b8] sm:$0xff] %v1709
        %1806 = vst [vmem:[#allocation2 + $0x2c0] sm:$0xff] %v1710
        %1807 = vst [vmem:[#allocation2 + $0x2c8] sm:$0xff] %v1711
        %1808 = vst [vmem:[#allocation2 + $0x2d0] sm:$0xff] %v1712
        %1809 = vst [vmem:[#allocation2 + $0x2d8] sm:$0xff] %v1713
        %1810 = vst [vmem:[#allocation2 + $0x2e0] sm:$0xff] %v1714
        %1811 = vst [vmem:[#allocation2 + $0x2e8] sm:$0xff] %v1715
        %1812 = vst [vmem:[#allocation2 + $0x2f0] sm:$0xff] %v1716
        %1813 = vst [vmem:[#allocation2 + $0x2f8] sm:$0xff] %v1717
        %p1814 = scmp.eq.s32.totalorder %s16, 3
        // Predicated region
        $region91: #{two_layer_mlp_gate.1} parent=77 // pred_check
          %p1815 = pneg %p1814
        $region92: #{two_layer_mlp_gate.1} parent=77 // pred_check_branch
          %1817 = sbr.rel (%p1815) target = $region94
        $region93: #{two_layer_mlp_gate.1} parent=77 // pred_region
          %v1818 = vld [vmem:[#allocation2] sm:$0xff]
          %v1819 = vld [vmem:[#allocation2 + $0x8] sm:$0xff]
          %v1820 = vld [vmem:[#allocation2 + $0x10] sm:$0xff]
          %v1821 = vld [vmem:[#allocation2 + $0x18] sm:$0xff]
          %v1822 = vld [vmem:[#allocation2 + $0x20] sm:$0xff]
          %v1823 = vld [vmem:[#allocation2 + $0x28] sm:$0xff]
          %v1824 = vld [vmem:[#allocation2 + $0x30] sm:$0xff]
          %v1825 = vld [vmem:[#allocation2 + $0x38] sm:$0xff]
          %v1826 = vld [vmem:[#allocation2 + $0x40] sm:$0xff]
          %v1827 = vld [vmem:[#allocation2 + $0x48] sm:$0xff]
          %v1828 = vld [vmem:[#allocation2 + $0x50] sm:$0xff]
          %v1829 = vld [vmem:[#allocation2 + $0x58] sm:$0xff]
          %v1830 = vld [vmem:[#allocation2 + $0x60] sm:$0xff]
          %v1831 = vld [vmem:[#allocation2 + $0x68] sm:$0xff]
          %v1832 = vld [vmem:[#allocation2 + $0x70] sm:$0xff]
          %v1833 = vld [vmem:[#allocation2 + $0x78] sm:$0xff]
          %v1834 = vld [vmem:[#allocation2 + $0x80] sm:$0xff]
          %v1835 = vld [vmem:[#allocation2 + $0x88] sm:$0xff]
          %v1836 = vld [vmem:[#allocation2 + $0x90] sm:$0xff]
          %v1837 = vld [vmem:[#allocation2 + $0x98] sm:$0xff]
          %v1838 = vld [vmem:[#allocation2 + $0xa0] sm:$0xff]
          %v1839 = vld [vmem:[#allocation2 + $0xa8] sm:$0xff]
          %v1840 = vld [vmem:[#allocation2 + $0xb0] sm:$0xff]
          %v1841 = vld [vmem:[#allocation2 + $0xb8] sm:$0xff]
          %v1842 = vld [vmem:[#allocation2 + $0xc0] sm:$0xff]
          %v1843 = vld [vmem:[#allocation2 + $0xc8] sm:$0xff]
          %v1844 = vld [vmem:[#allocation2 + $0xd0] sm:$0xff]
          %v1845 = vld [vmem:[#allocation2 + $0xd8] sm:$0xff]
          %v1846 = vld [vmem:[#allocation2 + $0xe0] sm:$0xff]
          %v1847 = vld [vmem:[#allocation2 + $0xe8] sm:$0xff]
          %v1848 = vld [vmem:[#allocation2 + $0xf0] sm:$0xff]
          %v1849 = vld [vmem:[#allocation2 + $0xf8] sm:$0xff]
          %v1850 = vld [vmem:[#allocation2 + $0x100] sm:$0xff]
          %v1851 = vld [vmem:[#allocation2 + $0x108] sm:$0xff]
          %v1852 = vld [vmem:[#allocation2 + $0x110] sm:$0xff]
          %v1853 = vld [vmem:[#allocation2 + $0x118] sm:$0xff]
          %v1854 = vld [vmem:[#allocation2 + $0x120] sm:$0xff]
          %v1855 = vld [vmem:[#allocation2 + $0x128] sm:$0xff]
          %v1856 = vld [vmem:[#allocation2 + $0x130] sm:$0xff]
          %v1857 = vld [vmem:[#allocation2 + $0x138] sm:$0xff]
          %v1858 = vld [vmem:[#allocation2 + $0x140] sm:$0xff]
          %v1859 = vld [vmem:[#allocation2 + $0x148] sm:$0xff]
          %v1860 = vld [vmem:[#allocation2 + $0x150] sm:$0xff]
          %v1861 = vld [vmem:[#allocation2 + $0x158] sm:$0xff]
          %v1862 = vld [vmem:[#allocation2 + $0x160] sm:$0xff]
          %v1863 = vld [vmem:[#allocation2 + $0x168] sm:$0xff]
          %v1864 = vld [vmem:[#allocation2 + $0x170] sm:$0xff]
          %v1865 = vld [vmem:[#allocation2 + $0x178] sm:$0xff]
          %v1866 = vld [vmem:[#allocation2 + $0x180] sm:$0xff]
          %v1867 = vld [vmem:[#allocation2 + $0x188] sm:$0xff]
          %v1868 = vld [vmem:[#allocation2 + $0x190] sm:$0xff]
          %v1869 = vld [vmem:[#allocation2 + $0x198] sm:$0xff]
          %v1870 = vld [vmem:[#allocation2 + $0x1a0] sm:$0xff]
          %v1871 = vld [vmem:[#allocation2 + $0x1a8] sm:$0xff]
          %v1872 = vld [vmem:[#allocation2 + $0x1b0] sm:$0xff]
          %v1873 = vld [vmem:[#allocation2 + $0x1b8] sm:$0xff]
          %v1874 = vld [vmem:[#allocation2 + $0x1c0] sm:$0xff]
          %v1875 = vld [vmem:[#allocation2 + $0x1c8] sm:$0xff]
          %v1876 = vld [vmem:[#allocation2 + $0x1d0] sm:$0xff]
          %v1877 = vld [vmem:[#allocation2 + $0x1d8] sm:$0xff]
          %v1878 = vld [vmem:[#allocation2 + $0x1e0] sm:$0xff]
          %v1879 = vld [vmem:[#allocation2 + $0x1e8] sm:$0xff]
          %v1880 = vld [vmem:[#allocation2 + $0x1f0] sm:$0xff]
          %v1881 = vld [vmem:[#allocation2 + $0x1f8] sm:$0xff]
          %v1882 = vld [vmem:[#allocation2 + $0x200] sm:$0xff]
          %v1883 = vld [vmem:[#allocation2 + $0x208] sm:$0xff]
          %v1884 = vld [vmem:[#allocation2 + $0x210] sm:$0xff]
          %v1885 = vld [vmem:[#allocation2 + $0x218] sm:$0xff]
          %v1886 = vld [vmem:[#allocation2 + $0x220] sm:$0xff]
          %v1887 = vld [vmem:[#allocation2 + $0x228] sm:$0xff]
          %v1888 = vld [vmem:[#allocation2 + $0x230] sm:$0xff]
          %v1889 = vld [vmem:[#allocation2 + $0x238] sm:$0xff]
          %v1890 = vld [vmem:[#allocation2 + $0x240] sm:$0xff]
          %v1891 = vld [vmem:[#allocation2 + $0x248] sm:$0xff]
          %v1892 = vld [vmem:[#allocation2 + $0x250] sm:$0xff]
          %v1893 = vld [vmem:[#allocation2 + $0x258] sm:$0xff]
          %v1894 = vld [vmem:[#allocation2 + $0x260] sm:$0xff]
          %v1895 = vld [vmem:[#allocation2 + $0x268] sm:$0xff]
          %v1896 = vld [vmem:[#allocation2 + $0x270] sm:$0xff]
          %v1897 = vld [vmem:[#allocation2 + $0x278] sm:$0xff]
          %v1898 = vld [vmem:[#allocation2 + $0x280] sm:$0xff]
          %v1899 = vld [vmem:[#allocation2 + $0x288] sm:$0xff]
          %v1900 = vld [vmem:[#allocation2 + $0x290] sm:$0xff]
          %v1901 = vld [vmem:[#allocation2 + $0x298] sm:$0xff]
          %v1902 = vld [vmem:[#allocation2 + $0x2a0] sm:$0xff]
          %v1903 = vld [vmem:[#allocation2 + $0x2a8] sm:$0xff]
          %v1904 = vld [vmem:[#allocation2 + $0x2b0] sm:$0xff]
          %v1905 = vld [vmem:[#allocation2 + $0x2b8] sm:$0xff]
          %v1906 = vld [vmem:[#allocation2 + $0x2c0] sm:$0xff]
          %v1907 = vld [vmem:[#allocation2 + $0x2c8] sm:$0xff]
          %v1908 = vld [vmem:[#allocation2 + $0x2d0] sm:$0xff]
          %v1909 = vld [vmem:[#allocation2 + $0x2d8] sm:$0xff]
          %v1910 = vld [vmem:[#allocation2 + $0x2e0] sm:$0xff]
          %v1911 = vld [vmem:[#allocation2 + $0x2e8] sm:$0xff]
          %v1912 = vld [vmem:[#allocation2 + $0x2f0] sm:$0xff]
          %v1913 = vld [vmem:[#allocation2 + $0x2f8] sm:$0xff]
          %v1914 = vld [vmem:[%s2] sm:$0xff]
          %v1915 = vld [vmem:[%s2 + $0x8] sm:$0xff]
          %v1916 = vld [vmem:[%s2 + $0x10] sm:$0xff]
          %v1917 = vld [vmem:[%s2 + $0x18] sm:$0xff]
          %v1918 = vld [vmem:[%s2 + $0x20] sm:$0xff]
          %v1919 = vld [vmem:[%s2 + $0x28] sm:$0xff]
          %v1920 = vld [vmem:[%s2 + $0x30] sm:$0xff]
          %v1921 = vld [vmem:[%s2 + $0x38] sm:$0xff]
          %v1922 = vld [vmem:[%s2 + $0x40] sm:$0xff]
          %v1923 = vld [vmem:[%s2 + $0x48] sm:$0xff]
          %v1924 = vld [vmem:[%s2 + $0x50] sm:$0xff]
          %v1925 = vld [vmem:[%s2 + $0x58] sm:$0xff]
          %v1926 = vld [vmem:[%s2 + $0x60] sm:$0xff]
          %v1927 = vld [vmem:[%s2 + $0x68] sm:$0xff]
          %v1928 = vld [vmem:[%s2 + $0x70] sm:$0xff]
          %v1929 = vld [vmem:[%s2 + $0x78] sm:$0xff]
          %v1930 = vld [vmem:[%s2 + $0x80] sm:$0xff]
          %v1931 = vld [vmem:[%s2 + $0x88] sm:$0xff]
          %v1932 = vld [vmem:[%s2 + $0x90] sm:$0xff]
          %v1933 = vld [vmem:[%s2 + $0x98] sm:$0xff]
          %v1934 = vld [vmem:[%s2 + $0xa0] sm:$0xff]
          %v1935 = vld [vmem:[%s2 + $0xa8] sm:$0xff]
          %v1936 = vld [vmem:[%s2 + $0xb0] sm:$0xff]
          %v1937 = vld [vmem:[%s2 + $0xb8] sm:$0xff]
          %v1938 = vld [vmem:[%s2 + $0xc0] sm:$0xff]
          %v1939 = vld [vmem:[%s2 + $0xc8] sm:$0xff]
          %v1940 = vld [vmem:[%s2 + $0xd0] sm:$0xff]
          %v1941 = vld [vmem:[%s2 + $0xd8] sm:$0xff]
          %v1942 = vld [vmem:[%s2 + $0xe0] sm:$0xff]
          %v1943 = vld [vmem:[%s2 + $0xe8] sm:$0xff]
          %v1944 = vld [vmem:[%s2 + $0xf0] sm:$0xff]
          %v1945 = vld [vmem:[%s2 + $0xf8] sm:$0xff]
          %1947 = vset.pattern.permute.xlu0 0
          %1948 = vperm.xlu0 %1947, %v1914
          %v1949 = vpop.permute.xlu0 %1948
          %1952 = vset.pattern.permute.xlu0 0
          %1953 = vperm.xlu0 %1952, %v1915
          %v1954 = vpop.permute.xlu0 %1953
          %1957 = vset.pattern.permute.xlu0 0
          %1958 = vperm.xlu0 %1957, %v1916
          %v1959 = vpop.permute.xlu0 %1958
          %1962 = vset.pattern.permute.xlu0 0
          %1963 = vperm.xlu0 %1962, %v1917
          %v1964 = vpop.permute.xlu0 %1963
          %1967 = vset.pattern.permute.xlu0 0
          %1968 = vperm.xlu0 %1967, %v1918
          %v1969 = vpop.permute.xlu0 %1968
          %1972 = vset.pattern.permute.xlu0 0
          %1973 = vperm.xlu0 %1972, %v1919
          %v1974 = vpop.permute.xlu0 %1973
          %1977 = vset.pattern.permute.xlu0 0
          %1978 = vperm.xlu0 %1977, %v1920
          %v1979 = vpop.permute.xlu0 %1978
          %1982 = vset.pattern.permute.xlu0 0
          %1983 = vperm.xlu0 %1982, %v1921
          %v1984 = vpop.permute.xlu0 %1983
          %1987 = vset.pattern.permute.xlu0 0
          %1988 = vperm.xlu0 %1987, %v1922
          %v1989 = vpop.permute.xlu0 %1988
          %1992 = vset.pattern.permute.xlu0 0
          %1993 = vperm.xlu0 %1992, %v1923
          %v1994 = vpop.permute.xlu0 %1993
          %1997 = vset.pattern.permute.xlu0 0
          %1998 = vperm.xlu0 %1997, %v1924
          %v1999 = vpop.permute.xlu0 %1998
          %2002 = vset.pattern.permute.xlu0 0
          %2003 = vperm.xlu0 %2002, %v1925
          %v2004 = vpop.permute.xlu0 %2003
          %2007 = vset.pattern.permute.xlu0 0
          %2008 = vperm.xlu0 %2007, %v1926
          %v2009 = vpop.permute.xlu0 %2008
          %2012 = vset.pattern.permute.xlu0 0
          %2013 = vperm.xlu0 %2012, %v1927
          %v2014 = vpop.permute.xlu0 %2013
          %2017 = vset.pattern.permute.xlu0 0
          %2018 = vperm.xlu0 %2017, %v1928
          %v2019 = vpop.permute.xlu0 %2018
          %2022 = vset.pattern.permute.xlu0 0
          %2023 = vperm.xlu0 %2022, %v1929
          %v2024 = vpop.permute.xlu0 %2023
          %2027 = vset.pattern.permute.xlu0 0
          %2028 = vperm.xlu0 %2027, %v1930
          %v2029 = vpop.permute.xlu0 %2028
          %2032 = vset.pattern.permute.xlu0 0
          %2033 = vperm.xlu0 %2032, %v1931
          %v2034 = vpop.permute.xlu0 %2033
          %2037 = vset.pattern.permute.xlu0 0
          %2038 = vperm.xlu0 %2037, %v1932
          %v2039 = vpop.permute.xlu0 %2038
          %2042 = vset.pattern.permute.xlu0 0
          %2043 = vperm.xlu0 %2042, %v1933
          %v2044 = vpop.permute.xlu0 %2043
          %2047 = vset.pattern.permute.xlu0 0
          %2048 = vperm.xlu0 %2047, %v1934
          %v2049 = vpop.permute.xlu0 %2048
          %2052 = vset.pattern.permute.xlu0 0
          %2053 = vperm.xlu0 %2052, %v1935
          %v2054 = vpop.permute.xlu0 %2053
          %2057 = vset.pattern.permute.xlu0 0
          %2058 = vperm.xlu0 %2057, %v1936
          %v2059 = vpop.permute.xlu0 %2058
          %2062 = vset.pattern.permute.xlu0 0
          %2063 = vperm.xlu0 %2062, %v1937
          %v2064 = vpop.permute.xlu0 %2063
          %2067 = vset.pattern.permute.xlu0 0
          %2068 = vperm.xlu0 %2067, %v1938
          %v2069 = vpop.permute.xlu0 %2068
          %2072 = vset.pattern.permute.xlu0 0
          %2073 = vperm.xlu0 %2072, %v1939
          %v2074 = vpop.permute.xlu0 %2073
          %2077 = vset.pattern.permute.xlu0 0
          %2078 = vperm.xlu0 %2077, %v1940
          %v2079 = vpop.permute.xlu0 %2078
          %2082 = vset.pattern.permute.xlu0 0
          %2083 = vperm.xlu0 %2082, %v1941
          %v2084 = vpop.permute.xlu0 %2083
          %2087 = vset.pattern.permute.xlu0 0
          %2088 = vperm.xlu0 %2087, %v1942
          %v2089 = vpop.permute.xlu0 %2088
          %2092 = vset.pattern.permute.xlu0 0
          %2093 = vperm.xlu0 %2092, %v1943
          %v2094 = vpop.permute.xlu0 %2093
          %2097 = vset.pattern.permute.xlu0 0
          %2098 = vperm.xlu0 %2097, %v1944
          %v2099 = vpop.permute.xlu0 %2098
          %2102 = vset.pattern.permute.xlu0 0
          %2103 = vperm.xlu0 %2102, %v1945
          %v2104 = vpop.permute.xlu0 %2103
          %v2106 = vadd.f32 %v1818, %v1949
          %v2107 = vadd.f32 %v1819, %v1949
          %v2108 = vadd.f32 %v1820, %v1949
          %v2109 = vadd.f32 %v1821, %v1954
          %v2110 = vadd.f32 %v1822, %v1954
          %v2111 = vadd.f32 %v1823, %v1954
          %v2112 = vadd.f32 %v1824, %v1959
          %v2113 = vadd.f32 %v1825, %v1959
          %v2114 = vadd.f32 %v1826, %v1959
          %v2115 = vadd.f32 %v1827, %v1964
          %v2116 = vadd.f32 %v1828, %v1964
          %v2117 = vadd.f32 %v1829, %v1964
          %v2118 = vadd.f32 %v1830, %v1969
          %v2119 = vadd.f32 %v1831, %v1969
          %v2120 = vadd.f32 %v1832, %v1969
          %v2121 = vadd.f32 %v1833, %v1974
          %v2122 = vadd.f32 %v1834, %v1974
          %v2123 = vadd.f32 %v1835, %v1974
          %v2124 = vadd.f32 %v1836, %v1979
          %v2125 = vadd.f32 %v1837, %v1979
          %v2126 = vadd.f32 %v1838, %v1979
          %v2127 = vadd.f32 %v1839, %v1984
          %v2128 = vadd.f32 %v1840, %v1984
          %v2129 = vadd.f32 %v1841, %v1984
          %v2130 = vadd.f32 %v1842, %v1989
          %v2131 = vadd.f32 %v1843, %v1989
          %v2132 = vadd.f32 %v1844, %v1989
          %v2133 = vadd.f32 %v1845, %v1994
          %v2134 = vadd.f32 %v1846, %v1994
          %v2135 = vadd.f32 %v1847, %v1994
          %v2136 = vadd.f32 %v1848, %v1999
          %v2137 = vadd.f32 %v1849, %v1999
          %v2138 = vadd.f32 %v1850, %v1999
          %v2139 = vadd.f32 %v1851, %v2004
          %v2140 = vadd.f32 %v1852, %v2004
          %v2141 = vadd.f32 %v1853, %v2004
          %v2142 = vadd.f32 %v1854, %v2009
          %v2143 = vadd.f32 %v1855, %v2009
          %v2144 = vadd.f32 %v1856, %v2009
          %v2145 = vadd.f32 %v1857, %v2014
          %v2146 = vadd.f32 %v1858, %v2014
          %v2147 = vadd.f32 %v1859, %v2014
          %v2148 = vadd.f32 %v1860, %v2019
          %v2149 = vadd.f32 %v1861, %v2019
          %v2150 = vadd.f32 %v1862, %v2019
          %v2151 = vadd.f32 %v1863, %v2024
          %v2152 = vadd.f32 %v1864, %v2024
          %v2153 = vadd.f32 %v1865, %v2024
          %v2154 = vadd.f32 %v1866, %v2029
          %v2155 = vadd.f32 %v1867, %v2029
          %v2156 = vadd.f32 %v1868, %v2029
          %v2157 = vadd.f32 %v1869, %v2034
          %v2158 = vadd.f32 %v1870, %v2034
          %v2159 = vadd.f32 %v1871, %v2034
          %v2160 = vadd.f32 %v1872, %v2039
          %v2161 = vadd.f32 %v1873, %v2039
          %v2162 = vadd.f32 %v1874, %v2039
          %v2163 = vadd.f32 %v1875, %v2044
          %v2164 = vadd.f32 %v1876, %v2044
          %v2165 = vadd.f32 %v1877, %v2044
          %v2166 = vadd.f32 %v1878, %v2049
          %v2167 = vadd.f32 %v1879, %v2049
          %v2168 = vadd.f32 %v1880, %v2049
          %v2169 = vadd.f32 %v1881, %v2054
          %v2170 = vadd.f32 %v1882, %v2054
          %v2171 = vadd.f32 %v1883, %v2054
          %v2172 = vadd.f32 %v1884, %v2059
          %v2173 = vadd.f32 %v1885, %v2059
          %v2174 = vadd.f32 %v1886, %v2059
          %v2175 = vadd.f32 %v1887, %v2064
          %v2176 = vadd.f32 %v1888, %v2064
          %v2177 = vadd.f32 %v1889, %v2064
          %v2178 = vadd.f32 %v1890, %v2069
          %v2179 = vadd.f32 %v1891, %v2069
          %v2180 = vadd.f32 %v1892, %v2069
          %v2181 = vadd.f32 %v1893, %v2074
          %v2182 = vadd.f32 %v1894, %v2074
          %v2183 = vadd.f32 %v1895, %v2074
          %v2184 = vadd.f32 %v1896, %v2079
          %v2185 = vadd.f32 %v1897, %v2079
          %v2186 = vadd.f32 %v1898, %v2079
          %v2187 = vadd.f32 %v1899, %v2084
          %v2188 = vadd.f32 %v1900, %v2084
          %v2189 = vadd.f32 %v1901, %v2084
          %v2190 = vadd.f32 %v1902, %v2089
          %v2191 = vadd.f32 %v1903, %v2089
          %v2192 = vadd.f32 %v1904, %v2089
          %v2193 = vadd.f32 %v1905, %v2094
          %v2194 = vadd.f32 %v1906, %v2094
          %v2195 = vadd.f32 %v1907, %v2094
          %v2196 = vadd.f32 %v1908, %v2099
          %v2197 = vadd.f32 %v1909, %v2099
          %v2198 = vadd.f32 %v1910, %v2099
          %v2199 = vadd.f32 %v1911, %v2104
          %v2200 = vadd.f32 %v1912, %v2104
          %v2201 = vadd.f32 %v1913, %v2104
          %v2202 = vxor.u32 %v2106, 2147483648
          %v2203 = vxor.u32 %v2107, 2147483648
          %v2204 = vxor.u32 %v2108, 2147483648
          %v2205 = vxor.u32 %v2109, 2147483648
          %v2206 = vxor.u32 %v2110, 2147483648
          %v2207 = vxor.u32 %v2111, 2147483648
          %v2208 = vxor.u32 %v2112, 2147483648
          %v2209 = vxor.u32 %v2113, 2147483648
          %v2210 = vxor.u32 %v2114, 2147483648
          %v2211 = vxor.u32 %v2115, 2147483648
          %v2212 = vxor.u32 %v2116, 2147483648
          %v2213 = vxor.u32 %v2117, 2147483648
          %v2214 = vxor.u32 %v2118, 2147483648
          %v2215 = vxor.u32 %v2119, 2147483648
          %v2216 = vxor.u32 %v2120, 2147483648
          %v2217 = vxor.u32 %v2121, 2147483648
          %v2218 = vxor.u32 %v2122, 2147483648
          %v2219 = vxor.u32 %v2123, 2147483648
          %v2220 = vxor.u32 %v2124, 2147483648
          %v2221 = vxor.u32 %v2125, 2147483648
          %v2222 = vxor.u32 %v2126, 2147483648
          %v2223 = vxor.u32 %v2127, 2147483648
          %v2224 = vxor.u32 %v2128, 2147483648
          %v2225 = vxor.u32 %v2129, 2147483648
          %v2226 = vxor.u32 %v2130, 2147483648
          %v2227 = vxor.u32 %v2131, 2147483648
          %v2228 = vxor.u32 %v2132, 2147483648
          %v2229 = vxor.u32 %v2133, 2147483648
          %v2230 = vxor.u32 %v2134, 2147483648
          %v2231 = vxor.u32 %v2135, 2147483648
          %v2232 = vxor.u32 %v2136, 2147483648
          %v2233 = vxor.u32 %v2137, 2147483648
          %v2234 = vxor.u32 %v2138, 2147483648
          %v2235 = vxor.u32 %v2139, 2147483648
          %v2236 = vxor.u32 %v2140, 2147483648
          %v2237 = vxor.u32 %v2141, 2147483648
          %v2238 = vxor.u32 %v2142, 2147483648
          %v2239 = vxor.u32 %v2143, 2147483648
          %v2240 = vxor.u32 %v2144, 2147483648
          %v2241 = vxor.u32 %v2145, 2147483648
          %v2242 = vxor.u32 %v2146, 2147483648
          %v2243 = vxor.u32 %v2147, 2147483648
          %v2244 = vxor.u32 %v2148, 2147483648
          %v2245 = vxor.u32 %v2149, 2147483648
          %v2246 = vxor.u32 %v2150, 2147483648
          %v2247 = vxor.u32 %v2151, 2147483648
          %v2248 = vxor.u32 %v2152, 2147483648
          %v2249 = vxor.u32 %v2153, 2147483648
          %v2250 = vxor.u32 %v2154, 2147483648
          %v2251 = vxor.u32 %v2155, 2147483648
          %v2252 = vxor.u32 %v2156, 2147483648
          %v2253 = vxor.u32 %v2157, 2147483648
          %v2254 = vxor.u32 %v2158, 2147483648
          %v2255 = vxor.u32 %v2159, 2147483648
          %v2256 = vxor.u32 %v2160, 2147483648
          %v2257 = vxor.u32 %v2161, 2147483648
          %v2258 = vxor.u32 %v2162, 2147483648
          %v2259 = vxor.u32 %v2163, 2147483648
          %v2260 = vxor.u32 %v2164, 2147483648
          %v2261 = vxor.u32 %v2165, 2147483648
          %v2262 = vxor.u32 %v2166, 2147483648
          %v2263 = vxor.u32 %v2167, 2147483648
          %v2264 = vxor.u32 %v2168, 2147483648
          %v2265 = vxor.u32 %v2169, 2147483648
          %v2266 = vxor.u32 %v2170, 2147483648
          %v2267 = vxor.u32 %v2171, 2147483648
          %v2268 = vxor.u32 %v2172, 2147483648
          %v2269 = vxor.u32 %v2173, 2147483648
          %v2270 = vxor.u32 %v2174, 2147483648
          %v2271 = vxor.u32 %v2175, 2147483648
          %v2272 = vxor.u32 %v2176, 2147483648
          %v2273 = vxor.u32 %v2177, 2147483648
          %v2274 = vxor.u32 %v2178, 2147483648
          %v2275 = vxor.u32 %v2179, 2147483648
          %v2276 = vxor.u32 %v2180, 2147483648
          %v2277 = vxor.u32 %v2181, 2147483648
          %v2278 = vxor.u32 %v2182, 2147483648
          %v2279 = vxor.u32 %v2183, 2147483648
          %v2280 = vxor.u32 %v2184, 2147483648
          %v2281 = vxor.u32 %v2185, 2147483648
          %v2282 = vxor.u32 %v2186, 2147483648
          %v2283 = vxor.u32 %v2187, 2147483648
          %v2284 = vxor.u32 %v2188, 2147483648
          %v2285 = vxor.u32 %v2189, 2147483648
          %v2286 = vxor.u32 %v2190, 2147483648
          %v2287 = vxor.u32 %v2191, 2147483648
          %v2288 = vxor.u32 %v2192, 2147483648
          %v2289 = vxor.u32 %v2193, 2147483648
          %v2290 = vxor.u32 %v2194, 2147483648
          %v2291 = vxor.u32 %v2195, 2147483648
          %v2292 = vxor.u32 %v2196, 2147483648
          %v2293 = vxor.u32 %v2197, 2147483648
          %v2294 = vxor.u32 %v2198, 2147483648
          %v2295 = vxor.u32 %v2199, 2147483648
          %v2296 = vxor.u32 %v2200, 2147483648
          %v2297 = vxor.u32 %v2201, 2147483648
          %v2298 = vmul.f32 %v2202, 1.442695
          %v2299 = vpow.pop %v2298
          %v2300 = vmul.f32 %v2203, 1.442695
          %v2301 = vpow.pop %v2300
          %v2302 = vmul.f32 %v2204, 1.442695
          %v2303 = vpow.pop %v2302
          %v2304 = vmul.f32 %v2205, 1.442695
          %v2305 = vpow.pop %v2304
          %v2306 = vmul.f32 %v2206, 1.442695
          %v2307 = vpow.pop %v2306
          %v2308 = vmul.f32 %v2207, 1.442695
          %v2309 = vpow.pop %v2308
          %v2310 = vmul.f32 %v2208, 1.442695
          %v2311 = vpow.pop %v2310
          %v2312 = vmul.f32 %v2209, 1.442695
          %v2313 = vpow.pop %v2312
          %v2314 = vmul.f32 %v2210, 1.442695
          %v2315 = vpow.pop %v2314
          %v2316 = vmul.f32 %v2211, 1.442695
          %v2317 = vpow.pop %v2316
          %v2318 = vmul.f32 %v2212, 1.442695
          %v2319 = vpow.pop %v2318
          %v2320 = vmul.f32 %v2213, 1.442695
          %v2321 = vpow.pop %v2320
          %v2322 = vmul.f32 %v2214, 1.442695
          %v2323 = vpow.pop %v2322
          %v2324 = vmul.f32 %v2215, 1.442695
          %v2325 = vpow.pop %v2324
          %v2326 = vmul.f32 %v2216, 1.442695
          %v2327 = vpow.pop %v2326
          %v2328 = vmul.f32 %v2217, 1.442695
          %v2329 = vpow.pop %v2328
          %v2330 = vmul.f32 %v2218, 1.442695
          %v2331 = vpow.pop %v2330
          %v2332 = vmul.f32 %v2219, 1.442695
          %v2333 = vpow.pop %v2332
          %v2334 = vmul.f32 %v2220, 1.442695
          %v2335 = vpow.pop %v2334
          %v2336 = vmul.f32 %v2221, 1.442695
          %v2337 = vpow.pop %v2336
          %v2338 = vmul.f32 %v2222, 1.442695
          %v2339 = vpow.pop %v2338
          %v2340 = vmul.f32 %v2223, 1.442695
          %v2341 = vpow.pop %v2340
          %v2342 = vmul.f32 %v2224, 1.442695
          %v2343 = vpow.pop %v2342
          %v2344 = vmul.f32 %v2225, 1.442695
          %v2345 = vpow.pop %v2344
          %v2346 = vmul.f32 %v2226, 1.442695
          %v2347 = vpow.pop %v2346
          %v2348 = vmul.f32 %v2227, 1.442695
          %v2349 = vpow.pop %v2348
          %v2350 = vmul.f32 %v2228, 1.442695
          %v2351 = vpow.pop %v2350
          %v2352 = vmul.f32 %v2229, 1.442695
          %v2353 = vpow.pop %v2352
          %v2354 = vmul.f32 %v2230, 1.442695
          %v2355 = vpow.pop %v2354
          %v2356 = vmul.f32 %v2231, 1.442695
          %v2357 = vpow.pop %v2356
          %v2358 = vmul.f32 %v2232, 1.442695
          %v2359 = vpow.pop %v2358
          %v2360 = vmul.f32 %v2233, 1.442695
          %v2361 = vpow.pop %v2360
          %v2362 = vmul.f32 %v2234, 1.442695
          %v2363 = vpow.pop %v2362
          %v2364 = vmul.f32 %v2235, 1.442695
          %v2365 = vpow.pop %v2364
          %v2366 = vmul.f32 %v2236, 1.442695
          %v2367 = vpow.pop %v2366
          %v2368 = vmul.f32 %v2237, 1.442695
          %v2369 = vpow.pop %v2368
          %v2370 = vmul.f32 %v2238, 1.442695
          %v2371 = vpow.pop %v2370
          %v2372 = vmul.f32 %v2239, 1.442695
          %v2373 = vpow.pop %v2372
          %v2374 = vmul.f32 %v2240, 1.442695
          %v2375 = vpow.pop %v2374
          %v2376 = vmul.f32 %v2241, 1.442695
          %v2377 = vpow.pop %v2376
          %v2378 = vmul.f32 %v2242, 1.442695
          %v2379 = vpow.pop %v2378
          %v2380 = vmul.f32 %v2243, 1.442695
          %v2381 = vpow.pop %v2380
          %v2382 = vmul.f32 %v2244, 1.442695
          %v2383 = vpow.pop %v2382
          %v2384 = vmul.f32 %v2245, 1.442695
          %v2385 = vpow.pop %v2384
          %v2386 = vmul.f32 %v2246, 1.442695
          %v2387 = vpow.pop %v2386
          %v2388 = vmul.f32 %v2247, 1.442695
          %v2389 = vpow.pop %v2388
          %v2390 = vmul.f32 %v2248, 1.442695
          %v2391 = vpow.pop %v2390
          %v2392 = vmul.f32 %v2249, 1.442695
          %v2393 = vpow.pop %v2392
          %v2394 = vmul.f32 %v2250, 1.442695
          %v2395 = vpow.pop %v2394
          %v2396 = vmul.f32 %v2251, 1.442695
          %v2397 = vpow.pop %v2396
          %v2398 = vmul.f32 %v2252, 1.442695
          %v2399 = vpow.pop %v2398
          %v2400 = vmul.f32 %v2253, 1.442695
          %v2401 = vpow.pop %v2400
          %v2402 = vmul.f32 %v2254, 1.442695
          %v2403 = vpow.pop %v2402
          %v2404 = vmul.f32 %v2255, 1.442695
          %v2405 = vpow.pop %v2404
          %v2406 = vmul.f32 %v2256, 1.442695
          %v2407 = vpow.pop %v2406
          %v2408 = vmul.f32 %v2257, 1.442695
          %v2409 = vpow.pop %v2408
          %v2410 = vmul.f32 %v2258, 1.442695
          %v2411 = vpow.pop %v2410
          %v2412 = vmul.f32 %v2259, 1.442695
          %v2413 = vpow.pop %v2412
          %v2414 = vmul.f32 %v2260, 1.442695
          %v2415 = vpow.pop %v2414
          %v2416 = vmul.f32 %v2261, 1.442695
          %v2417 = vpow.pop %v2416
          %v2418 = vmul.f32 %v2262, 1.442695
          %v2419 = vpow.pop %v2418
          %v2420 = vmul.f32 %v2263, 1.442695
          %v2421 = vpow.pop %v2420
          %v2422 = vmul.f32 %v2264, 1.442695
          %v2423 = vpow.pop %v2422
          %v2424 = vmul.f32 %v2265, 1.442695
          %v2425 = vpow.pop %v2424
          %v2426 = vmul.f32 %v2266, 1.442695
          %v2427 = vpow.pop %v2426
          %v2428 = vmul.f32 %v2267, 1.442695
          %v2429 = vpow.pop %v2428
          %v2430 = vmul.f32 %v2268, 1.442695
          %v2431 = vpow.pop %v2430
          %v2432 = vmul.f32 %v2269, 1.442695
          %v2433 = vpow.pop %v2432
          %v2434 = vmul.f32 %v2270, 1.442695
          %v2435 = vpow.pop %v2434
          %v2436 = vmul.f32 %v2271, 1.442695
          %v2437 = vpow.pop %v2436
          %v2438 = vmul.f32 %v2272, 1.442695
          %v2439 = vpow.pop %v2438
          %v2440 = vmul.f32 %v2273, 1.442695
          %v2441 = vpow.pop %v2440
          %v2442 = vmul.f32 %v2274, 1.442695
          %v2443 = vpow.pop %v2442
          %v2444 = vmul.f32 %v2275, 1.442695
          %v2445 = vpow.pop %v2444
          %v2446 = vmul.f32 %v2276, 1.442695
          %v2447 = vpow.pop %v2446
          %v2448 = vmul.f32 %v2277, 1.442695
          %v2449 = vpow.pop %v2448
          %v2450 = vmul.f32 %v2278, 1.442695
          %v2451 = vpow.pop %v2450
          %v2452 = vmul.f32 %v2279, 1.442695
          %v2453 = vpow.pop %v2452
          %v2454 = vmul.f32 %v2280, 1.442695
          %v2455 = vpow.pop %v2454
          %v2456 = vmul.f32 %v2281, 1.442695
          %v2457 = vpow.pop %v2456
          %v2458 = vmul.f32 %v2282, 1.442695
          %v2459 = vpow.pop %v2458
          %v2460 = vmul.f32 %v2283, 1.442695
          %v2461 = vpow.pop %v2460
          %v2462 = vmul.f32 %v2284, 1.442695
          %v2463 = vpow.pop %v2462
          %v2464 = vmul.f32 %v2285, 1.442695
          %v2465 = vpow.pop %v2464
          %v2466 = vmul.f32 %v2286, 1.442695
          %v2467 = vpow.pop %v2466
          %v2468 = vmul.f32 %v2287, 1.442695
          %v2469 = vpow.pop %v2468
          %v2470 = vmul.f32 %v2288, 1.442695
          %v2471 = vpow.pop %v2470
          %v2472 = vmul.f32 %v2289, 1.442695
          %v2473 = vpow.pop %v2472
          %v2474 = vmul.f32 %v2290, 1.442695
          %v2475 = vpow.pop %v2474
          %v2476 = vmul.f32 %v2291, 1.442695
          %v2477 = vpow.pop %v2476
          %v2478 = vmul.f32 %v2292, 1.442695
          %v2479 = vpow.pop %v2478
          %v2480 = vmul.f32 %v2293, 1.442695
          %v2481 = vpow.pop %v2480
          %v2482 = vmul.f32 %v2294, 1.442695
          %v2483 = vpow.pop %v2482
          %v2484 = vmul.f32 %v2295, 1.442695
          %v2485 = vpow.pop %v2484
          %v2486 = vmul.f32 %v2296, 1.442695
          %v2487 = vpow.pop %v2486
          %v2488 = vmul.f32 %v2297, 1.442695
          %v2489 = vpow.pop %v2488
          %v2490 = vadd.f32 %v2299, 1.0
          %v2491 = vadd.f32 %v2301, 1.0
          %v2492 = vadd.f32 %v2303, 1.0
          %v2493 = vadd.f32 %v2305, 1.0
          %v2494 = vadd.f32 %v2307, 1.0
          %v2495 = vadd.f32 %v2309, 1.0
          %v2496 = vadd.f32 %v2311, 1.0
          %v2497 = vadd.f32 %v2313, 1.0
          %v2498 = vadd.f32 %v2315, 1.0
          %v2499 = vadd.f32 %v2317, 1.0
          %v2500 = vadd.f32 %v2319, 1.0
          %v2501 = vadd.f32 %v2321, 1.0
          %v2502 = vadd.f32 %v2323, 1.0
          %v2503 = vadd.f32 %v2325, 1.0
          %v2504 = vadd.f32 %v2327, 1.0
          %v2505 = vadd.f32 %v2329, 1.0
          %v2506 = vadd.f32 %v2331, 1.0
          %v2507 = vadd.f32 %v2333, 1.0
          %v2508 = vadd.f32 %v2335, 1.0
          %v2509 = vadd.f32 %v2337, 1.0
          %v2510 = vadd.f32 %v2339, 1.0
          %v2511 = vadd.f32 %v2341, 1.0
          %v2512 = vadd.f32 %v2343, 1.0
          %v2513 = vadd.f32 %v2345, 1.0
          %v2514 = vadd.f32 %v2347, 1.0
          %v2515 = vadd.f32 %v2349, 1.0
          %v2516 = vadd.f32 %v2351, 1.0
          %v2517 = vadd.f32 %v2353, 1.0
          %v2518 = vadd.f32 %v2355, 1.0
          %v2519 = vadd.f32 %v2357, 1.0
          %v2520 = vadd.f32 %v2359, 1.0
          %v2521 = vadd.f32 %v2361, 1.0
          %v2522 = vadd.f32 %v2363, 1.0
          %v2523 = vadd.f32 %v2365, 1.0
          %v2524 = vadd.f32 %v2367, 1.0
          %v2525 = vadd.f32 %v2369, 1.0
          %v2526 = vadd.f32 %v2371, 1.0
          %v2527 = vadd.f32 %v2373, 1.0
          %v2528 = vadd.f32 %v2375, 1.0
          %v2529 = vadd.f32 %v2377, 1.0
          %v2530 = vadd.f32 %v2379, 1.0
          %v2531 = vadd.f32 %v2381, 1.0
          %v2532 = vadd.f32 %v2383, 1.0
          %v2533 = vadd.f32 %v2385, 1.0
          %v2534 = vadd.f32 %v2387, 1.0
          %v2535 = vadd.f32 %v2389, 1.0
          %v2536 = vadd.f32 %v2391, 1.0
          %v2537 = vadd.f32 %v2393, 1.0
          %v2538 = vadd.f32 %v2395, 1.0
          %v2539 = vadd.f32 %v2397, 1.0
          %v2540 = vadd.f32 %v2399, 1.0
          %v2541 = vadd.f32 %v2401, 1.0
          %v2542 = vadd.f32 %v2403, 1.0
          %v2543 = vadd.f32 %v2405, 1.0
          %v2544 = vadd.f32 %v2407, 1.0
          %v2545 = vadd.f32 %v2409, 1.0
          %v2546 = vadd.f32 %v2411, 1.0
          %v2547 = vadd.f32 %v2413, 1.0
          %v2548 = vadd.f32 %v2415, 1.0
          %v2549 = vadd.f32 %v2417, 1.0
          %v2550 = vadd.f32 %v2419, 1.0
          %v2551 = vadd.f32 %v2421, 1.0
          %v2552 = vadd.f32 %v2423, 1.0
          %v2553 = vadd.f32 %v2425, 1.0
          %v2554 = vadd.f32 %v2427, 1.0
          %v2555 = vadd.f32 %v2429, 1.0
          %v2556 = vadd.f32 %v2431, 1.0
          %v2557 = vadd.f32 %v2433, 1.0
          %v2558 = vadd.f32 %v2435, 1.0
          %v2559 = vadd.f32 %v2437, 1.0
          %v2560 = vadd.f32 %v2439, 1.0
          %v2561 = vadd.f32 %v2441, 1.0
          %v2562 = vadd.f32 %v2443, 1.0
          %v2563 = vadd.f32 %v2445, 1.0
          %v2564 = vadd.f32 %v2447, 1.0
          %v2565 = vadd.f32 %v2449, 1.0
          %v2566 = vadd.f32 %v2451, 1.0
          %v2567 = vadd.f32 %v2453, 1.0
          %v2568 = vadd.f32 %v2455, 1.0
          %v2569 = vadd.f32 %v2457, 1.0
          %v2570 = vadd.f32 %v2459, 1.0
          %v2571 = vadd.f32 %v2461, 1.0
          %v2572 = vadd.f32 %v2463, 1.0
          %v2573 = vadd.f32 %v2465, 1.0
          %v2574 = vadd.f32 %v2467, 1.0
          %v2575 = vadd.f32 %v2469, 1.0
          %v2576 = vadd.f32 %v2471, 1.0
          %v2577 = vadd.f32 %v2473, 1.0
          %v2578 = vadd.f32 %v2475, 1.0
          %v2579 = vadd.f32 %v2477, 1.0
          %v2580 = vadd.f32 %v2479, 1.0
          %v2581 = vadd.f32 %v2481, 1.0
          %v2582 = vadd.f32 %v2483, 1.0
          %v2583 = vadd.f32 %v2485, 1.0
          %v2584 = vadd.f32 %v2487, 1.0
          %v2585 = vadd.f32 %v2489, 1.0
          %v2586 = vrcp.pop %v2490
          %v2587 = vmul.f32 %v2490, %v2586
          %v2588 = vsub.f32 1.0, %v2587
          %v2589 = vmul.f32 %v2586, %v2588
          %v2590 = vadd.f32 %v2586, %v2589
          %vm2591 = vweird.f32 %v2490
          %vm2592 = vweird.f32 %v2586
          %vm2593 = vmor %vm2591, %vm2592
          %v2594 = vsel %vm2593, %v2586, %v2590
          %v2595 = vand.u32 2147483647, %v2490
          %vm2596 = vcmp.eq.f32.partialorder %v2595, 8.507059e+37
          %v2597 = vand.u32 %v2490, 2147483648
          %v2598 = vor.u32 1.1754944e-38, %v2597
          %v2599 = vsel %vm2596, %v2598, %v2594
          %v2600 = vmul.f32 1.0, %v2599
          %v2601 = vrcp.pop %v2491
          %v2602 = vmul.f32 %v2491, %v2601
          %v2603 = vsub.f32 1.0, %v2602
          %v2604 = vmul.f32 %v2601, %v2603
          %v2605 = vadd.f32 %v2601, %v2604
          %vm2606 = vweird.f32 %v2491
          %vm2607 = vweird.f32 %v2601
          %vm2608 = vmor %vm2606, %vm2607
          %v2609 = vsel %vm2608, %v2601, %v2605
          %v2610 = vand.u32 2147483647, %v2491
          %vm2611 = vcmp.eq.f32.partialorder %v2610, 8.507059e+37
          %v2612 = vand.u32 %v2491, 2147483648
          %v2613 = vor.u32 1.1754944e-38, %v2612
          %v2614 = vsel %vm2611, %v2613, %v2609
          %v2615 = vmul.f32 1.0, %v2614
          %v2616 = vrcp.pop %v2492
          %v2617 = vmul.f32 %v2492, %v2616
          %v2618 = vsub.f32 1.0, %v2617
          %v2619 = vmul.f32 %v2616, %v2618
          %v2620 = vadd.f32 %v2616, %v2619
          %vm2621 = vweird.f32 %v2492
          %vm2622 = vweird.f32 %v2616
          %vm2623 = vmor %vm2621, %vm2622
          %v2624 = vsel %vm2623, %v2616, %v2620
          %v2625 = vand.u32 2147483647, %v2492
          %vm2626 = vcmp.eq.f32.partialorder %v2625, 8.507059e+37
          %v2627 = vand.u32 %v2492, 2147483648
          %v2628 = vor.u32 1.1754944e-38, %v2627
          %v2629 = vsel %vm2626, %v2628, %v2624
          %v2630 = vmul.f32 1.0, %v2629
          %v2631 = vrcp.pop %v2493
          %v2632 = vmul.f32 %v2493, %v2631
          %v2633 = vsub.f32 1.0, %v2632
          %v2634 = vmul.f32 %v2631, %v2633
          %v2635 = vadd.f32 %v2631, %v2634
          %vm2636 = vweird.f32 %v2493
          %vm2637 = vweird.f32 %v2631
          %vm2638 = vmor %vm2636, %vm2637
          %v2639 = vsel %vm2638, %v2631, %v2635
          %v2640 = vand.u32 2147483647, %v2493
          %vm2641 = vcmp.eq.f32.partialorder %v2640, 8.507059e+37
          %v2642 = vand.u32 %v2493, 2147483648
          %v2643 = vor.u32 1.1754944e-38, %v2642
          %v2644 = vsel %vm2641, %v2643, %v2639
          %v2645 = vmul.f32 1.0, %v2644
          %v2646 = vrcp.pop %v2494
          %v2647 = vmul.f32 %v2494, %v2646
          %v2648 = vsub.f32 1.0, %v2647
          %v2649 = vmul.f32 %v2646, %v2648
          %v2650 = vadd.f32 %v2646, %v2649
          %vm2651 = vweird.f32 %v2494
          %vm2652 = vweird.f32 %v2646
          %vm2653 = vmor %vm2651, %vm2652
          %v2654 = vsel %vm2653, %v2646, %v2650
          %v2655 = vand.u32 2147483647, %v2494
          %vm2656 = vcmp.eq.f32.partialorder %v2655, 8.507059e+37
          %v2657 = vand.u32 %v2494, 2147483648
          %v2658 = vor.u32 1.1754944e-38, %v2657
          %v2659 = vsel %vm2656, %v2658, %v2654
          %v2660 = vmul.f32 1.0, %v2659
          %v2661 = vrcp.pop %v2495
          %v2662 = vmul.f32 %v2495, %v2661
          %v2663 = vsub.f32 1.0, %v2662
          %v2664 = vmul.f32 %v2661, %v2663
          %v2665 = vadd.f32 %v2661, %v2664
          %vm2666 = vweird.f32 %v2495
          %vm2667 = vweird.f32 %v2661
          %vm2668 = vmor %vm2666, %vm2667
          %v2669 = vsel %vm2668, %v2661, %v2665
          %v2670 = vand.u32 2147483647, %v2495
          %vm2671 = vcmp.eq.f32.partialorder %v2670, 8.507059e+37
          %v2672 = vand.u32 %v2495, 2147483648
          %v2673 = vor.u32 1.1754944e-38, %v2672
          %v2674 = vsel %vm2671, %v2673, %v2669
          %v2675 = vmul.f32 1.0, %v2674
          %v2676 = vrcp.pop %v2496
          %v2677 = vmul.f32 %v2496, %v2676
          %v2678 = vsub.f32 1.0, %v2677
          %v2679 = vmul.f32 %v2676, %v2678
          %v2680 = vadd.f32 %v2676, %v2679
          %vm2681 = vweird.f32 %v2496
          %vm2682 = vweird.f32 %v2676
          %vm2683 = vmor %vm2681, %vm2682
          %v2684 = vsel %vm2683, %v2676, %v2680
          %v2685 = vand.u32 2147483647, %v2496
          %vm2686 = vcmp.eq.f32.partialorder %v2685, 8.507059e+37
          %v2687 = vand.u32 %v2496, 2147483648
          %v2688 = vor.u32 1.1754944e-38, %v2687
          %v2689 = vsel %vm2686, %v2688, %v2684
          %v2690 = vmul.f32 1.0, %v2689
          %v2691 = vrcp.pop %v2497
          %v2692 = vmul.f32 %v2497, %v2691
          %v2693 = vsub.f32 1.0, %v2692
          %v2694 = vmul.f32 %v2691, %v2693
          %v2695 = vadd.f32 %v2691, %v2694
          %vm2696 = vweird.f32 %v2497
          %vm2697 = vweird.f32 %v2691
          %vm2698 = vmor %vm2696, %vm2697
          %v2699 = vsel %vm2698, %v2691, %v2695
          %v2700 = vand.u32 2147483647, %v2497
          %vm2701 = vcmp.eq.f32.partialorder %v2700, 8.507059e+37
          %v2702 = vand.u32 %v2497, 2147483648
          %v2703 = vor.u32 1.1754944e-38, %v2702
          %v2704 = vsel %vm2701, %v2703, %v2699
          %v2705 = vmul.f32 1.0, %v2704
          %v2706 = vrcp.pop %v2498
          %v2707 = vmul.f32 %v2498, %v2706
          %v2708 = vsub.f32 1.0, %v2707
          %v2709 = vmul.f32 %v2706, %v2708
          %v2710 = vadd.f32 %v2706, %v2709
          %vm2711 = vweird.f32 %v2498
          %vm2712 = vweird.f32 %v2706
          %vm2713 = vmor %vm2711, %vm2712
          %v2714 = vsel %vm2713, %v2706, %v2710
          %v2715 = vand.u32 2147483647, %v2498
          %vm2716 = vcmp.eq.f32.partialorder %v2715, 8.507059e+37
          %v2717 = vand.u32 %v2498, 2147483648
          %v2718 = vor.u32 1.1754944e-38, %v2717
          %v2719 = vsel %vm2716, %v2718, %v2714
          %v2720 = vmul.f32 1.0, %v2719
          %v2721 = vrcp.pop %v2499
          %v2722 = vmul.f32 %v2499, %v2721
          %v2723 = vsub.f32 1.0, %v2722
          %v2724 = vmul.f32 %v2721, %v2723
          %v2725 = vadd.f32 %v2721, %v2724
          %vm2726 = vweird.f32 %v2499
          %vm2727 = vweird.f32 %v2721
          %vm2728 = vmor %vm2726, %vm2727
          %v2729 = vsel %vm2728, %v2721, %v2725
          %v2730 = vand.u32 2147483647, %v2499
          %vm2731 = vcmp.eq.f32.partialorder %v2730, 8.507059e+37
          %v2732 = vand.u32 %v2499, 2147483648
          %v2733 = vor.u32 1.1754944e-38, %v2732
          %v2734 = vsel %vm2731, %v2733, %v2729
          %v2735 = vmul.f32 1.0, %v2734
          %v2736 = vrcp.pop %v2500
          %v2737 = vmul.f32 %v2500, %v2736
          %v2738 = vsub.f32 1.0, %v2737
          %v2739 = vmul.f32 %v2736, %v2738
          %v2740 = vadd.f32 %v2736, %v2739
          %vm2741 = vweird.f32 %v2500
          %vm2742 = vweird.f32 %v2736
          %vm2743 = vmor %vm2741, %vm2742
          %v2744 = vsel %vm2743, %v2736, %v2740
          %v2745 = vand.u32 2147483647, %v2500
          %vm2746 = vcmp.eq.f32.partialorder %v2745, 8.507059e+37
          %v2747 = vand.u32 %v2500, 2147483648
          %v2748 = vor.u32 1.1754944e-38, %v2747
          %v2749 = vsel %vm2746, %v2748, %v2744
          %v2750 = vmul.f32 1.0, %v2749
          %v2751 = vrcp.pop %v2501
          %v2752 = vmul.f32 %v2501, %v2751
          %v2753 = vsub.f32 1.0, %v2752
          %v2754 = vmul.f32 %v2751, %v2753
          %v2755 = vadd.f32 %v2751, %v2754
          %vm2756 = vweird.f32 %v2501
          %vm2757 = vweird.f32 %v2751
          %vm2758 = vmor %vm2756, %vm2757
          %v2759 = vsel %vm2758, %v2751, %v2755
          %v2760 = vand.u32 2147483647, %v2501
          %vm2761 = vcmp.eq.f32.partialorder %v2760, 8.507059e+37
          %v2762 = vand.u32 %v2501, 2147483648
          %v2763 = vor.u32 1.1754944e-38, %v2762
          %v2764 = vsel %vm2761, %v2763, %v2759
          %v2765 = vmul.f32 1.0, %v2764
          %v2766 = vrcp.pop %v2502
          %v2767 = vmul.f32 %v2502, %v2766
          %v2768 = vsub.f32 1.0, %v2767
          %v2769 = vmul.f32 %v2766, %v2768
          %v2770 = vadd.f32 %v2766, %v2769
          %vm2771 = vweird.f32 %v2502
          %vm2772 = vweird.f32 %v2766
          %vm2773 = vmor %vm2771, %vm2772
          %v2774 = vsel %vm2773, %v2766, %v2770
          %v2775 = vand.u32 2147483647, %v2502
          %vm2776 = vcmp.eq.f32.partialorder %v2775, 8.507059e+37
          %v2777 = vand.u32 %v2502, 2147483648
          %v2778 = vor.u32 1.1754944e-38, %v2777
          %v2779 = vsel %vm2776, %v2778, %v2774
          %v2780 = vmul.f32 1.0, %v2779
          %v2781 = vrcp.pop %v2503
          %v2782 = vmul.f32 %v2503, %v2781
          %v2783 = vsub.f32 1.0, %v2782
          %v2784 = vmul.f32 %v2781, %v2783
          %v2785 = vadd.f32 %v2781, %v2784
          %vm2786 = vweird.f32 %v2503
          %vm2787 = vweird.f32 %v2781
          %vm2788 = vmor %vm2786, %vm2787
          %v2789 = vsel %vm2788, %v2781, %v2785
          %v2790 = vand.u32 2147483647, %v2503
          %vm2791 = vcmp.eq.f32.partialorder %v2790, 8.507059e+37
          %v2792 = vand.u32 %v2503, 2147483648
          %v2793 = vor.u32 1.1754944e-38, %v2792
          %v2794 = vsel %vm2791, %v2793, %v2789
          %v2795 = vmul.f32 1.0, %v2794
          %v2796 = vrcp.pop %v2504
          %v2797 = vmul.f32 %v2504, %v2796
          %v2798 = vsub.f32 1.0, %v2797
          %v2799 = vmul.f32 %v2796, %v2798
          %v2800 = vadd.f32 %v2796, %v2799
          %vm2801 = vweird.f32 %v2504
          %vm2802 = vweird.f32 %v2796
          %vm2803 = vmor %vm2801, %vm2802
          %v2804 = vsel %vm2803, %v2796, %v2800
          %v2805 = vand.u32 2147483647, %v2504
          %vm2806 = vcmp.eq.f32.partialorder %v2805, 8.507059e+37
          %v2807 = vand.u32 %v2504, 2147483648
          %v2808 = vor.u32 1.1754944e-38, %v2807
          %v2809 = vsel %vm2806, %v2808, %v2804
          %v2810 = vmul.f32 1.0, %v2809
          %v2811 = vrcp.pop %v2505
          %v2812 = vmul.f32 %v2505, %v2811
          %v2813 = vsub.f32 1.0, %v2812
          %v2814 = vmul.f32 %v2811, %v2813
          %v2815 = vadd.f32 %v2811, %v2814
          %vm2816 = vweird.f32 %v2505
          %vm2817 = vweird.f32 %v2811
          %vm2818 = vmor %vm2816, %vm2817
          %v2819 = vsel %vm2818, %v2811, %v2815
          %v2820 = vand.u32 2147483647, %v2505
          %vm2821 = vcmp.eq.f32.partialorder %v2820, 8.507059e+37
          %v2822 = vand.u32 %v2505, 2147483648
          %v2823 = vor.u32 1.1754944e-38, %v2822
          %v2824 = vsel %vm2821, %v2823, %v2819
          %v2825 = vmul.f32 1.0, %v2824
          %v2826 = vrcp.pop %v2506
          %v2827 = vmul.f32 %v2506, %v2826
          %v2828 = vsub.f32 1.0, %v2827
          %v2829 = vmul.f32 %v2826, %v2828
          %v2830 = vadd.f32 %v2826, %v2829
          %vm2831 = vweird.f32 %v2506
          %vm2832 = vweird.f32 %v2826
          %vm2833 = vmor %vm2831, %vm2832
          %v2834 = vsel %vm2833, %v2826, %v2830
          %v2835 = vand.u32 2147483647, %v2506
          %vm2836 = vcmp.eq.f32.partialorder %v2835, 8.507059e+37
          %v2837 = vand.u32 %v2506, 2147483648
          %v2838 = vor.u32 1.1754944e-38, %v2837
          %v2839 = vsel %vm2836, %v2838, %v2834
          %v2840 = vmul.f32 1.0, %v2839
          %v2841 = vrcp.pop %v2507
          %v2842 = vmul.f32 %v2507, %v2841
          %v2843 = vsub.f32 1.0, %v2842
          %v2844 = vmul.f32 %v2841, %v2843
          %v2845 = vadd.f32 %v2841, %v2844
          %vm2846 = vweird.f32 %v2507
          %vm2847 = vweird.f32 %v2841
          %vm2848 = vmor %vm2846, %vm2847
          %v2849 = vsel %vm2848, %v2841, %v2845
          %v2850 = vand.u32 2147483647, %v2507
          %vm2851 = vcmp.eq.f32.partialorder %v2850, 8.507059e+37
          %v2852 = vand.u32 %v2507, 2147483648
          %v2853 = vor.u32 1.1754944e-38, %v2852
          %v2854 = vsel %vm2851, %v2853, %v2849
          %v2855 = vmul.f32 1.0, %v2854
          %v2856 = vrcp.pop %v2508
          %v2857 = vmul.f32 %v2508, %v2856
          %v2858 = vsub.f32 1.0, %v2857
          %v2859 = vmul.f32 %v2856, %v2858
          %v2860 = vadd.f32 %v2856, %v2859
          %vm2861 = vweird.f32 %v2508
          %vm2862 = vweird.f32 %v2856
          %vm2863 = vmor %vm2861, %vm2862
          %v2864 = vsel %vm2863, %v2856, %v2860
          %v2865 = vand.u32 2147483647, %v2508
          %vm2866 = vcmp.eq.f32.partialorder %v2865, 8.507059e+37
          %v2867 = vand.u32 %v2508, 2147483648
          %v2868 = vor.u32 1.1754944e-38, %v2867
          %v2869 = vsel %vm2866, %v2868, %v2864
          %v2870 = vmul.f32 1.0, %v2869
          %v2871 = vrcp.pop %v2509
          %v2872 = vmul.f32 %v2509, %v2871
          %v2873 = vsub.f32 1.0, %v2872
          %v2874 = vmul.f32 %v2871, %v2873
          %v2875 = vadd.f32 %v2871, %v2874
          %vm2876 = vweird.f32 %v2509
          %vm2877 = vweird.f32 %v2871
          %vm2878 = vmor %vm2876, %vm2877
          %v2879 = vsel %vm2878, %v2871, %v2875
          %v2880 = vand.u32 2147483647, %v2509
          %vm2881 = vcmp.eq.f32.partialorder %v2880, 8.507059e+37
          %v2882 = vand.u32 %v2509, 2147483648
          %v2883 = vor.u32 1.1754944e-38, %v2882
          %v2884 = vsel %vm2881, %v2883, %v2879
          %v2885 = vmul.f32 1.0, %v2884
          %v2886 = vrcp.pop %v2510
          %v2887 = vmul.f32 %v2510, %v2886
          %v2888 = vsub.f32 1.0, %v2887
          %v2889 = vmul.f32 %v2886, %v2888
          %v2890 = vadd.f32 %v2886, %v2889
          %vm2891 = vweird.f32 %v2510
          %vm2892 = vweird.f32 %v2886
          %vm2893 = vmor %vm2891, %vm2892
          %v2894 = vsel %vm2893, %v2886, %v2890
          %v2895 = vand.u32 2147483647, %v2510
          %vm2896 = vcmp.eq.f32.partialorder %v2895, 8.507059e+37
          %v2897 = vand.u32 %v2510, 2147483648
          %v2898 = vor.u32 1.1754944e-38, %v2897
          %v2899 = vsel %vm2896, %v2898, %v2894
          %v2900 = vmul.f32 1.0, %v2899
          %v2901 = vrcp.pop %v2511
          %v2902 = vmul.f32 %v2511, %v2901
          %v2903 = vsub.f32 1.0, %v2902
          %v2904 = vmul.f32 %v2901, %v2903
          %v2905 = vadd.f32 %v2901, %v2904
          %vm2906 = vweird.f32 %v2511
          %vm2907 = vweird.f32 %v2901
          %vm2908 = vmor %vm2906, %vm2907
          %v2909 = vsel %vm2908, %v2901, %v2905
          %v2910 = vand.u32 2147483647, %v2511
          %vm2911 = vcmp.eq.f32.partialorder %v2910, 8.507059e+37
          %v2912 = vand.u32 %v2511, 2147483648
          %v2913 = vor.u32 1.1754944e-38, %v2912
          %v2914 = vsel %vm2911, %v2913, %v2909
          %v2915 = vmul.f32 1.0, %v2914
          %v2916 = vrcp.pop %v2512
          %v2917 = vmul.f32 %v2512, %v2916
          %v2918 = vsub.f32 1.0, %v2917
          %v2919 = vmul.f32 %v2916, %v2918
          %v2920 = vadd.f32 %v2916, %v2919
          %vm2921 = vweird.f32 %v2512
          %vm2922 = vweird.f32 %v2916
          %vm2923 = vmor %vm2921, %vm2922
          %v2924 = vsel %vm2923, %v2916, %v2920
          %v2925 = vand.u32 2147483647, %v2512
          %vm2926 = vcmp.eq.f32.partialorder %v2925, 8.507059e+37
          %v2927 = vand.u32 %v2512, 2147483648
          %v2928 = vor.u32 1.1754944e-38, %v2927
          %v2929 = vsel %vm2926, %v2928, %v2924
          %v2930 = vmul.f32 1.0, %v2929
          %v2931 = vrcp.pop %v2513
          %v2932 = vmul.f32 %v2513, %v2931
          %v2933 = vsub.f32 1.0, %v2932
          %v2934 = vmul.f32 %v2931, %v2933
          %v2935 = vadd.f32 %v2931, %v2934
          %vm2936 = vweird.f32 %v2513
          %vm2937 = vweird.f32 %v2931
          %vm2938 = vmor %vm2936, %vm2937
          %v2939 = vsel %vm2938, %v2931, %v2935
          %v2940 = vand.u32 2147483647, %v2513
          %vm2941 = vcmp.eq.f32.partialorder %v2940, 8.507059e+37
          %v2942 = vand.u32 %v2513, 2147483648
          %v2943 = vor.u32 1.1754944e-38, %v2942
          %v2944 = vsel %vm2941, %v2943, %v2939
          %v2945 = vmul.f32 1.0, %v2944
          %v2946 = vrcp.pop %v2514
          %v2947 = vmul.f32 %v2514, %v2946
          %v2948 = vsub.f32 1.0, %v2947
          %v2949 = vmul.f32 %v2946, %v2948
          %v2950 = vadd.f32 %v2946, %v2949
          %vm2951 = vweird.f32 %v2514
          %vm2952 = vweird.f32 %v2946
          %vm2953 = vmor %vm2951, %vm2952
          %v2954 = vsel %vm2953, %v2946, %v2950
          %v2955 = vand.u32 2147483647, %v2514
          %vm2956 = vcmp.eq.f32.partialorder %v2955, 8.507059e+37
          %v2957 = vand.u32 %v2514, 2147483648
          %v2958 = vor.u32 1.1754944e-38, %v2957
          %v2959 = vsel %vm2956, %v2958, %v2954
          %v2960 = vmul.f32 1.0, %v2959
          %v2961 = vrcp.pop %v2515
          %v2962 = vmul.f32 %v2515, %v2961
          %v2963 = vsub.f32 1.0, %v2962
          %v2964 = vmul.f32 %v2961, %v2963
          %v2965 = vadd.f32 %v2961, %v2964
          %vm2966 = vweird.f32 %v2515
          %vm2967 = vweird.f32 %v2961
          %vm2968 = vmor %vm2966, %vm2967
          %v2969 = vsel %vm2968, %v2961, %v2965
          %v2970 = vand.u32 2147483647, %v2515
          %vm2971 = vcmp.eq.f32.partialorder %v2970, 8.507059e+37
          %v2972 = vand.u32 %v2515, 2147483648
          %v2973 = vor.u32 1.1754944e-38, %v2972
          %v2974 = vsel %vm2971, %v2973, %v2969
          %v2975 = vmul.f32 1.0, %v2974
          %v2976 = vrcp.pop %v2516
          %v2977 = vmul.f32 %v2516, %v2976
          %v2978 = vsub.f32 1.0, %v2977
          %v2979 = vmul.f32 %v2976, %v2978
          %v2980 = vadd.f32 %v2976, %v2979
          %vm2981 = vweird.f32 %v2516
          %vm2982 = vweird.f32 %v2976
          %vm2983 = vmor %vm2981, %vm2982
          %v2984 = vsel %vm2983, %v2976, %v2980
          %v2985 = vand.u32 2147483647, %v2516
          %vm2986 = vcmp.eq.f32.partialorder %v2985, 8.507059e+37
          %v2987 = vand.u32 %v2516, 2147483648
          %v2988 = vor.u32 1.1754944e-38, %v2987
          %v2989 = vsel %vm2986, %v2988, %v2984
          %v2990 = vmul.f32 1.0, %v2989
          %v2991 = vrcp.pop %v2517
          %v2992 = vmul.f32 %v2517, %v2991
          %v2993 = vsub.f32 1.0, %v2992
          %v2994 = vmul.f32 %v2991, %v2993
          %v2995 = vadd.f32 %v2991, %v2994
          %vm2996 = vweird.f32 %v2517
          %vm2997 = vweird.f32 %v2991
          %vm2998 = vmor %vm2996, %vm2997
          %v2999 = vsel %vm2998, %v2991, %v2995
          %v3000 = vand.u32 2147483647, %v2517
          %vm3001 = vcmp.eq.f32.partialorder %v3000, 8.507059e+37
          %v3002 = vand.u32 %v2517, 2147483648
          %v3003 = vor.u32 1.1754944e-38, %v3002
          %v3004 = vsel %vm3001, %v3003, %v2999
          %v3005 = vmul.f32 1.0, %v3004
          %v3006 = vrcp.pop %v2518
          %v3007 = vmul.f32 %v2518, %v3006
          %v3008 = vsub.f32 1.0, %v3007
          %v3009 = vmul.f32 %v3006, %v3008
          %v3010 = vadd.f32 %v3006, %v3009
          %vm3011 = vweird.f32 %v2518
          %vm3012 = vweird.f32 %v3006
          %vm3013 = vmor %vm3011, %vm3012
          %v3014 = vsel %vm3013, %v3006, %v3010
          %v3015 = vand.u32 2147483647, %v2518
          %vm3016 = vcmp.eq.f32.partialorder %v3015, 8.507059e+37
          %v3017 = vand.u32 %v2518, 2147483648
          %v3018 = vor.u32 1.1754944e-38, %v3017
          %v3019 = vsel %vm3016, %v3018, %v3014
          %v3020 = vmul.f32 1.0, %v3019
          %v3021 = vrcp.pop %v2519
          %v3022 = vmul.f32 %v2519, %v3021
          %v3023 = vsub.f32 1.0, %v3022
          %v3024 = vmul.f32 %v3021, %v3023
          %v3025 = vadd.f32 %v3021, %v3024
          %vm3026 = vweird.f32 %v2519
          %vm3027 = vweird.f32 %v3021
          %vm3028 = vmor %vm3026, %vm3027
          %v3029 = vsel %vm3028, %v3021, %v3025
          %v3030 = vand.u32 2147483647, %v2519
          %vm3031 = vcmp.eq.f32.partialorder %v3030, 8.507059e+37
          %v3032 = vand.u32 %v2519, 2147483648
          %v3033 = vor.u32 1.1754944e-38, %v3032
          %v3034 = vsel %vm3031, %v3033, %v3029
          %v3035 = vmul.f32 1.0, %v3034
          %v3036 = vrcp.pop %v2520
          %v3037 = vmul.f32 %v2520, %v3036
          %v3038 = vsub.f32 1.0, %v3037
          %v3039 = vmul.f32 %v3036, %v3038
          %v3040 = vadd.f32 %v3036, %v3039
          %vm3041 = vweird.f32 %v2520
          %vm3042 = vweird.f32 %v3036
          %vm3043 = vmor %vm3041, %vm3042
          %v3044 = vsel %vm3043, %v3036, %v3040
          %v3045 = vand.u32 2147483647, %v2520
          %vm3046 = vcmp.eq.f32.partialorder %v3045, 8.507059e+37
          %v3047 = vand.u32 %v2520, 2147483648
          %v3048 = vor.u32 1.1754944e-38, %v3047
          %v3049 = vsel %vm3046, %v3048, %v3044
          %v3050 = vmul.f32 1.0, %v3049
          %v3051 = vrcp.pop %v2521
          %v3052 = vmul.f32 %v2521, %v3051
          %v3053 = vsub.f32 1.0, %v3052
          %v3054 = vmul.f32 %v3051, %v3053
          %v3055 = vadd.f32 %v3051, %v3054
          %vm3056 = vweird.f32 %v2521
          %vm3057 = vweird.f32 %v3051
          %vm3058 = vmor %vm3056, %vm3057
          %v3059 = vsel %vm3058, %v3051, %v3055
          %v3060 = vand.u32 2147483647, %v2521
          %vm3061 = vcmp.eq.f32.partialorder %v3060, 8.507059e+37
          %v3062 = vand.u32 %v2521, 2147483648
          %v3063 = vor.u32 1.1754944e-38, %v3062
          %v3064 = vsel %vm3061, %v3063, %v3059
          %v3065 = vmul.f32 1.0, %v3064
          %v3066 = vrcp.pop %v2522
          %v3067 = vmul.f32 %v2522, %v3066
          %v3068 = vsub.f32 1.0, %v3067
          %v3069 = vmul.f32 %v3066, %v3068
          %v3070 = vadd.f32 %v3066, %v3069
          %vm3071 = vweird.f32 %v2522
          %vm3072 = vweird.f32 %v3066
          %vm3073 = vmor %vm3071, %vm3072
          %v3074 = vsel %vm3073, %v3066, %v3070
          %v3075 = vand.u32 2147483647, %v2522
          %vm3076 = vcmp.eq.f32.partialorder %v3075, 8.507059e+37
          %v3077 = vand.u32 %v2522, 2147483648
          %v3078 = vor.u32 1.1754944e-38, %v3077
          %v3079 = vsel %vm3076, %v3078, %v3074
          %v3080 = vmul.f32 1.0, %v3079
          %v3081 = vrcp.pop %v2523
          %v3082 = vmul.f32 %v2523, %v3081
          %v3083 = vsub.f32 1.0, %v3082
          %v3084 = vmul.f32 %v3081, %v3083
          %v3085 = vadd.f32 %v3081, %v3084
          %vm3086 = vweird.f32 %v2523
          %vm3087 = vweird.f32 %v3081
          %vm3088 = vmor %vm3086, %vm3087
          %v3089 = vsel %vm3088, %v3081, %v3085
          %v3090 = vand.u32 2147483647, %v2523
          %vm3091 = vcmp.eq.f32.partialorder %v3090, 8.507059e+37
          %v3092 = vand.u32 %v2523, 2147483648
          %v3093 = vor.u32 1.1754944e-38, %v3092
          %v3094 = vsel %vm3091, %v3093, %v3089
          %v3095 = vmul.f32 1.0, %v3094
          %v3096 = vrcp.pop %v2524
          %v3097 = vmul.f32 %v2524, %v3096
          %v3098 = vsub.f32 1.0, %v3097
          %v3099 = vmul.f32 %v3096, %v3098
          %v3100 = vadd.f32 %v3096, %v3099
          %vm3101 = vweird.f32 %v2524
          %vm3102 = vweird.f32 %v3096
          %vm3103 = vmor %vm3101, %vm3102
          %v3104 = vsel %vm3103, %v3096, %v3100
          %v3105 = vand.u32 2147483647, %v2524
          %vm3106 = vcmp.eq.f32.partialorder %v3105, 8.507059e+37
          %v3107 = vand.u32 %v2524, 2147483648
          %v3108 = vor.u32 1.1754944e-38, %v3107
          %v3109 = vsel %vm3106, %v3108, %v3104
          %v3110 = vmul.f32 1.0, %v3109
          %v3111 = vrcp.pop %v2525
          %v3112 = vmul.f32 %v2525, %v3111
          %v3113 = vsub.f32 1.0, %v3112
          %v3114 = vmul.f32 %v3111, %v3113
          %v3115 = vadd.f32 %v3111, %v3114
          %vm3116 = vweird.f32 %v2525
          %vm3117 = vweird.f32 %v3111
          %vm3118 = vmor %vm3116, %vm3117
          %v3119 = vsel %vm3118, %v3111, %v3115
          %v3120 = vand.u32 2147483647, %v2525
          %vm3121 = vcmp.eq.f32.partialorder %v3120, 8.507059e+37
          %v3122 = vand.u32 %v2525, 2147483648
          %v3123 = vor.u32 1.1754944e-38, %v3122
          %v3124 = vsel %vm3121, %v3123, %v3119
          %v3125 = vmul.f32 1.0, %v3124
          %v3126 = vrcp.pop %v2526
          %v3127 = vmul.f32 %v2526, %v3126
          %v3128 = vsub.f32 1.0, %v3127
          %v3129 = vmul.f32 %v3126, %v3128
          %v3130 = vadd.f32 %v3126, %v3129
          %vm3131 = vweird.f32 %v2526
          %vm3132 = vweird.f32 %v3126
          %vm3133 = vmor %vm3131, %vm3132
          %v3134 = vsel %vm3133, %v3126, %v3130
          %v3135 = vand.u32 2147483647, %v2526
          %vm3136 = vcmp.eq.f32.partialorder %v3135, 8.507059e+37
          %v3137 = vand.u32 %v2526, 2147483648
          %v3138 = vor.u32 1.1754944e-38, %v3137
          %v3139 = vsel %vm3136, %v3138, %v3134
          %v3140 = vmul.f32 1.0, %v3139
          %v3141 = vrcp.pop %v2527
          %v3142 = vmul.f32 %v2527, %v3141
          %v3143 = vsub.f32 1.0, %v3142
          %v3144 = vmul.f32 %v3141, %v3143
          %v3145 = vadd.f32 %v3141, %v3144
          %vm3146 = vweird.f32 %v2527
          %vm3147 = vweird.f32 %v3141
          %vm3148 = vmor %vm3146, %vm3147
          %v3149 = vsel %vm3148, %v3141, %v3145
          %v3150 = vand.u32 2147483647, %v2527
          %vm3151 = vcmp.eq.f32.partialorder %v3150, 8.507059e+37
          %v3152 = vand.u32 %v2527, 2147483648
          %v3153 = vor.u32 1.1754944e-38, %v3152
          %v3154 = vsel %vm3151, %v3153, %v3149
          %v3155 = vmul.f32 1.0, %v3154
          %v3156 = vrcp.pop %v2528
          %v3157 = vmul.f32 %v2528, %v3156
          %v3158 = vsub.f32 1.0, %v3157
          %v3159 = vmul.f32 %v3156, %v3158
          %v3160 = vadd.f32 %v3156, %v3159
          %vm3161 = vweird.f32 %v2528
          %vm3162 = vweird.f32 %v3156
          %vm3163 = vmor %vm3161, %vm3162
          %v3164 = vsel %vm3163, %v3156, %v3160
          %v3165 = vand.u32 2147483647, %v2528
          %vm3166 = vcmp.eq.f32.partialorder %v3165, 8.507059e+37
          %v3167 = vand.u32 %v2528, 2147483648
          %v3168 = vor.u32 1.1754944e-38, %v3167
          %v3169 = vsel %vm3166, %v3168, %v3164
          %v3170 = vmul.f32 1.0, %v3169
          %v3171 = vrcp.pop %v2529
          %v3172 = vmul.f32 %v2529, %v3171
          %v3173 = vsub.f32 1.0, %v3172
          %v3174 = vmul.f32 %v3171, %v3173
          %v3175 = vadd.f32 %v3171, %v3174
          %vm3176 = vweird.f32 %v2529
          %vm3177 = vweird.f32 %v3171
          %vm3178 = vmor %vm3176, %vm3177
          %v3179 = vsel %vm3178, %v3171, %v3175
          %v3180 = vand.u32 2147483647, %v2529
          %vm3181 = vcmp.eq.f32.partialorder %v3180, 8.507059e+37
          %v3182 = vand.u32 %v2529, 2147483648
          %v3183 = vor.u32 1.1754944e-38, %v3182
          %v3184 = vsel %vm3181, %v3183, %v3179
          %v3185 = vmul.f32 1.0, %v3184
          %v3186 = vrcp.pop %v2530
          %v3187 = vmul.f32 %v2530, %v3186
          %v3188 = vsub.f32 1.0, %v3187
          %v3189 = vmul.f32 %v3186, %v3188
          %v3190 = vadd.f32 %v3186, %v3189
          %vm3191 = vweird.f32 %v2530
          %vm3192 = vweird.f32 %v3186
          %vm3193 = vmor %vm3191, %vm3192
          %v3194 = vsel %vm3193, %v3186, %v3190
          %v3195 = vand.u32 2147483647, %v2530
          %vm3196 = vcmp.eq.f32.partialorder %v3195, 8.507059e+37
          %v3197 = vand.u32 %v2530, 2147483648
          %v3198 = vor.u32 1.1754944e-38, %v3197
          %v3199 = vsel %vm3196, %v3198, %v3194
          %v3200 = vmul.f32 1.0, %v3199
          %v3201 = vrcp.pop %v2531
          %v3202 = vmul.f32 %v2531, %v3201
          %v3203 = vsub.f32 1.0, %v3202
          %v3204 = vmul.f32 %v3201, %v3203
          %v3205 = vadd.f32 %v3201, %v3204
          %vm3206 = vweird.f32 %v2531
          %vm3207 = vweird.f32 %v3201
          %vm3208 = vmor %vm3206, %vm3207
          %v3209 = vsel %vm3208, %v3201, %v3205
          %v3210 = vand.u32 2147483647, %v2531
          %vm3211 = vcmp.eq.f32.partialorder %v3210, 8.507059e+37
          %v3212 = vand.u32 %v2531, 2147483648
          %v3213 = vor.u32 1.1754944e-38, %v3212
          %v3214 = vsel %vm3211, %v3213, %v3209
          %v3215 = vmul.f32 1.0, %v3214
          %v3216 = vrcp.pop %v2532
          %v3217 = vmul.f32 %v2532, %v3216
          %v3218 = vsub.f32 1.0, %v3217
          %v3219 = vmul.f32 %v3216, %v3218
          %v3220 = vadd.f32 %v3216, %v3219
          %vm3221 = vweird.f32 %v2532
          %vm3222 = vweird.f32 %v3216
          %vm3223 = vmor %vm3221, %vm3222
          %v3224 = vsel %vm3223, %v3216, %v3220
          %v3225 = vand.u32 2147483647, %v2532
          %vm3226 = vcmp.eq.f32.partialorder %v3225, 8.507059e+37
          %v3227 = vand.u32 %v2532, 2147483648
          %v3228 = vor.u32 1.1754944e-38, %v3227
          %v3229 = vsel %vm3226, %v3228, %v3224
          %v3230 = vmul.f32 1.0, %v3229
          %v3231 = vrcp.pop %v2533
          %v3232 = vmul.f32 %v2533, %v3231
          %v3233 = vsub.f32 1.0, %v3232
          %v3234 = vmul.f32 %v3231, %v3233
          %v3235 = vadd.f32 %v3231, %v3234
          %vm3236 = vweird.f32 %v2533
          %vm3237 = vweird.f32 %v3231
          %vm3238 = vmor %vm3236, %vm3237
          %v3239 = vsel %vm3238, %v3231, %v3235
          %v3240 = vand.u32 2147483647, %v2533
          %vm3241 = vcmp.eq.f32.partialorder %v3240, 8.507059e+37
          %v3242 = vand.u32 %v2533, 2147483648
          %v3243 = vor.u32 1.1754944e-38, %v3242
          %v3244 = vsel %vm3241, %v3243, %v3239
          %v3245 = vmul.f32 1.0, %v3244
          %v3246 = vrcp.pop %v2534
          %v3247 = vmul.f32 %v2534, %v3246
          %v3248 = vsub.f32 1.0, %v3247
          %v3249 = vmul.f32 %v3246, %v3248
          %v3250 = vadd.f32 %v3246, %v3249
          %vm3251 = vweird.f32 %v2534
          %vm3252 = vweird.f32 %v3246
          %vm3253 = vmor %vm3251, %vm3252
          %v3254 = vsel %vm3253, %v3246, %v3250
          %v3255 = vand.u32 2147483647, %v2534
          %vm3256 = vcmp.eq.f32.partialorder %v3255, 8.507059e+37
          %v3257 = vand.u32 %v2534, 2147483648
          %v3258 = vor.u32 1.1754944e-38, %v3257
          %v3259 = vsel %vm3256, %v3258, %v3254
          %v3260 = vmul.f32 1.0, %v3259
          %v3261 = vrcp.pop %v2535
          %v3262 = vmul.f32 %v2535, %v3261
          %v3263 = vsub.f32 1.0, %v3262
          %v3264 = vmul.f32 %v3261, %v3263
          %v3265 = vadd.f32 %v3261, %v3264
          %vm3266 = vweird.f32 %v2535
          %vm3267 = vweird.f32 %v3261
          %vm3268 = vmor %vm3266, %vm3267
          %v3269 = vsel %vm3268, %v3261, %v3265
          %v3270 = vand.u32 2147483647, %v2535
          %vm3271 = vcmp.eq.f32.partialorder %v3270, 8.507059e+37
          %v3272 = vand.u32 %v2535, 2147483648
          %v3273 = vor.u32 1.1754944e-38, %v3272
          %v3274 = vsel %vm3271, %v3273, %v3269
          %v3275 = vmul.f32 1.0, %v3274
          %v3276 = vrcp.pop %v2536
          %v3277 = vmul.f32 %v2536, %v3276
          %v3278 = vsub.f32 1.0, %v3277
          %v3279 = vmul.f32 %v3276, %v3278
          %v3280 = vadd.f32 %v3276, %v3279
          %vm3281 = vweird.f32 %v2536
          %vm3282 = vweird.f32 %v3276
          %vm3283 = vmor %vm3281, %vm3282
          %v3284 = vsel %vm3283, %v3276, %v3280
          %v3285 = vand.u32 2147483647, %v2536
          %vm3286 = vcmp.eq.f32.partialorder %v3285, 8.507059e+37
          %v3287 = vand.u32 %v2536, 2147483648
          %v3288 = vor.u32 1.1754944e-38, %v3287
          %v3289 = vsel %vm3286, %v3288, %v3284
          %v3290 = vmul.f32 1.0, %v3289
          %v3291 = vrcp.pop %v2537
          %v3292 = vmul.f32 %v2537, %v3291
          %v3293 = vsub.f32 1.0, %v3292
          %v3294 = vmul.f32 %v3291, %v3293
          %v3295 = vadd.f32 %v3291, %v3294
          %vm3296 = vweird.f32 %v2537
          %vm3297 = vweird.f32 %v3291
          %vm3298 = vmor %vm3296, %vm3297
          %v3299 = vsel %vm3298, %v3291, %v3295
          %v3300 = vand.u32 2147483647, %v2537
          %vm3301 = vcmp.eq.f32.partialorder %v3300, 8.507059e+37
          %v3302 = vand.u32 %v2537, 2147483648
          %v3303 = vor.u32 1.1754944e-38, %v3302
          %v3304 = vsel %vm3301, %v3303, %v3299
          %v3305 = vmul.f32 1.0, %v3304
          %v3306 = vrcp.pop %v2538
          %v3307 = vmul.f32 %v2538, %v3306
          %v3308 = vsub.f32 1.0, %v3307
          %v3309 = vmul.f32 %v3306, %v3308
          %v3310 = vadd.f32 %v3306, %v3309
          %vm3311 = vweird.f32 %v2538
          %vm3312 = vweird.f32 %v3306
          %vm3313 = vmor %vm3311, %vm3312
          %v3314 = vsel %vm3313, %v3306, %v3310
          %v3315 = vand.u32 2147483647, %v2538
          %vm3316 = vcmp.eq.f32.partialorder %v3315, 8.507059e+37
          %v3317 = vand.u32 %v2538, 2147483648
          %v3318 = vor.u32 1.1754944e-38, %v3317
          %v3319 = vsel %vm3316, %v3318, %v3314
          %v3320 = vmul.f32 1.0, %v3319
          %v3321 = vrcp.pop %v2539
          %v3322 = vmul.f32 %v2539, %v3321
          %v3323 = vsub.f32 1.0, %v3322
          %v3324 = vmul.f32 %v3321, %v3323
          %v3325 = vadd.f32 %v3321, %v3324
          %vm3326 = vweird.f32 %v2539
          %vm3327 = vweird.f32 %v3321
          %vm3328 = vmor %vm3326, %vm3327
          %v3329 = vsel %vm3328, %v3321, %v3325
          %v3330 = vand.u32 2147483647, %v2539
          %vm3331 = vcmp.eq.f32.partialorder %v3330, 8.507059e+37
          %v3332 = vand.u32 %v2539, 2147483648
          %v3333 = vor.u32 1.1754944e-38, %v3332
          %v3334 = vsel %vm3331, %v3333, %v3329
          %v3335 = vmul.f32 1.0, %v3334
          %v3336 = vrcp.pop %v2540
          %v3337 = vmul.f32 %v2540, %v3336
          %v3338 = vsub.f32 1.0, %v3337
          %v3339 = vmul.f32 %v3336, %v3338
          %v3340 = vadd.f32 %v3336, %v3339
          %vm3341 = vweird.f32 %v2540
          %vm3342 = vweird.f32 %v3336
          %vm3343 = vmor %vm3341, %vm3342
          %v3344 = vsel %vm3343, %v3336, %v3340
          %v3345 = vand.u32 2147483647, %v2540
          %vm3346 = vcmp.eq.f32.partialorder %v3345, 8.507059e+37
          %v3347 = vand.u32 %v2540, 2147483648
          %v3348 = vor.u32 1.1754944e-38, %v3347
          %v3349 = vsel %vm3346, %v3348, %v3344
          %v3350 = vmul.f32 1.0, %v3349
          %v3351 = vrcp.pop %v2541
          %v3352 = vmul.f32 %v2541, %v3351
          %v3353 = vsub.f32 1.0, %v3352
          %v3354 = vmul.f32 %v3351, %v3353
          %v3355 = vadd.f32 %v3351, %v3354
          %vm3356 = vweird.f32 %v2541
          %vm3357 = vweird.f32 %v3351
          %vm3358 = vmor %vm3356, %vm3357
          %v3359 = vsel %vm3358, %v3351, %v3355
          %v3360 = vand.u32 2147483647, %v2541
          %vm3361 = vcmp.eq.f32.partialorder %v3360, 8.507059e+37
          %v3362 = vand.u32 %v2541, 2147483648
          %v3363 = vor.u32 1.1754944e-38, %v3362
          %v3364 = vsel %vm3361, %v3363, %v3359
          %v3365 = vmul.f32 1.0, %v3364
          %v3366 = vrcp.pop %v2542
          %v3367 = vmul.f32 %v2542, %v3366
          %v3368 = vsub.f32 1.0, %v3367
          %v3369 = vmul.f32 %v3366, %v3368
          %v3370 = vadd.f32 %v3366, %v3369
          %vm3371 = vweird.f32 %v2542
          %vm3372 = vweird.f32 %v3366
          %vm3373 = vmor %vm3371, %vm3372
          %v3374 = vsel %vm3373, %v3366, %v3370
          %v3375 = vand.u32 2147483647, %v2542
          %vm3376 = vcmp.eq.f32.partialorder %v3375, 8.507059e+37
          %v3377 = vand.u32 %v2542, 2147483648
          %v3378 = vor.u32 1.1754944e-38, %v3377
          %v3379 = vsel %vm3376, %v3378, %v3374
          %v3380 = vmul.f32 1.0, %v3379
          %v3381 = vrcp.pop %v2543
          %v3382 = vmul.f32 %v2543, %v3381
          %v3383 = vsub.f32 1.0, %v3382
          %v3384 = vmul.f32 %v3381, %v3383
          %v3385 = vadd.f32 %v3381, %v3384
          %vm3386 = vweird.f32 %v2543
          %vm3387 = vweird.f32 %v3381
          %vm3388 = vmor %vm3386, %vm3387
          %v3389 = vsel %vm3388, %v3381, %v3385
          %v3390 = vand.u32 2147483647, %v2543
          %vm3391 = vcmp.eq.f32.partialorder %v3390, 8.507059e+37
          %v3392 = vand.u32 %v2543, 2147483648
          %v3393 = vor.u32 1.1754944e-38, %v3392
          %v3394 = vsel %vm3391, %v3393, %v3389
          %v3395 = vmul.f32 1.0, %v3394
          %v3396 = vrcp.pop %v2544
          %v3397 = vmul.f32 %v2544, %v3396
          %v3398 = vsub.f32 1.0, %v3397
          %v3399 = vmul.f32 %v3396, %v3398
          %v3400 = vadd.f32 %v3396, %v3399
          %vm3401 = vweird.f32 %v2544
          %vm3402 = vweird.f32 %v3396
          %vm3403 = vmor %vm3401, %vm3402
          %v3404 = vsel %vm3403, %v3396, %v3400
          %v3405 = vand.u32 2147483647, %v2544
          %vm3406 = vcmp.eq.f32.partialorder %v3405, 8.507059e+37
          %v3407 = vand.u32 %v2544, 2147483648
          %v3408 = vor.u32 1.1754944e-38, %v3407
          %v3409 = vsel %vm3406, %v3408, %v3404
          %v3410 = vmul.f32 1.0, %v3409
          %v3411 = vrcp.pop %v2545
          %v3412 = vmul.f32 %v2545, %v3411
          %v3413 = vsub.f32 1.0, %v3412
          %v3414 = vmul.f32 %v3411, %v3413
          %v3415 = vadd.f32 %v3411, %v3414
          %vm3416 = vweird.f32 %v2545
          %vm3417 = vweird.f32 %v3411
          %vm3418 = vmor %vm3416, %vm3417
          %v3419 = vsel %vm3418, %v3411, %v3415
          %v3420 = vand.u32 2147483647, %v2545
          %vm3421 = vcmp.eq.f32.partialorder %v3420, 8.507059e+37
          %v3422 = vand.u32 %v2545, 2147483648
          %v3423 = vor.u32 1.1754944e-38, %v3422
          %v3424 = vsel %vm3421, %v3423, %v3419
          %v3425 = vmul.f32 1.0, %v3424
          %v3426 = vrcp.pop %v2546
          %v3427 = vmul.f32 %v2546, %v3426
          %v3428 = vsub.f32 1.0, %v3427
          %v3429 = vmul.f32 %v3426, %v3428
          %v3430 = vadd.f32 %v3426, %v3429
          %vm3431 = vweird.f32 %v2546
          %vm3432 = vweird.f32 %v3426
          %vm3433 = vmor %vm3431, %vm3432
          %v3434 = vsel %vm3433, %v3426, %v3430
          %v3435 = vand.u32 2147483647, %v2546
          %vm3436 = vcmp.eq.f32.partialorder %v3435, 8.507059e+37
          %v3437 = vand.u32 %v2546, 2147483648
          %v3438 = vor.u32 1.1754944e-38, %v3437
          %v3439 = vsel %vm3436, %v3438, %v3434
          %v3440 = vmul.f32 1.0, %v3439
          %v3441 = vrcp.pop %v2547
          %v3442 = vmul.f32 %v2547, %v3441
          %v3443 = vsub.f32 1.0, %v3442
          %v3444 = vmul.f32 %v3441, %v3443
          %v3445 = vadd.f32 %v3441, %v3444
          %vm3446 = vweird.f32 %v2547
          %vm3447 = vweird.f32 %v3441
          %vm3448 = vmor %vm3446, %vm3447
          %v3449 = vsel %vm3448, %v3441, %v3445
          %v3450 = vand.u32 2147483647, %v2547
          %vm3451 = vcmp.eq.f32.partialorder %v3450, 8.507059e+37
          %v3452 = vand.u32 %v2547, 2147483648
          %v3453 = vor.u32 1.1754944e-38, %v3452
          %v3454 = vsel %vm3451, %v3453, %v3449
          %v3455 = vmul.f32 1.0, %v3454
          %v3456 = vrcp.pop %v2548
          %v3457 = vmul.f32 %v2548, %v3456
          %v3458 = vsub.f32 1.0, %v3457
          %v3459 = vmul.f32 %v3456, %v3458
          %v3460 = vadd.f32 %v3456, %v3459
          %vm3461 = vweird.f32 %v2548
          %vm3462 = vweird.f32 %v3456
          %vm3463 = vmor %vm3461, %vm3462
          %v3464 = vsel %vm3463, %v3456, %v3460
          %v3465 = vand.u32 2147483647, %v2548
          %vm3466 = vcmp.eq.f32.partialorder %v3465, 8.507059e+37
          %v3467 = vand.u32 %v2548, 2147483648
          %v3468 = vor.u32 1.1754944e-38, %v3467
          %v3469 = vsel %vm3466, %v3468, %v3464
          %v3470 = vmul.f32 1.0, %v3469
          %v3471 = vrcp.pop %v2549
          %v3472 = vmul.f32 %v2549, %v3471
          %v3473 = vsub.f32 1.0, %v3472
          %v3474 = vmul.f32 %v3471, %v3473
          %v3475 = vadd.f32 %v3471, %v3474
          %vm3476 = vweird.f32 %v2549
          %vm3477 = vweird.f32 %v3471
          %vm3478 = vmor %vm3476, %vm3477
          %v3479 = vsel %vm3478, %v3471, %v3475
          %v3480 = vand.u32 2147483647, %v2549
          %vm3481 = vcmp.eq.f32.partialorder %v3480, 8.507059e+37
          %v3482 = vand.u32 %v2549, 2147483648
          %v3483 = vor.u32 1.1754944e-38, %v3482
          %v3484 = vsel %vm3481, %v3483, %v3479
          %v3485 = vmul.f32 1.0, %v3484
          %v3486 = vrcp.pop %v2550
          %v3487 = vmul.f32 %v2550, %v3486
          %v3488 = vsub.f32 1.0, %v3487
          %v3489 = vmul.f32 %v3486, %v3488
          %v3490 = vadd.f32 %v3486, %v3489
          %vm3491 = vweird.f32 %v2550
          %vm3492 = vweird.f32 %v3486
          %vm3493 = vmor %vm3491, %vm3492
          %v3494 = vsel %vm3493, %v3486, %v3490
          %v3495 = vand.u32 2147483647, %v2550
          %vm3496 = vcmp.eq.f32.partialorder %v3495, 8.507059e+37
          %v3497 = vand.u32 %v2550, 2147483648
          %v3498 = vor.u32 1.1754944e-38, %v3497
          %v3499 = vsel %vm3496, %v3498, %v3494
          %v3500 = vmul.f32 1.0, %v3499
          %v3501 = vrcp.pop %v2551
          %v3502 = vmul.f32 %v2551, %v3501
          %v3503 = vsub.f32 1.0, %v3502
          %v3504 = vmul.f32 %v3501, %v3503
          %v3505 = vadd.f32 %v3501, %v3504
          %vm3506 = vweird.f32 %v2551
          %vm3507 = vweird.f32 %v3501
          %vm3508 = vmor %vm3506, %vm3507
          %v3509 = vsel %vm3508, %v3501, %v3505
          %v3510 = vand.u32 2147483647, %v2551
          %vm3511 = vcmp.eq.f32.partialorder %v3510, 8.507059e+37
          %v3512 = vand.u32 %v2551, 2147483648
          %v3513 = vor.u32 1.1754944e-38, %v3512
          %v3514 = vsel %vm3511, %v3513, %v3509
          %v3515 = vmul.f32 1.0, %v3514
          %v3516 = vrcp.pop %v2552
          %v3517 = vmul.f32 %v2552, %v3516
          %v3518 = vsub.f32 1.0, %v3517
          %v3519 = vmul.f32 %v3516, %v3518
          %v3520 = vadd.f32 %v3516, %v3519
          %vm3521 = vweird.f32 %v2552
          %vm3522 = vweird.f32 %v3516
          %vm3523 = vmor %vm3521, %vm3522
          %v3524 = vsel %vm3523, %v3516, %v3520
          %v3525 = vand.u32 2147483647, %v2552
          %vm3526 = vcmp.eq.f32.partialorder %v3525, 8.507059e+37
          %v3527 = vand.u32 %v2552, 2147483648
          %v3528 = vor.u32 1.1754944e-38, %v3527
          %v3529 = vsel %vm3526, %v3528, %v3524
          %v3530 = vmul.f32 1.0, %v3529
          %v3531 = vrcp.pop %v2553
          %v3532 = vmul.f32 %v2553, %v3531
          %v3533 = vsub.f32 1.0, %v3532
          %v3534 = vmul.f32 %v3531, %v3533
          %v3535 = vadd.f32 %v3531, %v3534
          %vm3536 = vweird.f32 %v2553
          %vm3537 = vweird.f32 %v3531
          %vm3538 = vmor %vm3536, %vm3537
          %v3539 = vsel %vm3538, %v3531, %v3535
          %v3540 = vand.u32 2147483647, %v2553
          %vm3541 = vcmp.eq.f32.partialorder %v3540, 8.507059e+37
          %v3542 = vand.u32 %v2553, 2147483648
          %v3543 = vor.u32 1.1754944e-38, %v3542
          %v3544 = vsel %vm3541, %v3543, %v3539
          %v3545 = vmul.f32 1.0, %v3544
          %v3546 = vrcp.pop %v2554
          %v3547 = vmul.f32 %v2554, %v3546
          %v3548 = vsub.f32 1.0, %v3547
          %v3549 = vmul.f32 %v3546, %v3548
          %v3550 = vadd.f32 %v3546, %v3549
          %vm3551 = vweird.f32 %v2554
          %vm3552 = vweird.f32 %v3546
          %vm3553 = vmor %vm3551, %vm3552
          %v3554 = vsel %vm3553, %v3546, %v3550
          %v3555 = vand.u32 2147483647, %v2554
          %vm3556 = vcmp.eq.f32.partialorder %v3555, 8.507059e+37
          %v3557 = vand.u32 %v2554, 2147483648
          %v3558 = vor.u32 1.1754944e-38, %v3557
          %v3559 = vsel %vm3556, %v3558, %v3554
          %v3560 = vmul.f32 1.0, %v3559
          %v3561 = vrcp.pop %v2555
          %v3562 = vmul.f32 %v2555, %v3561
          %v3563 = vsub.f32 1.0, %v3562
          %v3564 = vmul.f32 %v3561, %v3563
          %v3565 = vadd.f32 %v3561, %v3564
          %vm3566 = vweird.f32 %v2555
          %vm3567 = vweird.f32 %v3561
          %vm3568 = vmor %vm3566, %vm3567
          %v3569 = vsel %vm3568, %v3561, %v3565
          %v3570 = vand.u32 2147483647, %v2555
          %vm3571 = vcmp.eq.f32.partialorder %v3570, 8.507059e+37
          %v3572 = vand.u32 %v2555, 2147483648
          %v3573 = vor.u32 1.1754944e-38, %v3572
          %v3574 = vsel %vm3571, %v3573, %v3569
          %v3575 = vmul.f32 1.0, %v3574
          %v3576 = vrcp.pop %v2556
          %v3577 = vmul.f32 %v2556, %v3576
          %v3578 = vsub.f32 1.0, %v3577
          %v3579 = vmul.f32 %v3576, %v3578
          %v3580 = vadd.f32 %v3576, %v3579
          %vm3581 = vweird.f32 %v2556
          %vm3582 = vweird.f32 %v3576
          %vm3583 = vmor %vm3581, %vm3582
          %v3584 = vsel %vm3583, %v3576, %v3580
          %v3585 = vand.u32 2147483647, %v2556
          %vm3586 = vcmp.eq.f32.partialorder %v3585, 8.507059e+37
          %v3587 = vand.u32 %v2556, 2147483648
          %v3588 = vor.u32 1.1754944e-38, %v3587
          %v3589 = vsel %vm3586, %v3588, %v3584
          %v3590 = vmul.f32 1.0, %v3589
          %v3591 = vrcp.pop %v2557
          %v3592 = vmul.f32 %v2557, %v3591
          %v3593 = vsub.f32 1.0, %v3592
          %v3594 = vmul.f32 %v3591, %v3593
          %v3595 = vadd.f32 %v3591, %v3594
          %vm3596 = vweird.f32 %v2557
          %vm3597 = vweird.f32 %v3591
          %vm3598 = vmor %vm3596, %vm3597
          %v3599 = vsel %vm3598, %v3591, %v3595
          %v3600 = vand.u32 2147483647, %v2557
          %vm3601 = vcmp.eq.f32.partialorder %v3600, 8.507059e+37
          %v3602 = vand.u32 %v2557, 2147483648
          %v3603 = vor.u32 1.1754944e-38, %v3602
          %v3604 = vsel %vm3601, %v3603, %v3599
          %v3605 = vmul.f32 1.0, %v3604
          %v3606 = vrcp.pop %v2558
          %v3607 = vmul.f32 %v2558, %v3606
          %v3608 = vsub.f32 1.0, %v3607
          %v3609 = vmul.f32 %v3606, %v3608
          %v3610 = vadd.f32 %v3606, %v3609
          %vm3611 = vweird.f32 %v2558
          %vm3612 = vweird.f32 %v3606
          %vm3613 = vmor %vm3611, %vm3612
          %v3614 = vsel %vm3613, %v3606, %v3610
          %v3615 = vand.u32 2147483647, %v2558
          %vm3616 = vcmp.eq.f32.partialorder %v3615, 8.507059e+37
          %v3617 = vand.u32 %v2558, 2147483648
          %v3618 = vor.u32 1.1754944e-38, %v3617
          %v3619 = vsel %vm3616, %v3618, %v3614
          %v3620 = vmul.f32 1.0, %v3619
          %v3621 = vrcp.pop %v2559
          %v3622 = vmul.f32 %v2559, %v3621
          %v3623 = vsub.f32 1.0, %v3622
          %v3624 = vmul.f32 %v3621, %v3623
          %v3625 = vadd.f32 %v3621, %v3624
          %vm3626 = vweird.f32 %v2559
          %vm3627 = vweird.f32 %v3621
          %vm3628 = vmor %vm3626, %vm3627
          %v3629 = vsel %vm3628, %v3621, %v3625
          %v3630 = vand.u32 2147483647, %v2559
          %vm3631 = vcmp.eq.f32.partialorder %v3630, 8.507059e+37
          %v3632 = vand.u32 %v2559, 2147483648
          %v3633 = vor.u32 1.1754944e-38, %v3632
          %v3634 = vsel %vm3631, %v3633, %v3629
          %v3635 = vmul.f32 1.0, %v3634
          %v3636 = vrcp.pop %v2560
          %v3637 = vmul.f32 %v2560, %v3636
          %v3638 = vsub.f32 1.0, %v3637
          %v3639 = vmul.f32 %v3636, %v3638
          %v3640 = vadd.f32 %v3636, %v3639
          %vm3641 = vweird.f32 %v2560
          %vm3642 = vweird.f32 %v3636
          %vm3643 = vmor %vm3641, %vm3642
          %v3644 = vsel %vm3643, %v3636, %v3640
          %v3645 = vand.u32 2147483647, %v2560
          %vm3646 = vcmp.eq.f32.partialorder %v3645, 8.507059e+37
          %v3647 = vand.u32 %v2560, 2147483648
          %v3648 = vor.u32 1.1754944e-38, %v3647
          %v3649 = vsel %vm3646, %v3648, %v3644
          %v3650 = vmul.f32 1.0, %v3649
          %v3651 = vrcp.pop %v2561
          %v3652 = vmul.f32 %v2561, %v3651
          %v3653 = vsub.f32 1.0, %v3652
          %v3654 = vmul.f32 %v3651, %v3653
          %v3655 = vadd.f32 %v3651, %v3654
          %vm3656 = vweird.f32 %v2561
          %vm3657 = vweird.f32 %v3651
          %vm3658 = vmor %vm3656, %vm3657
          %v3659 = vsel %vm3658, %v3651, %v3655
          %v3660 = vand.u32 2147483647, %v2561
          %vm3661 = vcmp.eq.f32.partialorder %v3660, 8.507059e+37
          %v3662 = vand.u32 %v2561, 2147483648
          %v3663 = vor.u32 1.1754944e-38, %v3662
          %v3664 = vsel %vm3661, %v3663, %v3659
          %v3665 = vmul.f32 1.0, %v3664
          %v3666 = vrcp.pop %v2562
          %v3667 = vmul.f32 %v2562, %v3666
          %v3668 = vsub.f32 1.0, %v3667
          %v3669 = vmul.f32 %v3666, %v3668
          %v3670 = vadd.f32 %v3666, %v3669
          %vm3671 = vweird.f32 %v2562
          %vm3672 = vweird.f32 %v3666
          %vm3673 = vmor %vm3671, %vm3672
          %v3674 = vsel %vm3673, %v3666, %v3670
          %v3675 = vand.u32 2147483647, %v2562
          %vm3676 = vcmp.eq.f32.partialorder %v3675, 8.507059e+37
          %v3677 = vand.u32 %v2562, 2147483648
          %v3678 = vor.u32 1.1754944e-38, %v3677
          %v3679 = vsel %vm3676, %v3678, %v3674
          %v3680 = vmul.f32 1.0, %v3679
          %v3681 = vrcp.pop %v2563
          %v3682 = vmul.f32 %v2563, %v3681
          %v3683 = vsub.f32 1.0, %v3682
          %v3684 = vmul.f32 %v3681, %v3683
          %v3685 = vadd.f32 %v3681, %v3684
          %vm3686 = vweird.f32 %v2563
          %vm3687 = vweird.f32 %v3681
          %vm3688 = vmor %vm3686, %vm3687
          %v3689 = vsel %vm3688, %v3681, %v3685
          %v3690 = vand.u32 2147483647, %v2563
          %vm3691 = vcmp.eq.f32.partialorder %v3690, 8.507059e+37
          %v3692 = vand.u32 %v2563, 2147483648
          %v3693 = vor.u32 1.1754944e-38, %v3692
          %v3694 = vsel %vm3691, %v3693, %v3689
          %v3695 = vmul.f32 1.0, %v3694
          %v3696 = vrcp.pop %v2564
          %v3697 = vmul.f32 %v2564, %v3696
          %v3698 = vsub.f32 1.0, %v3697
          %v3699 = vmul.f32 %v3696, %v3698
          %v3700 = vadd.f32 %v3696, %v3699
          %vm3701 = vweird.f32 %v2564
          %vm3702 = vweird.f32 %v3696
          %vm3703 = vmor %vm3701, %vm3702
          %v3704 = vsel %vm3703, %v3696, %v3700
          %v3705 = vand.u32 2147483647, %v2564
          %vm3706 = vcmp.eq.f32.partialorder %v3705, 8.507059e+37
          %v3707 = vand.u32 %v2564, 2147483648
          %v3708 = vor.u32 1.1754944e-38, %v3707
          %v3709 = vsel %vm3706, %v3708, %v3704
          %v3710 = vmul.f32 1.0, %v3709
          %v3711 = vrcp.pop %v2565
          %v3712 = vmul.f32 %v2565, %v3711
          %v3713 = vsub.f32 1.0, %v3712
          %v3714 = vmul.f32 %v3711, %v3713
          %v3715 = vadd.f32 %v3711, %v3714
          %vm3716 = vweird.f32 %v2565
          %vm3717 = vweird.f32 %v3711
          %vm3718 = vmor %vm3716, %vm3717
          %v3719 = vsel %vm3718, %v3711, %v3715
          %v3720 = vand.u32 2147483647, %v2565
          %vm3721 = vcmp.eq.f32.partialorder %v3720, 8.507059e+37
          %v3722 = vand.u32 %v2565, 2147483648
          %v3723 = vor.u32 1.1754944e-38, %v3722
          %v3724 = vsel %vm3721, %v3723, %v3719
          %v3725 = vmul.f32 1.0, %v3724
          %v3726 = vrcp.pop %v2566
          %v3727 = vmul.f32 %v2566, %v3726
          %v3728 = vsub.f32 1.0, %v3727
          %v3729 = vmul.f32 %v3726, %v3728
          %v3730 = vadd.f32 %v3726, %v3729
          %vm3731 = vweird.f32 %v2566
          %vm3732 = vweird.f32 %v3726
          %vm3733 = vmor %vm3731, %vm3732
          %v3734 = vsel %vm3733, %v3726, %v3730
          %v3735 = vand.u32 2147483647, %v2566
          %vm3736 = vcmp.eq.f32.partialorder %v3735, 8.507059e+37
          %v3737 = vand.u32 %v2566, 2147483648
          %v3738 = vor.u32 1.1754944e-38, %v3737
          %v3739 = vsel %vm3736, %v3738, %v3734
          %v3740 = vmul.f32 1.0, %v3739
          %v3741 = vrcp.pop %v2567
          %v3742 = vmul.f32 %v2567, %v3741
          %v3743 = vsub.f32 1.0, %v3742
          %v3744 = vmul.f32 %v3741, %v3743
          %v3745 = vadd.f32 %v3741, %v3744
          %vm3746 = vweird.f32 %v2567
          %vm3747 = vweird.f32 %v3741
          %vm3748 = vmor %vm3746, %vm3747
          %v3749 = vsel %vm3748, %v3741, %v3745
          %v3750 = vand.u32 2147483647, %v2567
          %vm3751 = vcmp.eq.f32.partialorder %v3750, 8.507059e+37
          %v3752 = vand.u32 %v2567, 2147483648
          %v3753 = vor.u32 1.1754944e-38, %v3752
          %v3754 = vsel %vm3751, %v3753, %v3749
          %v3755 = vmul.f32 1.0, %v3754
          %v3756 = vrcp.pop %v2568
          %v3757 = vmul.f32 %v2568, %v3756
          %v3758 = vsub.f32 1.0, %v3757
          %v3759 = vmul.f32 %v3756, %v3758
          %v3760 = vadd.f32 %v3756, %v3759
          %vm3761 = vweird.f32 %v2568
          %vm3762 = vweird.f32 %v3756
          %vm3763 = vmor %vm3761, %vm3762
          %v3764 = vsel %vm3763, %v3756, %v3760
          %v3765 = vand.u32 2147483647, %v2568
          %vm3766 = vcmp.eq.f32.partialorder %v3765, 8.507059e+37
          %v3767 = vand.u32 %v2568, 2147483648
          %v3768 = vor.u32 1.1754944e-38, %v3767
          %v3769 = vsel %vm3766, %v3768, %v3764
          %v3770 = vmul.f32 1.0, %v3769
          %v3771 = vrcp.pop %v2569
          %v3772 = vmul.f32 %v2569, %v3771
          %v3773 = vsub.f32 1.0, %v3772
          %v3774 = vmul.f32 %v3771, %v3773
          %v3775 = vadd.f32 %v3771, %v3774
          %vm3776 = vweird.f32 %v2569
          %vm3777 = vweird.f32 %v3771
          %vm3778 = vmor %vm3776, %vm3777
          %v3779 = vsel %vm3778, %v3771, %v3775
          %v3780 = vand.u32 2147483647, %v2569
          %vm3781 = vcmp.eq.f32.partialorder %v3780, 8.507059e+37
          %v3782 = vand.u32 %v2569, 2147483648
          %v3783 = vor.u32 1.1754944e-38, %v3782
          %v3784 = vsel %vm3781, %v3783, %v3779
          %v3785 = vmul.f32 1.0, %v3784
          %v3786 = vrcp.pop %v2570
          %v3787 = vmul.f32 %v2570, %v3786
          %v3788 = vsub.f32 1.0, %v3787
          %v3789 = vmul.f32 %v3786, %v3788
          %v3790 = vadd.f32 %v3786, %v3789
          %vm3791 = vweird.f32 %v2570
          %vm3792 = vweird.f32 %v3786
          %vm3793 = vmor %vm3791, %vm3792
          %v3794 = vsel %vm3793, %v3786, %v3790
          %v3795 = vand.u32 2147483647, %v2570
          %vm3796 = vcmp.eq.f32.partialorder %v3795, 8.507059e+37
          %v3797 = vand.u32 %v2570, 2147483648
          %v3798 = vor.u32 1.1754944e-38, %v3797
          %v3799 = vsel %vm3796, %v3798, %v3794
          %v3800 = vmul.f32 1.0, %v3799
          %v3801 = vrcp.pop %v2571
          %v3802 = vmul.f32 %v2571, %v3801
          %v3803 = vsub.f32 1.0, %v3802
          %v3804 = vmul.f32 %v3801, %v3803
          %v3805 = vadd.f32 %v3801, %v3804
          %vm3806 = vweird.f32 %v2571
          %vm3807 = vweird.f32 %v3801
          %vm3808 = vmor %vm3806, %vm3807
          %v3809 = vsel %vm3808, %v3801, %v3805
          %v3810 = vand.u32 2147483647, %v2571
          %vm3811 = vcmp.eq.f32.partialorder %v3810, 8.507059e+37
          %v3812 = vand.u32 %v2571, 2147483648
          %v3813 = vor.u32 1.1754944e-38, %v3812
          %v3814 = vsel %vm3811, %v3813, %v3809
          %v3815 = vmul.f32 1.0, %v3814
          %v3816 = vrcp.pop %v2572
          %v3817 = vmul.f32 %v2572, %v3816
          %v3818 = vsub.f32 1.0, %v3817
          %v3819 = vmul.f32 %v3816, %v3818
          %v3820 = vadd.f32 %v3816, %v3819
          %vm3821 = vweird.f32 %v2572
          %vm3822 = vweird.f32 %v3816
          %vm3823 = vmor %vm3821, %vm3822
          %v3824 = vsel %vm3823, %v3816, %v3820
          %v3825 = vand.u32 2147483647, %v2572
          %vm3826 = vcmp.eq.f32.partialorder %v3825, 8.507059e+37
          %v3827 = vand.u32 %v2572, 2147483648
          %v3828 = vor.u32 1.1754944e-38, %v3827
          %v3829 = vsel %vm3826, %v3828, %v3824
          %v3830 = vmul.f32 1.0, %v3829
          %v3831 = vrcp.pop %v2573
          %v3832 = vmul.f32 %v2573, %v3831
          %v3833 = vsub.f32 1.0, %v3832
          %v3834 = vmul.f32 %v3831, %v3833
          %v3835 = vadd.f32 %v3831, %v3834
          %vm3836 = vweird.f32 %v2573
          %vm3837 = vweird.f32 %v3831
          %vm3838 = vmor %vm3836, %vm3837
          %v3839 = vsel %vm3838, %v3831, %v3835
          %v3840 = vand.u32 2147483647, %v2573
          %vm3841 = vcmp.eq.f32.partialorder %v3840, 8.507059e+37
          %v3842 = vand.u32 %v2573, 2147483648
          %v3843 = vor.u32 1.1754944e-38, %v3842
          %v3844 = vsel %vm3841, %v3843, %v3839
          %v3845 = vmul.f32 1.0, %v3844
          %v3846 = vrcp.pop %v2574
          %v3847 = vmul.f32 %v2574, %v3846
          %v3848 = vsub.f32 1.0, %v3847
          %v3849 = vmul.f32 %v3846, %v3848
          %v3850 = vadd.f32 %v3846, %v3849
          %vm3851 = vweird.f32 %v2574
          %vm3852 = vweird.f32 %v3846
          %vm3853 = vmor %vm3851, %vm3852
          %v3854 = vsel %vm3853, %v3846, %v3850
          %v3855 = vand.u32 2147483647, %v2574
          %vm3856 = vcmp.eq.f32.partialorder %v3855, 8.507059e+37
          %v3857 = vand.u32 %v2574, 2147483648
          %v3858 = vor.u32 1.1754944e-38, %v3857
          %v3859 = vsel %vm3856, %v3858, %v3854
          %v3860 = vmul.f32 1.0, %v3859
          %v3861 = vrcp.pop %v2575
          %v3862 = vmul.f32 %v2575, %v3861
          %v3863 = vsub.f32 1.0, %v3862
          %v3864 = vmul.f32 %v3861, %v3863
          %v3865 = vadd.f32 %v3861, %v3864
          %vm3866 = vweird.f32 %v2575
          %vm3867 = vweird.f32 %v3861
          %vm3868 = vmor %vm3866, %vm3867
          %v3869 = vsel %vm3868, %v3861, %v3865
          %v3870 = vand.u32 2147483647, %v2575
          %vm3871 = vcmp.eq.f32.partialorder %v3870, 8.507059e+37
          %v3872 = vand.u32 %v2575, 2147483648
          %v3873 = vor.u32 1.1754944e-38, %v3872
          %v3874 = vsel %vm3871, %v3873, %v3869
          %v3875 = vmul.f32 1.0, %v3874
          %v3876 = vrcp.pop %v2576
          %v3877 = vmul.f32 %v2576, %v3876
          %v3878 = vsub.f32 1.0, %v3877
          %v3879 = vmul.f32 %v3876, %v3878
          %v3880 = vadd.f32 %v3876, %v3879
          %vm3881 = vweird.f32 %v2576
          %vm3882 = vweird.f32 %v3876
          %vm3883 = vmor %vm3881, %vm3882
          %v3884 = vsel %vm3883, %v3876, %v3880
          %v3885 = vand.u32 2147483647, %v2576
          %vm3886 = vcmp.eq.f32.partialorder %v3885, 8.507059e+37
          %v3887 = vand.u32 %v2576, 2147483648
          %v3888 = vor.u32 1.1754944e-38, %v3887
          %v3889 = vsel %vm3886, %v3888, %v3884
          %v3890 = vmul.f32 1.0, %v3889
          %v3891 = vrcp.pop %v2577
          %v3892 = vmul.f32 %v2577, %v3891
          %v3893 = vsub.f32 1.0, %v3892
          %v3894 = vmul.f32 %v3891, %v3893
          %v3895 = vadd.f32 %v3891, %v3894
          %vm3896 = vweird.f32 %v2577
          %vm3897 = vweird.f32 %v3891
          %vm3898 = vmor %vm3896, %vm3897
          %v3899 = vsel %vm3898, %v3891, %v3895
          %v3900 = vand.u32 2147483647, %v2577
          %vm3901 = vcmp.eq.f32.partialorder %v3900, 8.507059e+37
          %v3902 = vand.u32 %v2577, 2147483648
          %v3903 = vor.u32 1.1754944e-38, %v3902
          %v3904 = vsel %vm3901, %v3903, %v3899
          %v3905 = vmul.f32 1.0, %v3904
          %v3906 = vrcp.pop %v2578
          %v3907 = vmul.f32 %v2578, %v3906
          %v3908 = vsub.f32 1.0, %v3907
          %v3909 = vmul.f32 %v3906, %v3908
          %v3910 = vadd.f32 %v3906, %v3909
          %vm3911 = vweird.f32 %v2578
          %vm3912 = vweird.f32 %v3906
          %vm3913 = vmor %vm3911, %vm3912
          %v3914 = vsel %vm3913, %v3906, %v3910
          %v3915 = vand.u32 2147483647, %v2578
          %vm3916 = vcmp.eq.f32.partialorder %v3915, 8.507059e+37
          %v3917 = vand.u32 %v2578, 2147483648
          %v3918 = vor.u32 1.1754944e-38, %v3917
          %v3919 = vsel %vm3916, %v3918, %v3914
          %v3920 = vmul.f32 1.0, %v3919
          %v3921 = vrcp.pop %v2579
          %v3922 = vmul.f32 %v2579, %v3921
          %v3923 = vsub.f32 1.0, %v3922
          %v3924 = vmul.f32 %v3921, %v3923
          %v3925 = vadd.f32 %v3921, %v3924
          %vm3926 = vweird.f32 %v2579
          %vm3927 = vweird.f32 %v3921
          %vm3928 = vmor %vm3926, %vm3927
          %v3929 = vsel %vm3928, %v3921, %v3925
          %v3930 = vand.u32 2147483647, %v2579
          %vm3931 = vcmp.eq.f32.partialorder %v3930, 8.507059e+37
          %v3932 = vand.u32 %v2579, 2147483648
          %v3933 = vor.u32 1.1754944e-38, %v3932
          %v3934 = vsel %vm3931, %v3933, %v3929
          %v3935 = vmul.f32 1.0, %v3934
          %v3936 = vrcp.pop %v2580
          %v3937 = vmul.f32 %v2580, %v3936
          %v3938 = vsub.f32 1.0, %v3937
          %v3939 = vmul.f32 %v3936, %v3938
          %v3940 = vadd.f32 %v3936, %v3939
          %vm3941 = vweird.f32 %v2580
          %vm3942 = vweird.f32 %v3936
          %vm3943 = vmor %vm3941, %vm3942
          %v3944 = vsel %vm3943, %v3936, %v3940
          %v3945 = vand.u32 2147483647, %v2580
          %vm3946 = vcmp.eq.f32.partialorder %v3945, 8.507059e+37
          %v3947 = vand.u32 %v2580, 2147483648
          %v3948 = vor.u32 1.1754944e-38, %v3947
          %v3949 = vsel %vm3946, %v3948, %v3944
          %v3950 = vmul.f32 1.0, %v3949
          %v3951 = vrcp.pop %v2581
          %v3952 = vmul.f32 %v2581, %v3951
          %v3953 = vsub.f32 1.0, %v3952
          %v3954 = vmul.f32 %v3951, %v3953
          %v3955 = vadd.f32 %v3951, %v3954
          %vm3956 = vweird.f32 %v2581
          %vm3957 = vweird.f32 %v3951
          %vm3958 = vmor %vm3956, %vm3957
          %v3959 = vsel %vm3958, %v3951, %v3955
          %v3960 = vand.u32 2147483647, %v2581
          %vm3961 = vcmp.eq.f32.partialorder %v3960, 8.507059e+37
          %v3962 = vand.u32 %v2581, 2147483648
          %v3963 = vor.u32 1.1754944e-38, %v3962
          %v3964 = vsel %vm3961, %v3963, %v3959
          %v3965 = vmul.f32 1.0, %v3964
          %v3966 = vrcp.pop %v2582
          %v3967 = vmul.f32 %v2582, %v3966
          %v3968 = vsub.f32 1.0, %v3967
          %v3969 = vmul.f32 %v3966, %v3968
          %v3970 = vadd.f32 %v3966, %v3969
          %vm3971 = vweird.f32 %v2582
          %vm3972 = vweird.f32 %v3966
          %vm3973 = vmor %vm3971, %vm3972
          %v3974 = vsel %vm3973, %v3966, %v3970
          %v3975 = vand.u32 2147483647, %v2582
          %vm3976 = vcmp.eq.f32.partialorder %v3975, 8.507059e+37
          %v3977 = vand.u32 %v2582, 2147483648
          %v3978 = vor.u32 1.1754944e-38, %v3977
          %v3979 = vsel %vm3976, %v3978, %v3974
          %v3980 = vmul.f32 1.0, %v3979
          %v3981 = vrcp.pop %v2583
          %v3982 = vmul.f32 %v2583, %v3981
          %v3983 = vsub.f32 1.0, %v3982
          %v3984 = vmul.f32 %v3981, %v3983
          %v3985 = vadd.f32 %v3981, %v3984
          %vm3986 = vweird.f32 %v2583
          %vm3987 = vweird.f32 %v3981
          %vm3988 = vmor %vm3986, %vm3987
          %v3989 = vsel %vm3988, %v3981, %v3985
          %v3990 = vand.u32 2147483647, %v2583
          %vm3991 = vcmp.eq.f32.partialorder %v3990, 8.507059e+37
          %v3992 = vand.u32 %v2583, 2147483648
          %v3993 = vor.u32 1.1754944e-38, %v3992
          %v3994 = vsel %vm3991, %v3993, %v3989
          %v3995 = vmul.f32 1.0, %v3994
          %v3996 = vrcp.pop %v2584
          %v3997 = vmul.f32 %v2584, %v3996
          %v3998 = vsub.f32 1.0, %v3997
          %v3999 = vmul.f32 %v3996, %v3998
          %v4000 = vadd.f32 %v3996, %v3999
          %vm4001 = vweird.f32 %v2584
          %vm4002 = vweird.f32 %v3996
          %vm4003 = vmor %vm4001, %vm4002
          %v4004 = vsel %vm4003, %v3996, %v4000
          %v4005 = vand.u32 2147483647, %v2584
          %vm4006 = vcmp.eq.f32.partialorder %v4005, 8.507059e+37
          %v4007 = vand.u32 %v2584, 2147483648
          %v4008 = vor.u32 1.1754944e-38, %v4007
          %v4009 = vsel %vm4006, %v4008, %v4004
          %v4010 = vmul.f32 1.0, %v4009
          %v4011 = vrcp.pop %v2585
          %v4012 = vmul.f32 %v2585, %v4011
          %v4013 = vsub.f32 1.0, %v4012
          %v4014 = vmul.f32 %v4011, %v4013
          %v4015 = vadd.f32 %v4011, %v4014
          %vm4016 = vweird.f32 %v2585
          %vm4017 = vweird.f32 %v4011
          %vm4018 = vmor %vm4016, %vm4017
          %v4019 = vsel %vm4018, %v4011, %v4015
          %v4020 = vand.u32 2147483647, %v2585
          %vm4021 = vcmp.eq.f32.partialorder %v4020, 8.507059e+37
          %v4022 = vand.u32 %v2585, 2147483648
          %v4023 = vor.u32 1.1754944e-38, %v4022
          %v4024 = vsel %vm4021, %v4023, %v4019
          %v4025 = vmul.f32 1.0, %v4024
          %v4026 = vmul.f32 %v2106, %v2600
          %v4027 = vmul.f32 %v2107, %v2615
          %v4028 = vmul.f32 %v2108, %v2630
          %v4029 = vmul.f32 %v2109, %v2645
          %v4030 = vmul.f32 %v2110, %v2660
          %v4031 = vmul.f32 %v2111, %v2675
          %v4032 = vmul.f32 %v2112, %v2690
          %v4033 = vmul.f32 %v2113, %v2705
          %v4034 = vmul.f32 %v2114, %v2720
          %v4035 = vmul.f32 %v2115, %v2735
          %v4036 = vmul.f32 %v2116, %v2750
          %v4037 = vmul.f32 %v2117, %v2765
          %v4038 = vmul.f32 %v2118, %v2780
          %v4039 = vmul.f32 %v2119, %v2795
          %v4040 = vmul.f32 %v2120, %v2810
          %v4041 = vmul.f32 %v2121, %v2825
          %v4042 = vmul.f32 %v2122, %v2840
          %v4043 = vmul.f32 %v2123, %v2855
          %v4044 = vmul.f32 %v2124, %v2870
          %v4045 = vmul.f32 %v2125, %v2885
          %v4046 = vmul.f32 %v2126, %v2900
          %v4047 = vmul.f32 %v2127, %v2915
          %v4048 = vmul.f32 %v2128, %v2930
          %v4049 = vmul.f32 %v2129, %v2945
          %v4050 = vmul.f32 %v2130, %v2960
          %v4051 = vmul.f32 %v2131, %v2975
          %v4052 = vmul.f32 %v2132, %v2990
          %v4053 = vmul.f32 %v2133, %v3005
          %v4054 = vmul.f32 %v2134, %v3020
          %v4055 = vmul.f32 %v2135, %v3035
          %v4056 = vmul.f32 %v2136, %v3050
          %v4057 = vmul.f32 %v2137, %v3065
          %v4058 = vmul.f32 %v2138, %v3080
          %v4059 = vmul.f32 %v2139, %v3095
          %v4060 = vmul.f32 %v2140, %v3110
          %v4061 = vmul.f32 %v2141, %v3125
          %v4062 = vmul.f32 %v2142, %v3140
          %v4063 = vmul.f32 %v2143, %v3155
          %v4064 = vmul.f32 %v2144, %v3170
          %v4065 = vmul.f32 %v2145, %v3185
          %v4066 = vmul.f32 %v2146, %v3200
          %v4067 = vmul.f32 %v2147, %v3215
          %v4068 = vmul.f32 %v2148, %v3230
          %v4069 = vmul.f32 %v2149, %v3245
          %v4070 = vmul.f32 %v2150, %v3260
          %v4071 = vmul.f32 %v2151, %v3275
          %v4072 = vmul.f32 %v2152, %v3290
          %v4073 = vmul.f32 %v2153, %v3305
          %v4074 = vmul.f32 %v2154, %v3320
          %v4075 = vmul.f32 %v2155, %v3335
          %v4076 = vmul.f32 %v2156, %v3350
          %v4077 = vmul.f32 %v2157, %v3365
          %v4078 = vmul.f32 %v2158, %v3380
          %v4079 = vmul.f32 %v2159, %v3395
          %v4080 = vmul.f32 %v2160, %v3410
          %v4081 = vmul.f32 %v2161, %v3425
          %v4082 = vmul.f32 %v2162, %v3440
          %v4083 = vmul.f32 %v2163, %v3455
          %v4084 = vmul.f32 %v2164, %v3470
          %v4085 = vmul.f32 %v2165, %v3485
          %v4086 = vmul.f32 %v2166, %v3500
          %v4087 = vmul.f32 %v2167, %v3515
          %v4088 = vmul.f32 %v2168, %v3530
          %v4089 = vmul.f32 %v2169, %v3545
          %v4090 = vmul.f32 %v2170, %v3560
          %v4091 = vmul.f32 %v2171, %v3575
          %v4092 = vmul.f32 %v2172, %v3590
          %v4093 = vmul.f32 %v2173, %v3605
          %v4094 = vmul.f32 %v2174, %v3620
          %v4095 = vmul.f32 %v2175, %v3635
          %v4096 = vmul.f32 %v2176, %v3650
          %v4097 = vmul.f32 %v2177, %v3665
          %v4098 = vmul.f32 %v2178, %v3680
          %v4099 = vmul.f32 %v2179, %v3695
          %v4100 = vmul.f32 %v2180, %v3710
          %v4101 = vmul.f32 %v2181, %v3725
          %v4102 = vmul.f32 %v2182, %v3740
          %v4103 = vmul.f32 %v2183, %v3755
          %v4104 = vmul.f32 %v2184, %v3770
          %v4105 = vmul.f32 %v2185, %v3785
          %v4106 = vmul.f32 %v2186, %v3800
          %v4107 = vmul.f32 %v2187, %v3815
          %v4108 = vmul.f32 %v2188, %v3830
          %v4109 = vmul.f32 %v2189, %v3845
          %v4110 = vmul.f32 %v2190, %v3860
          %v4111 = vmul.f32 %v2191, %v3875
          %v4112 = vmul.f32 %v2192, %v3890
          %v4113 = vmul.f32 %v2193, %v3905
          %v4114 = vmul.f32 %v2194, %v3920
          %v4115 = vmul.f32 %v2195, %v3935
          %v4116 = vmul.f32 %v2196, %v3950
          %v4117 = vmul.f32 %v2197, %v3965
          %v4118 = vmul.f32 %v2198, %v3980
          %v4119 = vmul.f32 %v2199, %v3995
          %v4120 = vmul.f32 %v2200, %v4010
          %v4121 = vmul.f32 %v2201, %v4025
          %v4122 = vld [vmem:[%s3] sm:$0xff]
          %v4123 = vld [vmem:[%s3 + $0x8] sm:$0xff]
          %v4124 = vld [vmem:[%s4] sm:$0xff]
          %4126 = vset.pattern.permute.xlu0 0
          %4127 = vperm.xlu0 %4126, %v4124
          %v4128 = vpop.permute.xlu0 %4127
          %4130 = vmatpush.msra.mxu0 %v4071
          %4131 = vmatpush.msra.mxu0 %v4068
          %4132 = vmatpush.msra.mxu0 %v4065
          %4133 = vmatpush.msra.mxu0 %v4062
          %4134 = vmatpush.msra.mxu0 %v4059
          %4135 = vmatpush.msra.mxu0 %v4056
          %4136 = vmatpush.msra.mxu0 %v4053
          %4137 = vmatpush.msra.mxu0 %v4050
          %4138 = vmatpush.msra.mxu0 %v4047
          %4139 = vmatpush.msra.mxu0 %v4044
          %4140 = vmatpush.msra.mxu0 %v4041
          %4141 = vmatpush.msra.mxu0 %v4038
          %4142 = vmatpush.msra.mxu0 %v4035
          %4143 = vmatpush.msra.mxu0 %v4032
          %4144 = vmatpush.msra.mxu0 %v4029
          %4145 = vmatpush.msra.mxu0 %v4026
          %4146 = vmatmul.f32.gmra.mxu0 %v4122
          %v4147 = vpop.f32.mrf.mxu0
          %v4148 = vadd.f32 %v4128, %v4147
          %4149 = vdwg.mxu0
          %4150 = vmatpush.msra.mxu0 %v4119
          %4151 = vmatpush.msra.mxu0 %v4116
          %4152 = vmatpush.msra.mxu0 %v4113
          %4153 = vmatpush.msra.mxu0 %v4110
          %4154 = vmatpush.msra.mxu0 %v4107
          %4155 = vmatpush.msra.mxu0 %v4104
          %4156 = vmatpush.msra.mxu0 %v4101
          %4157 = vmatpush.msra.mxu0 %v4098
          %4158 = vmatpush.msra.mxu0 %v4095
          %4159 = vmatpush.msra.mxu0 %v4092
          %4160 = vmatpush.msra.mxu0 %v4089
          %4161 = vmatpush.msra.mxu0 %v4086
          %4162 = vmatpush.msra.mxu0 %v4083
          %4163 = vmatpush.msra.mxu0 %v4080
          %4164 = vmatpush.msra.mxu0 %v4077
          %4165 = vmatpush.msra.mxu0 %v4074
          %4166 = vmatmul.f32.gmra.mxu0 %v4123
          %v4167 = vpop.f32.mrf.mxu0
          %v4168 = vadd.f32 %v4148, %v4167
          %4169 = vdwg.mxu0
          %4170 = vmatpush.msra.mxu0 %v4072
          %4171 = vmatpush.msra.mxu0 %v4069
          %4172 = vmatpush.msra.mxu0 %v4066
          %4173 = vmatpush.msra.mxu0 %v4063
          %4174 = vmatpush.msra.mxu0 %v4060
          %4175 = vmatpush.msra.mxu0 %v4057
          %4176 = vmatpush.msra.mxu0 %v4054
          %4177 = vmatpush.msra.mxu0 %v4051
          %4178 = vmatpush.msra.mxu0 %v4048
          %4179 = vmatpush.msra.mxu0 %v4045
          %4180 = vmatpush.msra.mxu0 %v4042
          %4181 = vmatpush.msra.mxu0 %v4039
          %4182 = vmatpush.msra.mxu0 %v4036
          %4183 = vmatpush.msra.mxu0 %v4033
          %4184 = vmatpush.msra.mxu0 %v4030
          %4185 = vmatpush.msra.mxu0 %v4027
          %4186 = vmatmul.f32.gmra.mxu0 %v4122
          %v4187 = vpop.f32.mrf.mxu0
          %v4188 = vadd.f32 %v4128, %v4187
          %4189 = vdwg.mxu0
          %4190 = vmatpush.msra.mxu0 %v4120
          %4191 = vmatpush.msra.mxu0 %v4117
          %4192 = vmatpush.msra.mxu0 %v4114
          %4193 = vmatpush.msra.mxu0 %v4111
          %4194 = vmatpush.msra.mxu0 %v4108
          %4195 = vmatpush.msra.mxu0 %v4105
          %4196 = vmatpush.msra.mxu0 %v4102
          %4197 = vmatpush.msra.mxu0 %v4099
          %4198 = vmatpush.msra.mxu0 %v4096
          %4199 = vmatpush.msra.mxu0 %v4093
          %4200 = vmatpush.msra.mxu0 %v4090
          %4201 = vmatpush.msra.mxu0 %v4087
          %4202 = vmatpush.msra.mxu0 %v4084
          %4203 = vmatpush.msra.mxu0 %v4081
          %4204 = vmatpush.msra.mxu0 %v4078
          %4205 = vmatpush.msra.mxu0 %v4075
          %4206 = vmatmul.f32.gmra.mxu0 %v4123
          %v4207 = vpop.f32.mrf.mxu0
          %v4208 = vadd.f32 %v4188, %v4207
          %4209 = vdwg.mxu0
          %4210 = vmatpush.msra.mxu0 %v4073
          %4211 = vmatpush.msra.mxu0 %v4070
          %4212 = vmatpush.msra.mxu0 %v4067
          %4213 = vmatpush.msra.mxu0 %v4064
          %4214 = vmatpush.msra.mxu0 %v4061
          %4215 = vmatpush.msra.mxu0 %v4058
          %4216 = vmatpush.msra.mxu0 %v4055
          %4217 = vmatpush.msra.mxu0 %v4052
          %4218 = vmatpush.msra.mxu0 %v4049
          %4219 = vmatpush.msra.mxu0 %v4046
          %4220 = vmatpush.msra.mxu0 %v4043
          %4221 = vmatpush.msra.mxu0 %v4040
          %4222 = vmatpush.msra.mxu0 %v4037
          %4223 = vmatpush.msra.mxu0 %v4034
          %4224 = vmatpush.msra.mxu0 %v4031
          %4225 = vmatpush.msra.mxu0 %v4028
          %4226 = vmatmul.f32.gmra.mxu0 %v4122
          %v4227 = vpop.f32.mrf.mxu0
          %v4228 = vadd.f32 %v4128, %v4227
          %4229 = vdwg.mxu0
          %4230 = vmatpush.msra.mxu0 %v4121
          %4231 = vmatpush.msra.mxu0 %v4118
          %4232 = vmatpush.msra.mxu0 %v4115
          %4233 = vmatpush.msra.mxu0 %v4112
          %4234 = vmatpush.msra.mxu0 %v4109
          %4235 = vmatpush.msra.mxu0 %v4106
          %4236 = vmatpush.msra.mxu0 %v4103
          %4237 = vmatpush.msra.mxu0 %v4100
          %4238 = vmatpush.msra.mxu0 %v4097
          %4239 = vmatpush.msra.mxu0 %v4094
          %4240 = vmatpush.msra.mxu0 %v4091
          %4241 = vmatpush.msra.mxu0 %v4088
          %4242 = vmatpush.msra.mxu0 %v4085
          %4243 = vmatpush.msra.mxu0 %v4082
          %4244 = vmatpush.msra.mxu0 %v4079
          %4245 = vmatpush.msra.mxu0 %v4076
          %4246 = vmatmul.f32.gmra.mxu0 %v4123
          %v4247 = vpop.f32.mrf.mxu0
          %v4248 = vadd.f32 %v4228, %v4247
          %4249 = vdwg.mxu0
          %v4250 = vmul.f32 %v4168, 100.0
          %v4251 = vmul.f32 %v4208, 100.0
          %v4252 = vmul.f32 %v4248, 100.0
          %v4253 = vlaneseq
          %v4254 = vshrl.u32 %v4253, 7
          %v4255 = vrot.slane %v4250, 4
          %v4256 = vmax.f32 %v4250, %v4255
          %v4257 = vrot.slane %v4256, 2
          %v4258 = vmax.f32 %v4256, %v4257
          %v4259 = vrot.slane %v4258, 1
          %v4260 = vmax.f32 %v4258, %v4259
          %v4261 = vrot.slane %v4251, 4
          %v4262 = vmax.f32 %v4251, %v4261
          %v4263 = vrot.slane %v4262, 2
          %v4264 = vmax.f32 %v4262, %v4263
          %v4265 = vrot.slane %v4264, 1
          %v4266 = vmax.f32 %v4264, %v4265
          %v4267 = vrot.slane %v4252, 4
          %v4268 = vmax.f32 %v4252, %v4267
          %v4269 = vrot.slane %v4268, 2
          %v4270 = vmax.f32 %v4268, %v4269
          %v4271 = vrot.slane %v4270, 1
          %v4272 = vmax.f32 %v4270, %v4271
          %vm4273 = vcmp.eq.f32.partialorder %v4250, %v4260
          %vm4274 = vcmp.eq.f32.partialorder %v4251, %v4266
          %vm4275 = vcmp.eq.f32.partialorder %v4252, %v4272
          %v4276 = vsel %vm4273, %v4254, 8
          %v4277 = vsel %vm4274, %v4254, 8
          %v4278 = vsel %vm4275, %v4254, 8
          %v4279 = vrot.slane %v4276, 4
          %vm4280 = vcmp.lt.s32.totalorder %v4276, %v4279
          %v4281 = vsel %vm4280, %v4276, %v4279
          %v4282 = vrot.slane %v4281, 2
          %vm4283 = vcmp.lt.s32.totalorder %v4281, %v4282
          %v4284 = vsel %vm4283, %v4281, %v4282
          %v4285 = vrot.slane %v4284, 1
          %vm4286 = vcmp.lt.s32.totalorder %v4284, %v4285
          %v4287 = vsel %vm4286, %v4284, %v4285
          %v4288 = vrot.slane %v4277, 4
          %vm4289 = vcmp.lt.s32.totalorder %v4277, %v4288
          %v4290 = vsel %vm4289, %v4277, %v4288
          %v4291 = vrot.slane %v4290, 2
          %vm4292 = vcmp.lt.s32.totalorder %v4290, %v4291
          %v4293 = vsel %vm4292, %v4290, %v4291
          %v4294 = vrot.slane %v4293, 1
          %vm4295 = vcmp.lt.s32.totalorder %v4293, %v4294
          %v4296 = vsel %vm4295, %v4293, %v4294
          %v4297 = vrot.slane %v4278, 4
          %vm4298 = vcmp.lt.s32.totalorder %v4278, %v4297
          %v4299 = vsel %vm4298, %v4278, %v4297
          %v4300 = vrot.slane %v4299, 2
          %vm4301 = vcmp.lt.s32.totalorder %v4299, %v4300
          %v4302 = vsel %vm4301, %v4299, %v4300
          %v4303 = vrot.slane %v4302, 1
          %vm4304 = vcmp.lt.s32.totalorder %v4302, %v4303
          %v4305 = vsel %vm4304, %v4302, %v4303
          %vm4306 = vcmp.eq.s32.totalorder %v4254, %v4287
          %vm4307 = vcmp.eq.s32.totalorder %v4254, %v4296
          %vm4308 = vcmp.eq.s32.totalorder %v4254, %v4305
          %v4309 = vsel %vm4306, -inf, %v4250
          %v4310 = vsel %vm4307, -inf, %v4251
          %v4311 = vsel %vm4308, -inf, %v4252
          %v4312 = vrot.slane %v4309, 4
          %v4313 = vmax.f32 %v4309, %v4312
          %v4314 = vrot.slane %v4313, 2
          %v4315 = vmax.f32 %v4313, %v4314
          %v4316 = vrot.slane %v4315, 1
          %v4317 = vmax.f32 %v4315, %v4316
          %v4318 = vrot.slane %v4310, 4
          %v4319 = vmax.f32 %v4310, %v4318
          %v4320 = vrot.slane %v4319, 2
          %v4321 = vmax.f32 %v4319, %v4320
          %v4322 = vrot.slane %v4321, 1
          %v4323 = vmax.f32 %v4321, %v4322
          %v4324 = vrot.slane %v4311, 4
          %v4325 = vmax.f32 %v4311, %v4324
          %v4326 = vrot.slane %v4325, 2
          %v4327 = vmax.f32 %v4325, %v4326
          %v4328 = vrot.slane %v4327, 1
          %v4329 = vmax.f32 %v4327, %v4328
          %vm4330 = vcmp.eq.f32.partialorder %v4309, %v4317
          %vm4331 = vcmp.eq.f32.partialorder %v4310, %v4323
          %vm4332 = vcmp.eq.f32.partialorder %v4311, %v4329
          %v4333 = vsel %vm4330, %v4254, 8
          %v4334 = vsel %vm4331, %v4254, 8
          %v4335 = vsel %vm4332, %v4254, 8
          %v4336 = vrot.slane %v4333, 4
          %vm4337 = vcmp.lt.s32.totalorder %v4333, %v4336
          %v4338 = vsel %vm4337, %v4333, %v4336
          %v4339 = vrot.slane %v4338, 2
          %vm4340 = vcmp.lt.s32.totalorder %v4338, %v4339
          %v4341 = vsel %vm4340, %v4338, %v4339
          %v4342 = vrot.slane %v4341, 1
          %vm4343 = vcmp.lt.s32.totalorder %v4341, %v4342
          %v4344 = vsel %vm4343, %v4341, %v4342
          %v4345 = vrot.slane %v4334, 4
          %vm4346 = vcmp.lt.s32.totalorder %v4334, %v4345
          %v4347 = vsel %vm4346, %v4334, %v4345
          %v4348 = vrot.slane %v4347, 2
          %vm4349 = vcmp.lt.s32.totalorder %v4347, %v4348
          %v4350 = vsel %vm4349, %v4347, %v4348
          %v4351 = vrot.slane %v4350, 1
          %vm4352 = vcmp.lt.s32.totalorder %v4350, %v4351
          %v4353 = vsel %vm4352, %v4350, %v4351
          %v4354 = vrot.slane %v4335, 4
          %vm4355 = vcmp.lt.s32.totalorder %v4335, %v4354
          %v4356 = vsel %vm4355, %v4335, %v4354
          %v4357 = vrot.slane %v4356, 2
          %vm4358 = vcmp.lt.s32.totalorder %v4356, %v4357
          %v4359 = vsel %vm4358, %v4356, %v4357
          %v4360 = vrot.slane %v4359, 1
          %vm4361 = vcmp.lt.s32.totalorder %v4359, %v4360
          %v4362 = vsel %vm4361, %v4359, %v4360
          %vm4363 = vcmp.eq.s32.totalorder %v4254, %v4344
          %vm4364 = vcmp.eq.s32.totalorder %v4254, %v4353
          %vm4365 = vcmp.eq.s32.totalorder %v4254, %v4362
          %v4366 = vsel %vm4363, -inf, %v4309
          %v4367 = vsel %vm4364, -inf, %v4310
          %v4368 = vsel %vm4365, -inf, %v4311
          %v4369 = vrot.slane %v4366, 4
          %v4370 = vmax.f32 %v4366, %v4369
          %v4371 = vrot.slane %v4370, 2
          %v4372 = vmax.f32 %v4370, %v4371
          %v4373 = vrot.slane %v4372, 1
          %v4374 = vmax.f32 %v4372, %v4373
          %v4375 = vrot.slane %v4367, 4
          %v4376 = vmax.f32 %v4367, %v4375
          %v4377 = vrot.slane %v4376, 2
          %v4378 = vmax.f32 %v4376, %v4377
          %v4379 = vrot.slane %v4378, 1
          %v4380 = vmax.f32 %v4378, %v4379
          %v4381 = vrot.slane %v4368, 4
          %v4382 = vmax.f32 %v4368, %v4381
          %v4383 = vrot.slane %v4382, 2
          %v4384 = vmax.f32 %v4382, %v4383
          %v4385 = vrot.slane %v4384, 1
          %v4386 = vmax.f32 %v4384, %v4385
          %v4387 = vlaneseq
          %v4388 = vand.u32 %v4387, 127
          %v4389 = vadd.s32 %v4388, 128
          %v4390 = vadd.s32 %v4388, 256
          %vm4391 = vcmp.lt.s32.totalorder %v4388, 300
          %vm4392 = vcmp.lt.s32.totalorder %v4389, 300
          %vm4393 = vcmp.lt.s32.totalorder %v4390, 300
          %v4394 = vsel %vm4391, 0.0033333334, 0.0
          %v4395 = vsel %vm4392, 0.0033333334, 0.0
          %v4396 = vsel %vm4393, 0.0033333334, 0.0
          %v4397 = vsub.f32 %v4250, %v4374
          %v4398 = vsub.f32 %v4251, %v4380
          %v4399 = vsub.f32 %v4252, %v4386
          %v4400 = vxor.u32 %v4397, 2147483648
          %v4401 = vxor.u32 %v4398, 2147483648
          %v4402 = vxor.u32 %v4399, 2147483648
          %v4403 = vmul.f32 %v4400, 1.442695
          %v4404 = vpow.pop %v4403
          %v4405 = vmul.f32 %v4401, 1.442695
          %v4406 = vpow.pop %v4405
          %v4407 = vmul.f32 %v4402, 1.442695
          %v4408 = vpow.pop %v4407
          %v4409 = vadd.f32 %v4404, 1.0
          %v4410 = vadd.f32 %v4406, 1.0
          %v4411 = vadd.f32 %v4408, 1.0
          %v4412 = vrcp.pop %v4409
          %v4413 = vmul.f32 %v4409, %v4412
          %v4414 = vsub.f32 1.0, %v4413
          %v4415 = vmul.f32 %v4412, %v4414
          %v4416 = vadd.f32 %v4412, %v4415
          %vm4417 = vweird.f32 %v4409
          %vm4418 = vweird.f32 %v4412
          %vm4419 = vmor %vm4417, %vm4418
          %v4420 = vsel %vm4419, %v4412, %v4416
          %v4421 = vand.u32 2147483647, %v4409
          %vm4422 = vcmp.eq.f32.partialorder %v4421, 8.507059e+37
          %v4423 = vand.u32 %v4409, 2147483648
          %v4424 = vor.u32 1.1754944e-38, %v4423
          %v4425 = vsel %vm4422, %v4424, %v4420
          %v4426 = vmul.f32 1.0, %v4425
          %v4427 = vrcp.pop %v4410
          %v4428 = vmul.f32 %v4410, %v4427
          %v4429 = vsub.f32 1.0, %v4428
          %v4430 = vmul.f32 %v4427, %v4429
          %v4431 = vadd.f32 %v4427, %v4430
          %vm4432 = vweird.f32 %v4410
          %vm4433 = vweird.f32 %v4427
          %vm4434 = vmor %vm4432, %vm4433
          %v4435 = vsel %vm4434, %v4427, %v4431
          %v4436 = vand.u32 2147483647, %v4410
          %vm4437 = vcmp.eq.f32.partialorder %v4436, 8.507059e+37
          %v4438 = vand.u32 %v4410, 2147483648
          %v4439 = vor.u32 1.1754944e-38, %v4438
          %v4440 = vsel %vm4437, %v4439, %v4435
          %v4441 = vmul.f32 1.0, %v4440
          %v4442 = vrcp.pop %v4411
          %v4443 = vmul.f32 %v4411, %v4442
          %v4444 = vsub.f32 1.0, %v4443
          %v4445 = vmul.f32 %v4442, %v4444
          %v4446 = vadd.f32 %v4442, %v4445
          %vm4447 = vweird.f32 %v4411
          %vm4448 = vweird.f32 %v4442
          %vm4449 = vmor %vm4447, %vm4448
          %v4450 = vsel %vm4449, %v4442, %v4446
          %v4451 = vand.u32 2147483647, %v4411
          %vm4452 = vcmp.eq.f32.partialorder %v4451, 8.507059e+37
          %v4453 = vand.u32 %v4411, 2147483648
          %v4454 = vor.u32 1.1754944e-38, %v4453
          %v4455 = vsel %vm4452, %v4454, %v4450
          %v4456 = vmul.f32 1.0, %v4455
          %v4457 = vrot.slane %v4426, 4
          %v4458 = vadd.f32 %v4426, %v4457
          %v4459 = vrot.slane %v4458, 2
          %v4460 = vadd.f32 %v4458, %v4459
          %v4461 = vrot.slane %v4460, 1
          %v4462 = vadd.f32 %v4460, %v4461
          %v4463 = vrot.slane %v4441, 4
          %v4464 = vadd.f32 %v4441, %v4463
          %v4465 = vrot.slane %v4464, 2
          %v4466 = vadd.f32 %v4464, %v4465
          %v4467 = vrot.slane %v4466, 1
          %v4468 = vadd.f32 %v4466, %v4467
          %v4469 = vrot.slane %v4456, 4
          %v4470 = vadd.f32 %v4456, %v4469
          %v4471 = vrot.slane %v4470, 2
          %v4472 = vadd.f32 %v4470, %v4471
          %v4473 = vrot.slane %v4472, 1
          %v4474 = vadd.f32 %v4472, %v4473
          %v4475 = vsub.f32 %v4462, 2.0
          %v4476 = vsub.f32 %v4468, 2.0
          %v4477 = vsub.f32 %v4474, 2.0
          %v4478 = vmul.f32 %v4475, %v4394
          %v4479 = vmul.f32 %v4476, %v4395
          %v4480 = vmul.f32 %v4477, %v4396
          %vm4481 = vcmask 1040384
          %v4482 = vsel %vm4481, %v4478, 0.0
          %v4483 = vsel %vm4481, %v4479, 0.0
          %v4484 = vadd.f32 %v4482, %v4483
          %v4485 = vsel %vm4481, %v4480, 0.0
          %v4486 = vadd.f32 %v4484, %v4485
          %4487 = vadd.xlane.f32.xlu0 %v4486
          %v4488 = vpop.xlane.xlu0 %4487
          %v4489 = vrot.slane %v4488, 4
          %v4490 = vadd.f32 %v4488, %v4489
          %v4491 = vrot.slane %v4490, 2
          %v4492 = vadd.f32 %v4490, %v4491
          %v4493 = vrot.slane %v4492, 1
          %v4494 = vadd.f32 %v4492, %v4493
          %s4495 = vtos %v4494
          // While loop
          $region95: #{two_layer_mlp_gate.1} parent=93 // loop_pre_header
            _
          $region96: #{two_layer_mlp_gate.1} parent=93 // loop_header
            %s4497 = sphi 0, %s4688
            %v4498 = vphi %v4374, %v4587
            %v4499 = vphi %v4380, %v4588
            %v4500 = vphi %v4386, %v4589
            %v4501 = vphi %v4426, %v4619
            %v4502 = vphi %v4441, %v4634
            %v4503 = vphi %v4456, %v4649
            %v4504 = vphi %v4475, %v4668
            %v4505 = vphi %v4476, %v4669
            %v4506 = vphi %v4477, %v4670
            %s4507 = sphi %s4495, %s4687
            %p4508 = scmp.lt.s32.totalorder %s4497, 100
            %p4509 = scmp.lt.f32.partialorder %s4507, 0.001
            %p4510 = pneg %p4509
            %p4511 = pnand %p4508, %p4510
            %p4512 = pneg %p4511
          $region97: #{two_layer_mlp_gate.1} parent=93 // loop_header_branch
            %4514 = sbr.rel (%p4511) target = $region101
          $region98: #{two_layer_mlp_gate.1} parent=93 // loop_body
            %v4515 = vsub.f32 1.0, %v4501
            %v4516 = vsub.f32 1.0, %v4502
            %v4517 = vsub.f32 1.0, %v4503
            %v4518 = vmul.f32 %v4501, %v4515
            %v4519 = vmul.f32 %v4502, %v4516
            %v4520 = vmul.f32 %v4503, %v4517
            %v4521 = vrot.slane %v4518, 4
            %v4522 = vadd.f32 %v4518, %v4521
            %v4523 = vrot.slane %v4522, 2
            %v4524 = vadd.f32 %v4522, %v4523
            %v4525 = vrot.slane %v4524, 1
            %v4526 = vadd.f32 %v4524, %v4525
            %v4527 = vrot.slane %v4519, 4
            %v4528 = vadd.f32 %v4519, %v4527
            %v4529 = vrot.slane %v4528, 2
            %v4530 = vadd.f32 %v4528, %v4529
            %v4531 = vrot.slane %v4530, 1
            %v4532 = vadd.f32 %v4530, %v4531
            %v4533 = vrot.slane %v4520, 4
            %v4534 = vadd.f32 %v4520, %v4533
            %v4535 = vrot.slane %v4534, 2
            %v4536 = vadd.f32 %v4534, %v4535
            %v4537 = vrot.slane %v4536, 1
            %v4538 = vadd.f32 %v4536, %v4537
            %v4539 = vmax.f32 %v4526, 1e-12
            %v4540 = vmax.f32 %v4532, 1e-12
            %v4541 = vmax.f32 %v4538, 1e-12
            %v4542 = vrcp.pop %v4539
            %v4543 = vmul.f32 %v4539, %v4542
            %v4544 = vsub.f32 1.0, %v4543
            %v4545 = vmul.f32 %v4542, %v4544
            %v4546 = vadd.f32 %v4542, %v4545
            %vm4547 = vweird.f32 %v4539
            %vm4548 = vweird.f32 %v4542
            %vm4549 = vmor %vm4547, %vm4548
            %v4550 = vsel %vm4549, %v4542, %v4546
            %v4551 = vand.u32 2147483647, %v4539
            %vm4552 = vcmp.eq.f32.partialorder %v4551, 8.507059e+37
            %v4553 = vand.u32 %v4539, 2147483648
            %v4554 = vor.u32 1.1754944e-38, %v4553
            %v4555 = vsel %vm4552, %v4554, %v4550
            %v4556 = vmul.f32 %v4504, %v4555
            %v4557 = vrcp.pop %v4540
            %v4558 = vmul.f32 %v4540, %v4557
            %v4559 = vsub.f32 1.0, %v4558
            %v4560 = vmul.f32 %v4557, %v4559
            %v4561 = vadd.f32 %v4557, %v4560
            %vm4562 = vweird.f32 %v4540
            %vm4563 = vweird.f32 %v4557
            %vm4564 = vmor %vm4562, %vm4563
            %v4565 = vsel %vm4564, %v4557, %v4561
            %v4566 = vand.u32 2147483647, %v4540
            %vm4567 = vcmp.eq.f32.partialorder %v4566, 8.507059e+37
            %v4568 = vand.u32 %v4540, 2147483648
            %v4569 = vor.u32 1.1754944e-38, %v4568
            %v4570 = vsel %vm4567, %v4569, %v4565
            %v4571 = vmul.f32 %v4505, %v4570
            %v4572 = vrcp.pop %v4541
            %v4573 = vmul.f32 %v4541, %v4572
            %v4574 = vsub.f32 1.0, %v4573
            %v4575 = vmul.f32 %v4572, %v4574
            %v4576 = vadd.f32 %v4572, %v4575
            %vm4577 = vweird.f32 %v4541
            %vm4578 = vweird.f32 %v4572
            %vm4579 = vmor %vm4577, %vm4578
            %v4580 = vsel %vm4579, %v4572, %v4576
            %v4581 = vand.u32 2147483647, %v4541
            %vm4582 = vcmp.eq.f32.partialorder %v4581, 8.507059e+37
            %v4583 = vand.u32 %v4541, 2147483648
            %v4584 = vor.u32 1.1754944e-38, %v4583
            %v4585 = vsel %vm4582, %v4584, %v4580
            %v4586 = vmul.f32 %v4506, %v4585
            %v4587 = vadd.f32 %v4498, %v4556
            %v4588 = vadd.f32 %v4499, %v4571
            %v4589 = vadd.f32 %v4500, %v4586
            %v4590 = vsub.f32 %v4250, %v4587
            %v4591 = vsub.f32 %v4251, %v4588
            %v4592 = vsub.f32 %v4252, %v4589
            %v4593 = vxor.u32 %v4590, 2147483648
            %v4594 = vxor.u32 %v4591, 2147483648
            %v4595 = vxor.u32 %v4592, 2147483648
            %v4596 = vmul.f32 %v4593, 1.442695
            %v4597 = vpow.pop %v4596
            %v4598 = vmul.f32 %v4594, 1.442695
            %v4599 = vpow.pop %v4598
            %v4600 = vmul.f32 %v4595, 1.442695
            %v4601 = vpow.pop %v4600
            %v4602 = vadd.f32 %v4597, 1.0
            %v4603 = vadd.f32 %v4599, 1.0
            %v4604 = vadd.f32 %v4601, 1.0
            %v4605 = vrcp.pop %v4602
            %v4606 = vmul.f32 %v4602, %v4605
            %v4607 = vsub.f32 1.0, %v4606
            %v4608 = vmul.f32 %v4605, %v4607
            %v4609 = vadd.f32 %v4605, %v4608
            %vm4610 = vweird.f32 %v4602
            %vm4611 = vweird.f32 %v4605
            %vm4612 = vmor %vm4610, %vm4611
            %v4613 = vsel %vm4612, %v4605, %v4609
            %v4614 = vand.u32 2147483647, %v4602
            %vm4615 = vcmp.eq.f32.partialorder %v4614, 8.507059e+37
            %v4616 = vand.u32 %v4602, 2147483648
            %v4617 = vor.u32 1.1754944e-38, %v4616
            %v4618 = vsel %vm4615, %v4617, %v4613
            %v4619 = vmul.f32 1.0, %v4618
            %v4620 = vrcp.pop %v4603
            %v4621 = vmul.f32 %v4603, %v4620
            %v4622 = vsub.f32 1.0, %v4621
            %v4623 = vmul.f32 %v4620, %v4622
            %v4624 = vadd.f32 %v4620, %v4623
            %vm4625 = vweird.f32 %v4603
            %vm4626 = vweird.f32 %v4620
            %vm4627 = vmor %vm4625, %vm4626
            %v4628 = vsel %vm4627, %v4620, %v4624
            %v4629 = vand.u32 2147483647, %v4603
            %vm4630 = vcmp.eq.f32.partialorder %v4629, 8.507059e+37
            %v4631 = vand.u32 %v4603, 2147483648
            %v4632 = vor.u32 1.1754944e-38, %v4631
            %v4633 = vsel %vm4630, %v4632, %v4628
            %v4634 = vmul.f32 1.0, %v4633
            %v4635 = vrcp.pop %v4604
            %v4636 = vmul.f32 %v4604, %v4635
            %v4637 = vsub.f32 1.0, %v4636
            %v4638 = vmul.f32 %v4635, %v4637
            %v4639 = vadd.f32 %v4635, %v4638
            %vm4640 = vweird.f32 %v4604
            %vm4641 = vweird.f32 %v4635
            %vm4642 = vmor %vm4640, %vm4641
            %v4643 = vsel %vm4642, %v4635, %v4639
            %v4644 = vand.u32 2147483647, %v4604
            %vm4645 = vcmp.eq.f32.partialorder %v4644, 8.507059e+37
            %v4646 = vand.u32 %v4604, 2147483648
            %v4647 = vor.u32 1.1754944e-38, %v4646
            %v4648 = vsel %vm4645, %v4647, %v4643
            %v4649 = vmul.f32 1.0, %v4648
            %v4650 = vrot.slane %v4619, 4
            %v4651 = vadd.f32 %v4619, %v4650
            %v4652 = vrot.slane %v4651, 2
            %v4653 = vadd.f32 %v4651, %v4652
            %v4654 = vrot.slane %v4653, 1
            %v4655 = vadd.f32 %v4653, %v4654
            %v4656 = vrot.slane %v4634, 4
            %v4657 = vadd.f32 %v4634, %v4656
            %v4658 = vrot.slane %v4657, 2
            %v4659 = vadd.f32 %v4657, %v4658
            %v4660 = vrot.slane %v4659, 1
            %v4661 = vadd.f32 %v4659, %v4660
            %v4662 = vrot.slane %v4649, 4
            %v4663 = vadd.f32 %v4649, %v4662
            %v4664 = vrot.slane %v4663, 2
            %v4665 = vadd.f32 %v4663, %v4664
            %v4666 = vrot.slane %v4665, 1
            %v4667 = vadd.f32 %v4665, %v4666
            %v4668 = vsub.f32 %v4655, 2.0
            %v4669 = vsub.f32 %v4661, 2.0
            %v4670 = vsub.f32 %v4667, 2.0
            %v4671 = vmul.f32 %v4668, %v4394
            %v4672 = vmul.f32 %v4669, %v4395
            %v4673 = vmul.f32 %v4670, %v4396
            %v4674 = vsel %vm4481, %v4671, 0.0
            %v4675 = vsel %vm4481, %v4672, 0.0
            %v4676 = vadd.f32 %v4674, %v4675
            %v4677 = vsel %vm4481, %v4673, 0.0
            %v4678 = vadd.f32 %v4676, %v4677
            %4679 = vadd.xlane.f32.xlu0 %v4678
            %v4680 = vpop.xlane.xlu0 %4679
            %v4681 = vrot.slane %v4680, 4
            %v4682 = vadd.f32 %v4680, %v4681
            %v4683 = vrot.slane %v4682, 2
            %v4684 = vadd.f32 %v4682, %v4683
            %v4685 = vrot.slane %v4684, 1
            %v4686 = vadd.f32 %v4684, %v4685
            %s4687 = vtos %v4686
            %s4688 = sadd.s32 %s4497, 1
          $region99: #{two_layer_mlp_gate.1} parent=93 // loop_footer
            _
          $region100: #{two_layer_mlp_gate.1} parent=93 // loop_footer_branch
            %4496 = sbr.rel target = $region96
          $region101: #{two_layer_mlp_gate.1} parent=93 // loop_exit
            _
          %4689 = vst [vmem:[%s5] sm:$0xff] %v4501
          %4690 = vst [vmem:[%s5 + $0x8] sm:$0xff] %v4502
          %4691 = vst [vmem:[%s5 + $0x10] sm:$0xff] %v4503
        $region94: #{two_layer_mlp_gate.1} parent=77 // pred_fallthru
          _
        // Predicated region
        $region102: #{two_layer_mlp_gate.1} parent=77 // pred_check
          %p4692 = pneg %p144
        $region103: #{two_layer_mlp_gate.1} parent=77 // pred_check_branch
          %4694 = sbr.rel (%p4692) target = $region105
        $region104: #{two_layer_mlp_gate.1} parent=77 // pred_region
          _
        $region105: #{two_layer_mlp_gate.1} parent=77 // pred_fallthru
          _
        // Predicated region
        $region106: #{two_layer_mlp_gate.1} parent=77 // pred_check
          %p4695 = pneg %p144
        $region107: #{two_layer_mlp_gate.1} parent=77 // pred_check_branch
          %4697 = sbr.rel (%p4695) target = $region109
        $region108: #{two_layer_mlp_gate.1} parent=77 // pred_region
          _
        $region109: #{two_layer_mlp_gate.1} parent=77 // pred_fallthru
          _
      $region78: #{two_layer_mlp_gate.1} parent=5 // pred_fallthru
        _
      %p4698 = scmp.le.s32.totalorder 2, %s11
      // Predicated region
      $region110: #{two_layer_mlp_gate.1} parent=5 // pred_check
        %p4699 = pneg %p4698
      $region111: #{two_layer_mlp_gate.1} parent=5 // pred_check_branch
        %4701 = sbr.rel (%p4699) target = $region113
      $region112: #{two_layer_mlp_gate.1} parent=5 // pred_region
        %s4702 = ssub.s32 %s11, 2
      $region113: #{two_layer_mlp_gate.1} parent=5 // pred_fallthru
        _
    $region6: #{two_layer_mlp_gate.1} parent=1 // loop_footer
      %s15 = sadd.s32 1, %s11
    $region7: #{two_layer_mlp_gate.1} parent=1 // loop_footer_branch
      %10 = sbr.rel target = $region3
    $region8: #{two_layer_mlp_gate.1} parent=1 // loop_exit
      _

</llo_original>
